<compile_context>
chip_gen: v7x
topology: tpu7x:2x2x1
jax: 0.10.0
libtpu: 0.0.40
codegen_flags: <defaults>
</compile_context>

<pallas_src>
import functools
import math

import jax
import jax.numpy as jnp
from jax import lax
from jax.experimental import pallas as pl
from jax.experimental.pallas import tpu as pltpu


def _residual_layers_kernel(x_ref, masks_ref, w_ref, b_ref, o_ref, *,
                            num_layers, width):
    """One batch tile, all residual layers fused.

    x_ref:     (B, C, H*W)  f32  VMEM  activation block (channels unpadded)
    masks_ref: (9, 1, H*W)  f32  VMEM  per-tap in-bounds masks (SAME padding)
    w_ref:     (L*9*C*C,)   f32  SMEM  conv weights, index [l, ky, kx, ci, co]
    b_ref:     (L*C,)       f32  SMEM  biases, index [l, co]
    o_ref:     (B, C, H*W)  f32  VMEM  output block
    """
    _, C, HW = x_ref.shape
    x = x_ref[...]                       # residual stream: lives in vregs

    for l in range(num_layers):          # static unroll (num_layers is small)
        # --- 9 shifted taps: lane rolls (XLU) + boundary masks, no scratch ---
        taps = []
        for ky in range(3):
            for kx in range(3):
                d = (ky - 1) * width + (kx - 1)     # flat spatial offset
                if d == 0:
                    taps.append(x)                  # center tap == residual input
                else:
                    # tap[i] = x[i + d]  (== jnp.roll(x, -d)); out-of-image
                    # lanes (and the row wrap-around of the roll) are zeroed
                    # by the host-precomputed mask.
                    rolled = pltpu.roll(x, (-d) % HW, 2)
                    taps.append(rolled * masks_ref[ky * 3 + kx])

        # Per-(tap, cin) channel rows, computed once and reused for every
        # output channel (tiny (B,1,HW) slices of in-register values).
        tap_ch = [[taps[t][:, ci:ci + 1, :] for ci in range(C)]
                  for t in range(9)]

        # --- conv + bias + ReLU + residual, one output channel at a time ----
        rows = []
        for co in range(C):
            acc = None
            for t in range(9):
                for ci in range(C):
                    wv = w_ref[((l * 9 + t) * C + ci) * C + co]   # SMEM scalar
                    term = wv * tap_ch[t][ci]                     # (B, 1, HW)
                    acc = term if acc is None else acc + term
            acc = jnp.maximum(acc + b_ref[l * C + co], 0.0)       # bias + ReLU
            rows.append(tap_ch[4][co] + acc)                      # residual add
        x = jnp.concatenate(rows, axis=1)                         # (B, C, HW)

    o_ref[...] = x


def residual_layers_forward(x_nchw, params, batch_tile=None):
    """ResidualLayers forward.  x_nchw: (N, C, H, W); params: [(w_hwio, b), ...]."""
    N, C, H, W = x_nchw.shape
    if not params:
        return x_nchw
    L = len(params)
    HW = H * W

    # (N, C, H*W): free reshape, no transpose, no channel padding in HBM.
    x = x_nchw.reshape(N, C, HW).astype(jnp.float32)

    # Host-precomputed per-tap validity masks: implement SAME zero padding and
    # cancel the wrap-around of the in-kernel lane roll.
    ys = jnp.arange(H).reshape(H, 1)
    xs = jnp.arange(W).reshape(1, W)
    mask_list = []
    for ky in range(3):
        for kx in range(3):
            dy, dx = ky - 1, kx - 1
            m = ((ys + dy >= 0) & (ys + dy < H) &
                 (xs + dx >= 0) & (xs + dx < W))
            mask_list.append(m.reshape(1, HW).astype(jnp.float32))
    masks = jnp.stack(mask_list, axis=0)                          # (9, 1, HW)

    # Scalar parameter tables for SMEM (tiny: L*9*C*C + L*C words).
    w_flat = jnp.concatenate(
        [w.astype(jnp.float32).reshape(-1) for w, _ in params])   # [l,ky,kx,ci,co]
    b_flat = jnp.concatenate(
        [b.astype(jnp.float32).reshape(-1) for _, b in params])   # [l,co]

    if batch_tile is None:
        # Largest batch tile that keeps >= 2 grid steps (v7x megacore) while
        # amortizing the ~0.35us/step overhead for larger N.
        batch_tile = math.gcd(N, max(1, N // 2))
    assert N % batch_tile == 0, "batch_tile must divide N"
    grid = (N // batch_tile,)

    kernel = functools.partial(_residual_layers_kernel,
                               num_layers=L, width=W)

    out = pl.pallas_call(
        kernel,
        out_shape=jax.ShapeDtypeStruct((N, C, HW), jnp.float32),
        grid=grid,
        in_specs=[
            pl.BlockSpec((batch_tile, C, HW), lambda n: (n, 0, 0)),
            pl.BlockSpec((9, 1, HW), lambda n: (0, 0, 0)),
            pl.BlockSpec(memory_space=pltpu.MemorySpace.SMEM),
            pl.BlockSpec(memory_space=pltpu.MemorySpace.SMEM),
        ],
        out_specs=pl.BlockSpec((batch_tile, C, HW), lambda n: (n, 0, 0)),
        compiler_params=pltpu.CompilerParams(
            dimension_semantics=("parallel",)),
    )(x, masks, w_flat, b_flat)

    return out.reshape(N, C, H, W).astype(x_nchw.dtype)


def init_params(key, num_layers, channels):
    """Deterministic synthetic parameters (Kaiming-ish scale), HWIO layout."""
    params = []
    for i in range(num_layers):
        kw, kb, key = jax.random.split(jax.random.fold_in(key, i), 3)
        fan_in = 3 * 3 * channels
        w = jax.random.normal(kw, (3, 3, channels, channels), jnp.float32)
        w = w * (2.0 / fan_in) ** 0.5
        b = 0.01 * jax.random.normal(kb, (channels,), jnp.float32)
        params.append((w, b))
    return params


def _reference_forward(x_nchw, params):
    """Plain-JAX reference (lax.conv at HIGHEST precision, pure f32 math)."""
    x = x_nchw.astype(jnp.float32)
    for w, b in params:
        w_oihw = jnp.transpose(w, (3, 2, 0, 1))
        y = lax.conv_general_dilated(
            x, w_oihw, window_strides=(1, 1), padding="SAME",
            dimension_numbers=("NCHW", "OIHW", "NCHW"),
            precision=lax.Precision.HIGHEST)
        y = y + b.reshape(1, -1, 1, 1)
        x = x + jnp.maximum(y, 0.0)
    return x


if __name__ == "__main__":
    key = jax.random.PRNGKey(0)
    N, C, H, W = 2, 4, 16, 16
    num_layers = 2

    kx_, kp = jax.random.split(key)
    x = jax.random.normal(kx_, (N, C, H, W), jnp.float32)
    params = init_params(kp, num_layers, C)

    out = residual_layers_forward(x, params)
    out = jax.block_until_ready(out)

    ref = _reference_forward(x, params)
    assert out.shape == (N, C, H, W)
    assert jnp.allclose(out, ref, atol=1e-3, rtol=1e-3), "mismatch vs reference"

    print("KERNEL_OK")
</pallas_src>

<mosaic_0001>
module attributes {stable_mosaic.version = 11 : i64} {
  func.func @_residual_layers_kernel(%arg0: i32, %arg1: memref<1x4x256xf32, #tpu.memory_space<vmem>>, %arg2: memref<9x1x256xf32, #tpu.memory_space<vmem>>, %arg3: memref<288xf32, #tpu.memory_space<smem>>, %arg4: memref<8xf32, #tpu.memory_space<smem>>, %arg5: memref<1x4x256xf32, #tpu.memory_space<vmem>>) attributes {dimension_semantics = [#tpu.dimension_semantics<parallel>], iteration_bounds = array<i64: 2>, scalar_prefetch = 0 : i64, scratch_operands = 0 : i64, tpu.core_type = #tpu.core_type<tc>, window_params = [{transform_indices = @transform_0, window_bounds = array<i64: 1, 4, 256>}, {pipeline_mode = #tpu.pipeline_mode<synchronous>, transform_indices = @transform_1, window_bounds = array<i64: 9, 1, 256>}, {transform_indices = @transform_2, window_bounds = array<i64: 288>}, {transform_indices = @transform_3, window_bounds = array<i64: 8>}, {transform_indices = @transform_4, window_bounds = array<i64: 1, 4, 256>}]} {
    %c0 = arith.constant 0 : index
    %c0_0 = arith.constant 0 : index
    %c0_1 = arith.constant 0 : index
    %0 = vector.load %arg1[%c0, %c0_0, %c0_1] : memref<1x4x256xf32, #tpu.memory_space<vmem>>, vector<1x4x256xf32>
    %c17_i32 = arith.constant 17 : i32
    %1 = tpu.dynamic_rotate %0 by %c17_i32 dim 2 : vector<1x4x256xf32>, i32 -> vector<1x4x256xf32>
    %c0_2 = arith.constant 0 : index
    %c0_3 = arith.constant 0 : index
    %c0_4 = arith.constant 0 : index
    %2 = vector.load %arg2[%c0_2, %c0_3, %c0_4] : memref<9x1x256xf32, #tpu.memory_space<vmem>>, vector<1x1x256xf32>
    %3 = vector.shape_cast %2 : vector<1x1x256xf32> to vector<1x256xf32>
    %4 = vector.shape_cast %3 : vector<1x256xf32> to vector<1x1x256xf32>
    %5 = vector.broadcast %4 : vector<1x1x256xf32> to vector<1x4x256xf32>
    %6 = arith.mulf %1, %5 : vector<1x4x256xf32>
    %c16_i32 = arith.constant 16 : i32
    %7 = tpu.dynamic_rotate %0 by %c16_i32 dim 2 : vector<1x4x256xf32>, i32 -> vector<1x4x256xf32>
    %c1 = arith.constant 1 : index
    %c0_5 = arith.constant 0 : index
    %c0_6 = arith.constant 0 : index
    %8 = vector.load %arg2[%c1, %c0_5, %c0_6] : memref<9x1x256xf32, #tpu.memory_space<vmem>>, vector<1x1x256xf32>
    %9 = vector.shape_cast %8 : vector<1x1x256xf32> to vector<1x256xf32>
    %10 = vector.shape_cast %9 : vector<1x256xf32> to vector<1x1x256xf32>
    %11 = vector.broadcast %10 : vector<1x1x256xf32> to vector<1x4x256xf32>
    %12 = arith.mulf %7, %11 : vector<1x4x256xf32>
    %c15_i32 = arith.constant 15 : i32
    %13 = tpu.dynamic_rotate %0 by %c15_i32 dim 2 : vector<1x4x256xf32>, i32 -> vector<1x4x256xf32>
    %c2 = arith.constant 2 : index
    %c0_7 = arith.constant 0 : index
    %c0_8 = arith.constant 0 : index
    %14 = vector.load %arg2[%c2, %c0_7, %c0_8] : memref<9x1x256xf32, #tpu.memory_space<vmem>>, vector<1x1x256xf32>
    %15 = vector.shape_cast %14 : vector<1x1x256xf32> to vector<1x256xf32>
    %16 = vector.shape_cast %15 : vector<1x256xf32> to vector<1x1x256xf32>
    %17 = vector.broadcast %16 : vector<1x1x256xf32> to vector<1x4x256xf32>
    %18 = arith.mulf %13, %17 : vector<1x4x256xf32>
    %c1_i32 = arith.constant 1 : i32
    %19 = tpu.dynamic_rotate %0 by %c1_i32 dim 2 : vector<1x4x256xf32>, i32 -> vector<1x4x256xf32>
    %c3 = arith.constant 3 : index
    %c0_9 = arith.constant 0 : index
    %c0_10 = arith.constant 0 : index
    %20 = vector.load %arg2[%c3, %c0_9, %c0_10] : memref<9x1x256xf32, #tpu.memory_space<vmem>>, vector<1x1x256xf32>
    %21 = vector.shape_cast %20 : vector<1x1x256xf32> to vector<1x256xf32>
    %22 = vector.shape_cast %21 : vector<1x256xf32> to vector<1x1x256xf32>
    %23 = vector.broadcast %22 : vector<1x1x256xf32> to vector<1x4x256xf32>
    %24 = arith.mulf %19, %23 : vector<1x4x256xf32>
    %c255_i32 = arith.constant 255 : i32
    %25 = tpu.dynamic_rotate %0 by %c255_i32 dim 2 : vector<1x4x256xf32>, i32 -> vector<1x4x256xf32>
    %c5 = arith.constant 5 : index
    %c0_11 = arith.constant 0 : index
    %c0_12 = arith.constant 0 : index
    %26 = vector.load %arg2[%c5, %c0_11, %c0_12] : memref<9x1x256xf32, #tpu.memory_space<vmem>>, vector<1x1x256xf32>
    %27 = vector.shape_cast %26 : vector<1x1x256xf32> to vector<1x256xf32>
    %28 = vector.shape_cast %27 : vector<1x256xf32> to vector<1x1x256xf32>
    %29 = vector.broadcast %28 : vector<1x1x256xf32> to vector<1x4x256xf32>
    %30 = arith.mulf %25, %29 : vector<1x4x256xf32>
    %c241_i32 = arith.constant 241 : i32
    %31 = tpu.dynamic_rotate %0 by %c241_i32 dim 2 : vector<1x4x256xf32>, i32 -> vector<1x4x256xf32>
    %c6 = arith.constant 6 : index
    %c0_13 = arith.constant 0 : index
    %c0_14 = arith.constant 0 : index
    %32 = vector.load %arg2[%c6, %c0_13, %c0_14] : memref<9x1x256xf32, #tpu.memory_space<vmem>>, vector<1x1x256xf32>
    %33 = vector.shape_cast %32 : vector<1x1x256xf32> to vector<1x256xf32>
    %34 = vector.shape_cast %33 : vector<1x256xf32> to vector<1x1x256xf32>
    %35 = vector.broadcast %34 : vector<1x1x256xf32> to vector<1x4x256xf32>
    %36 = arith.mulf %31, %35 : vector<1x4x256xf32>
    %c240_i32 = arith.constant 240 : i32
    %37 = tpu.dynamic_rotate %0 by %c240_i32 dim 2 : vector<1x4x256xf32>, i32 -> vector<1x4x256xf32>
    %c7 = arith.constant 7 : index
    %c0_15 = arith.constant 0 : index
    %c0_16 = arith.constant 0 : index
    %38 = vector.load %arg2[%c7, %c0_15, %c0_16] : memref<9x1x256xf32, #tpu.memory_space<vmem>>, vector<1x1x256xf32>
    %39 = vector.shape_cast %38 : vector<1x1x256xf32> to vector<1x256xf32>
    %40 = vector.shape_cast %39 : vector<1x256xf32> to vector<1x1x256xf32>
    %41 = vector.broadcast %40 : vector<1x1x256xf32> to vector<1x4x256xf32>
    %42 = arith.mulf %37, %41 : vector<1x4x256xf32>
    %c239_i32 = arith.constant 239 : i32
    %43 = tpu.dynamic_rotate %0 by %c239_i32 dim 2 : vector<1x4x256xf32>, i32 -> vector<1x4x256xf32>
    %c8 = arith.constant 8 : index
    %c0_17 = arith.constant 0 : index
    %c0_18 = arith.constant 0 : index
    %44 = vector.load %arg2[%c8, %c0_17, %c0_18] : memref<9x1x256xf32, #tpu.memory_space<vmem>>, vector<1x1x256xf32>
    %45 = vector.shape_cast %44 : vector<1x1x256xf32> to vector<1x256xf32>
    %46 = vector.shape_cast %45 : vector<1x256xf32> to vector<1x1x256xf32>
    %47 = vector.broadcast %46 : vector<1x1x256xf32> to vector<1x4x256xf32>
    %48 = arith.mulf %43, %47 : vector<1x4x256xf32>
    %49 = vector.extract_strided_slice %6 {offsets = [0, 0, 0], sizes = [1, 1, 256], strides = [1, 1, 1]} : vector<1x4x256xf32> to vector<1x1x256xf32>
    %50 = vector.extract_strided_slice %6 {offsets = [0, 1, 0], sizes = [1, 1, 256], strides = [1, 1, 1]} : vector<1x4x256xf32> to vector<1x1x256xf32>
    %51 = vector.extract_strided_slice %6 {offsets = [0, 2, 0], sizes = [1, 1, 256], strides = [1, 1, 1]} : vector<1x4x256xf32> to vector<1x1x256xf32>
    %52 = vector.extract_strided_slice %6 {offsets = [0, 3, 0], sizes = [1, 1, 256], strides = [1, 1, 1]} : vector<1x4x256xf32> to vector<1x1x256xf32>
    %53 = vector.extract_strided_slice %12 {offsets = [0, 0, 0], sizes = [1, 1, 256], strides = [1, 1, 1]} : vector<1x4x256xf32> to vector<1x1x256xf32>
    %54 = vector.extract_strided_slice %12 {offsets = [0, 1, 0], sizes = [1, 1, 256], strides = [1, 1, 1]} : vector<1x4x256xf32> to vector<1x1x256xf32>
    %55 = vector.extract_strided_slice %12 {offsets = [0, 2, 0], sizes = [1, 1, 256], strides = [1, 1, 1]} : vector<1x4x256xf32> to vector<1x1x256xf32>
    %56 = vector.extract_strided_slice %12 {offsets = [0, 3, 0], sizes = [1, 1, 256], strides = [1, 1, 1]} : vector<1x4x256xf32> to vector<1x1x256xf32>
    %57 = vector.extract_strided_slice %18 {offsets = [0, 0, 0], sizes = [1, 1, 256], strides = [1, 1, 1]} : vector<1x4x256xf32> to vector<1x1x256xf32>
    %58 = vector.extract_strided_slice %18 {offsets = [0, 1, 0], sizes = [1, 1, 256], strides = [1, 1, 1]} : vector<1x4x256xf32> to vector<1x1x256xf32>
    %59 = vector.extract_strided_slice %18 {offsets = [0, 2, 0], sizes = [1, 1, 256], strides = [1, 1, 1]} : vector<1x4x256xf32> to vector<1x1x256xf32>
    %60 = vector.extract_strided_slice %18 {offsets = [0, 3, 0], sizes = [1, 1, 256], strides = [1, 1, 1]} : vector<1x4x256xf32> to vector<1x1x256xf32>
    %61 = vector.extract_strided_slice %24 {offsets = [0, 0, 0], sizes = [1, 1, 256], strides = [1, 1, 1]} : vector<1x4x256xf32> to vector<1x1x256xf32>
    %62 = vector.extract_strided_slice %24 {offsets = [0, 1, 0], sizes = [1, 1, 256], strides = [1, 1, 1]} : vector<1x4x256xf32> to vector<1x1x256xf32>
    %63 = vector.extract_strided_slice %24 {offsets = [0, 2, 0], sizes = [1, 1, 256], strides = [1, 1, 1]} : vector<1x4x256xf32> to vector<1x1x256xf32>
    %64 = vector.extract_strided_slice %24 {offsets = [0, 3, 0], sizes = [1, 1, 256], strides = [1, 1, 1]} : vector<1x4x256xf32> to vector<1x1x256xf32>
    %65 = vector.extract_strided_slice %0 {offsets = [0, 0, 0], sizes = [1, 1, 256], strides = [1, 1, 1]} : vector<1x4x256xf32> to vector<1x1x256xf32>
    %66 = vector.extract_strided_slice %0 {offsets = [0, 1, 0], sizes = [1, 1, 256], strides = [1, 1, 1]} : vector<1x4x256xf32> to vector<1x1x256xf32>
    %67 = vector.extract_strided_slice %0 {offsets = [0, 2, 0], sizes = [1, 1, 256], strides = [1, 1, 1]} : vector<1x4x256xf32> to vector<1x1x256xf32>
    %68 = vector.extract_strided_slice %0 {offsets = [0, 3, 0], sizes = [1, 1, 256], strides = [1, 1, 1]} : vector<1x4x256xf32> to vector<1x1x256xf32>
    %69 = vector.extract_strided_slice %30 {offsets = [0, 0, 0], sizes = [1, 1, 256], strides = [1, 1, 1]} : vector<1x4x256xf32> to vector<1x1x256xf32>
    %70 = vector.extract_strided_slice %30 {offsets = [0, 1, 0], sizes = [1, 1, 256], strides = [1, 1, 1]} : vector<1x4x256xf32> to vector<1x1x256xf32>
    %71 = vector.extract_strided_slice %30 {offsets = [0, 2, 0], sizes = [1, 1, 256], strides = [1, 1, 1]} : vector<1x4x256xf32> to vector<1x1x256xf32>
    %72 = vector.extract_strided_slice %30 {offsets = [0, 3, 0], sizes = [1, 1, 256], strides = [1, 1, 1]} : vector<1x4x256xf32> to vector<1x1x256xf32>
    %73 = vector.extract_strided_slice %36 {offsets = [0, 0, 0], sizes = [1, 1, 256], strides = [1, 1, 1]} : vector<1x4x256xf32> to vector<1x1x256xf32>
    %74 = vector.extract_strided_slice %36 {offsets = [0, 1, 0], sizes = [1, 1, 256], strides = [1, 1, 1]} : vector<1x4x256xf32> to vector<1x1x256xf32>
    %75 = vector.extract_strided_slice %36 {offsets = [0, 2, 0], sizes = [1, 1, 256], strides = [1, 1, 1]} : vector<1x4x256xf32> to vector<1x1x256xf32>
    %76 = vector.extract_strided_slice %36 {offsets = [0, 3, 0], sizes = [1, 1, 256], strides = [1, 1, 1]} : vector<1x4x256xf32> to vector<1x1x256xf32>
    %77 = vector.extract_strided_slice %42 {offsets = [0, 0, 0], sizes = [1, 1, 256], strides = [1, 1, 1]} : vector<1x4x256xf32> to vector<1x1x256xf32>
    %78 = vector.extract_strided_slice %42 {offsets = [0, 1, 0], sizes = [1, 1, 256], strides = [1, 1, 1]} : vector<1x4x256xf32> to vector<1x1x256xf32>
    %79 = vector.extract_strided_slice %42 {offsets = [0, 2, 0], sizes = [1, 1, 256], strides = [1, 1, 1]} : vector<1x4x256xf32> to vector<1x1x256xf32>
    %80 = vector.extract_strided_slice %42 {offsets = [0, 3, 0], sizes = [1, 1, 256], strides = [1, 1, 1]} : vector<1x4x256xf32> to vector<1x1x256xf32>
    %81 = vector.extract_strided_slice %48 {offsets = [0, 0, 0], sizes = [1, 1, 256], strides = [1, 1, 1]} : vector<1x4x256xf32> to vector<1x1x256xf32>
    %82 = vector.extract_strided_slice %48 {offsets = [0, 1, 0], sizes = [1, 1, 256], strides = [1, 1, 1]} : vector<1x4x256xf32> to vector<1x1x256xf32>
    %83 = vector.extract_strided_slice %48 {offsets = [0, 2, 0], sizes = [1, 1, 256], strides = [1, 1, 1]} : vector<1x4x256xf32> to vector<1x1x256xf32>
    %84 = vector.extract_strided_slice %48 {offsets = [0, 3, 0], sizes = [1, 1, 256], strides = [1, 1, 1]} : vector<1x4x256xf32> to vector<1x1x256xf32>
    %c0_19 = arith.constant 0 : index
    %85 = memref.load %arg3[%c0_19] : memref<288xf32, #tpu.memory_space<smem>>
    %86 = vector.broadcast %85 : f32 to vector<1x1x256xf32>
    %87 = arith.mulf %86, %49 : vector<1x1x256xf32>
    %c4 = arith.constant 4 : index
    %88 = memref.load %arg3[%c4] : memref<288xf32, #tpu.memory_space<smem>>
    %89 = vector.broadcast %88 : f32 to vector<1x1x256xf32>
    %90 = arith.mulf %89, %50 : vector<1x1x256xf32>
    %91 = arith.addf %87, %90 : vector<1x1x256xf32>
    %c8_20 = arith.constant 8 : index
    %92 = memref.load %arg3[%c8_20] : memref<288xf32, #tpu.memory_space<smem>>
    %93 = vector.broadcast %92 : f32 to vector<1x1x256xf32>
    %94 = arith.mulf %93, %51 : vector<1x1x256xf32>
    %95 = arith.addf %91, %94 : vector<1x1x256xf32>
    %c12 = arith.constant 12 : index
    %96 = memref.load %arg3[%c12] : memref<288xf32, #tpu.memory_space<smem>>
    %97 = vector.broadcast %96 : f32 to vector<1x1x256xf32>
    %98 = arith.mulf %97, %52 : vector<1x1x256xf32>
    %99 = arith.addf %95, %98 : vector<1x1x256xf32>
    %c16 = arith.constant 16 : index
    %100 = memref.load %arg3[%c16] : memref<288xf32, #tpu.memory_space<smem>>
    %101 = vector.broadcast %100 : f32 to vector<1x1x256xf32>
    %102 = arith.mulf %101, %53 : vector<1x1x256xf32>
    %103 = arith.addf %99, %102 : vector<1x1x256xf32>
    %c20 = arith.constant 20 : index
    %104 = memref.load %arg3[%c20] : memref<288xf32, #tpu.memory_space<smem>>
    %105 = vector.broadcast %104 : f32 to vector<1x1x256xf32>
    %106 = arith.mulf %105, %54 : vector<1x1x256xf32>
    %107 = arith.addf %103, %106 : vector<1x1x256xf32>
    %c24 = arith.constant 24 : index
    %108 = memref.load %arg3[%c24] : memref<288xf32, #tpu.memory_space<smem>>
    %109 = vector.broadcast %108 : f32 to vector<1x1x256xf32>
    %110 = arith.mulf %109, %55 : vector<1x1x256xf32>
    %111 = arith.addf %107, %110 : vector<1x1x256xf32>
    %c28 = arith.constant 28 : index
    %112 = memref.load %arg3[%c28] : memref<288xf32, #tpu.memory_space<smem>>
    %113 = vector.broadcast %112 : f32 to vector<1x1x256xf32>
    %114 = arith.mulf %113, %56 : vector<1x1x256xf32>
    %115 = arith.addf %111, %114 : vector<1x1x256xf32>
    %c32 = arith.constant 32 : index
    %116 = memref.load %arg3[%c32] : memref<288xf32, #tpu.memory_space<smem>>
    %117 = vector.broadcast %116 : f32 to vector<1x1x256xf32>
    %118 = arith.mulf %117, %57 : vector<1x1x256xf32>
    %119 = arith.addf %115, %118 : vector<1x1x256xf32>
    %c36 = arith.constant 36 : index
    %120 = memref.load %arg3[%c36] : memref<288xf32, #tpu.memory_space<smem>>
    %121 = vector.broadcast %120 : f32 to vector<1x1x256xf32>
    %122 = arith.mulf %121, %58 : vector<1x1x256xf32>
    %123 = arith.addf %119, %122 : vector<1x1x256xf32>
    %c40 = arith.constant 40 : index
    %124 = memref.load %arg3[%c40] : memref<288xf32, #tpu.memory_space<smem>>
    %125 = vector.broadcast %124 : f32 to vector<1x1x256xf32>
    %126 = arith.mulf %125, %59 : vector<1x1x256xf32>
    %127 = arith.addf %123, %126 : vector<1x1x256xf32>
    %c44 = arith.constant 44 : index
    %128 = memref.load %arg3[%c44] : memref<288xf32, #tpu.memory_space<smem>>
    %129 = vector.broadcast %128 : f32 to vector<1x1x256xf32>
    %130 = arith.mulf %129, %60 : vector<1x1x256xf32>
    %131 = arith.addf %127, %130 : vector<1x1x256xf32>
    %c48 = arith.constant 48 : index
    %132 = memref.load %arg3[%c48] : memref<288xf32, #tpu.memory_space<smem>>
    %133 = vector.broadcast %132 : f32 to vector<1x1x256xf32>
    %134 = arith.mulf %133, %61 : vector<1x1x256xf32>
    %135 = arith.addf %131, %134 : vector<1x1x256xf32>
    %c52 = arith.constant 52 : index
    %136 = memref.load %arg3[%c52] : memref<288xf32, #tpu.memory_space<smem>>
    %137 = vector.broadcast %136 : f32 to vector<1x1x256xf32>
    %138 = arith.mulf %137, %62 : vector<1x1x256xf32>
    %139 = arith.addf %135, %138 : vector<1x1x256xf32>
    %c56 = arith.constant 56 : index
    %140 = memref.load %arg3[%c56] : memref<288xf32, #tpu.memory_space<smem>>
    %141 = vector.broadcast %140 : f32 to vector<1x1x256xf32>
    %142 = arith.mulf %141, %63 : vector<1x1x256xf32>
    %143 = arith.addf %139, %142 : vector<1x1x256xf32>
    %c60 = arith.constant 60 : index
    %144 = memref.load %arg3[%c60] : memref<288xf32, #tpu.memory_space<smem>>
    %145 = vector.broadcast %144 : f32 to vector<1x1x256xf32>
    %146 = arith.mulf %145, %64 : vector<1x1x256xf32>
    %147 = arith.addf %143, %146 : vector<1x1x256xf32>
    %c64 = arith.constant 64 : index
    %148 = memref.load %arg3[%c64] : memref<288xf32, #tpu.memory_space<smem>>
    %149 = vector.broadcast %148 : f32 to vector<1x1x256xf32>
    %150 = arith.mulf %149, %65 : vector<1x1x256xf32>
    %151 = arith.addf %147, %150 : vector<1x1x256xf32>
    %c68 = arith.constant 68 : index
    %152 = memref.load %arg3[%c68] : memref<288xf32, #tpu.memory_space<smem>>
    %153 = vector.broadcast %152 : f32 to vector<1x1x256xf32>
    %154 = arith.mulf %153, %66 : vector<1x1x256xf32>
    %155 = arith.addf %151, %154 : vector<1x1x256xf32>
    %c72 = arith.constant 72 : index
    %156 = memref.load %arg3[%c72] : memref<288xf32, #tpu.memory_space<smem>>
    %157 = vector.broadcast %156 : f32 to vector<1x1x256xf32>
    %158 = arith.mulf %157, %67 : vector<1x1x256xf32>
    %159 = arith.addf %155, %158 : vector<1x1x256xf32>
    %c76 = arith.constant 76 : index
    %160 = memref.load %arg3[%c76] : memref<288xf32, #tpu.memory_space<smem>>
    %161 = vector.broadcast %160 : f32 to vector<1x1x256xf32>
    %162 = arith.mulf %161, %68 : vector<1x1x256xf32>
    %163 = arith.addf %159, %162 : vector<1x1x256xf32>
    %c80 = arith.constant 80 : index
    %164 = memref.load %arg3[%c80] : memref<288xf32, #tpu.memory_space<smem>>
    %165 = vector.broadcast %164 : f32 to vector<1x1x256xf32>
    %166 = arith.mulf %165, %69 : vector<1x1x256xf32>
    %167 = arith.addf %163, %166 : vector<1x1x256xf32>
    %c84 = arith.constant 84 : index
    %168 = memref.load %arg3[%c84] : memref<288xf32, #tpu.memory_space<smem>>
    %169 = vector.broadcast %168 : f32 to vector<1x1x256xf32>
    %170 = arith.mulf %169, %70 : vector<1x1x256xf32>
    %171 = arith.addf %167, %170 : vector<1x1x256xf32>
    %c88 = arith.constant 88 : index
    %172 = memref.load %arg3[%c88] : memref<288xf32, #tpu.memory_space<smem>>
    %173 = vector.broadcast %172 : f32 to vector<1x1x256xf32>
    %174 = arith.mulf %173, %71 : vector<1x1x256xf32>
    %175 = arith.addf %171, %174 : vector<1x1x256xf32>
    %c92 = arith.constant 92 : index
    %176 = memref.load %arg3[%c92] : memref<288xf32, #tpu.memory_space<smem>>
    %177 = vector.broadcast %176 : f32 to vector<1x1x256xf32>
    %178 = arith.mulf %177, %72 : vector<1x1x256xf32>
    %179 = arith.addf %175, %178 : vector<1x1x256xf32>
    %c96 = arith.constant 96 : index
    %180 = memref.load %arg3[%c96] : memref<288xf32, #tpu.memory_space<smem>>
    %181 = vector.broadcast %180 : f32 to vector<1x1x256xf32>
    %182 = arith.mulf %181, %73 : vector<1x1x256xf32>
    %183 = arith.addf %179, %182 : vector<1x1x256xf32>
    %c100 = arith.constant 100 : index
    %184 = memref.load %arg3[%c100] : memref<288xf32, #tpu.memory_space<smem>>
    %185 = vector.broadcast %184 : f32 to vector<1x1x256xf32>
    %186 = arith.mulf %185, %74 : vector<1x1x256xf32>
    %187 = arith.addf %183, %186 : vector<1x1x256xf32>
    %c104 = arith.constant 104 : index
    %188 = memref.load %arg3[%c104] : memref<288xf32, #tpu.memory_space<smem>>
    %189 = vector.broadcast %188 : f32 to vector<1x1x256xf32>
    %190 = arith.mulf %189, %75 : vector<1x1x256xf32>
    %191 = arith.addf %187, %190 : vector<1x1x256xf32>
    %c108 = arith.constant 108 : index
    %192 = memref.load %arg3[%c108] : memref<288xf32, #tpu.memory_space<smem>>
    %193 = vector.broadcast %192 : f32 to vector<1x1x256xf32>
    %194 = arith.mulf %193, %76 : vector<1x1x256xf32>
    %195 = arith.addf %191, %194 : vector<1x1x256xf32>
    %c112 = arith.constant 112 : index
    %196 = memref.load %arg3[%c112] : memref<288xf32, #tpu.memory_space<smem>>
    %197 = vector.broadcast %196 : f32 to vector<1x1x256xf32>
    %198 = arith.mulf %197, %77 : vector<1x1x256xf32>
    %199 = arith.addf %195, %198 : vector<1x1x256xf32>
    %c116 = arith.constant 116 : index
    %200 = memref.load %arg3[%c116] : memref<288xf32, #tpu.memory_space<smem>>
    %201 = vector.broadcast %200 : f32 to vector<1x1x256xf32>
    %202 = arith.mulf %201, %78 : vector<1x1x256xf32>
    %203 = arith.addf %199, %202 : vector<1x1x256xf32>
    %c120 = arith.constant 120 : index
    %204 = memref.load %arg3[%c120] : memref<288xf32, #tpu.memory_space<smem>>
    %205 = vector.broadcast %204 : f32 to vector<1x1x256xf32>
    %206 = arith.mulf %205, %79 : vector<1x1x256xf32>
    %207 = arith.addf %203, %206 : vector<1x1x256xf32>
    %c124 = arith.constant 124 : index
    %208 = memref.load %arg3[%c124] : memref<288xf32, #tpu.memory_space<smem>>
    %209 = vector.broadcast %208 : f32 to vector<1x1x256xf32>
    %210 = arith.mulf %209, %80 : vector<1x1x256xf32>
    %211 = arith.addf %207, %210 : vector<1x1x256xf32>
    %c128 = arith.constant 128 : index
    %212 = memref.load %arg3[%c128] : memref<288xf32, #tpu.memory_space<smem>>
    %213 = vector.broadcast %212 : f32 to vector<1x1x256xf32>
    %214 = arith.mulf %213, %81 : vector<1x1x256xf32>
    %215 = arith.addf %211, %214 : vector<1x1x256xf32>
    %c132 = arith.constant 132 : index
    %216 = memref.load %arg3[%c132] : memref<288xf32, #tpu.memory_space<smem>>
    %217 = vector.broadcast %216 : f32 to vector<1x1x256xf32>
    %218 = arith.mulf %217, %82 : vector<1x1x256xf32>
    %219 = arith.addf %215, %218 : vector<1x1x256xf32>
    %c136 = arith.constant 136 : index
    %220 = memref.load %arg3[%c136] : memref<288xf32, #tpu.memory_space<smem>>
    %221 = vector.broadcast %220 : f32 to vector<1x1x256xf32>
    %222 = arith.mulf %221, %83 : vector<1x1x256xf32>
    %223 = arith.addf %219, %222 : vector<1x1x256xf32>
    %c140 = arith.constant 140 : index
    %224 = memref.load %arg3[%c140] : memref<288xf32, #tpu.memory_space<smem>>
    %225 = vector.broadcast %224 : f32 to vector<1x1x256xf32>
    %226 = arith.mulf %225, %84 : vector<1x1x256xf32>
    %227 = arith.addf %223, %226 : vector<1x1x256xf32>
    %c0_21 = arith.constant 0 : index
    %228 = memref.load %arg4[%c0_21] : memref<8xf32, #tpu.memory_space<smem>>
    %229 = vector.broadcast %228 : f32 to vector<1x1x256xf32>
    %230 = arith.addf %227, %229 : vector<1x1x256xf32>
    %cst = arith.constant 0.000000e+00 : f32
    %231 = vector.broadcast %cst : f32 to vector<1x1x256xf32>
    %232 = arith.maximumf %230, %231 : vector<1x1x256xf32>
    %233 = arith.addf %65, %232 : vector<1x1x256xf32>
    %c1_22 = arith.constant 1 : index
    %234 = memref.load %arg3[%c1_22] : memref<288xf32, #tpu.memory_space<smem>>
    %235 = vector.broadcast %234 : f32 to vector<1x1x256xf32>
    %236 = arith.mulf %235, %49 : vector<1x1x256xf32>
    %c5_23 = arith.constant 5 : index
    %237 = memref.load %arg3[%c5_23] : memref<288xf32, #tpu.memory_space<smem>>
    %238 = vector.broadcast %237 : f32 to vector<1x1x256xf32>
    %239 = arith.mulf %238, %50 : vector<1x1x256xf32>
    %240 = arith.addf %236, %239 : vector<1x1x256xf32>
    %c9 = arith.constant 9 : index
    %241 = memref.load %arg3[%c9] : memref<288xf32, #tpu.memory_space<smem>>
    %242 = vector.broadcast %241 : f32 to vector<1x1x256xf32>
    %243 = arith.mulf %242, %51 : vector<1x1x256xf32>
    %244 = arith.addf %240, %243 : vector<1x1x256xf32>
    %c13 = arith.constant 13 : index
    %245 = memref.load %arg3[%c13] : memref<288xf32, #tpu.memory_space<smem>>
    %246 = vector.broadcast %245 : f32 to vector<1x1x256xf32>
    %247 = arith.mulf %246, %52 : vector<1x1x256xf32>
    %248 = arith.addf %244, %247 : vector<1x1x256xf32>
    %c17 = arith.constant 17 : index
    %249 = memref.load %arg3[%c17] : memref<288xf32, #tpu.memory_space<smem>>
    %250 = vector.broadcast %249 : f32 to vector<1x1x256xf32>
    %251 = arith.mulf %250, %53 : vector<1x1x256xf32>
    %252 = arith.addf %248, %251 : vector<1x1x256xf32>
    %c21 = arith.constant 21 : index
    %253 = memref.load %arg3[%c21] : memref<288xf32, #tpu.memory_space<smem>>
    %254 = vector.broadcast %253 : f32 to vector<1x1x256xf32>
    %255 = arith.mulf %254, %54 : vector<1x1x256xf32>
    %256 = arith.addf %252, %255 : vector<1x1x256xf32>
    %c25 = arith.constant 25 : index
    %257 = memref.load %arg3[%c25] : memref<288xf32, #tpu.memory_space<smem>>
    %258 = vector.broadcast %257 : f32 to vector<1x1x256xf32>
    %259 = arith.mulf %258, %55 : vector<1x1x256xf32>
    %260 = arith.addf %256, %259 : vector<1x1x256xf32>
    %c29 = arith.constant 29 : index
    %261 = memref.load %arg3[%c29] : memref<288xf32, #tpu.memory_space<smem>>
    %262 = vector.broadcast %261 : f32 to vector<1x1x256xf32>
    %263 = arith.mulf %262, %56 : vector<1x1x256xf32>
    %264 = arith.addf %260, %263 : vector<1x1x256xf32>
    %c33 = arith.constant 33 : index
    %265 = memref.load %arg3[%c33] : memref<288xf32, #tpu.memory_space<smem>>
    %266 = vector.broadcast %265 : f32 to vector<1x1x256xf32>
    %267 = arith.mulf %266, %57 : vector<1x1x256xf32>
    %268 = arith.addf %264, %267 : vector<1x1x256xf32>
    %c37 = arith.constant 37 : index
    %269 = memref.load %arg3[%c37] : memref<288xf32, #tpu.memory_space<smem>>
    %270 = vector.broadcast %269 : f32 to vector<1x1x256xf32>
    %271 = arith.mulf %270, %58 : vector<1x1x256xf32>
    %272 = arith.addf %268, %271 : vector<1x1x256xf32>
    %c41 = arith.constant 41 : index
    %273 = memref.load %arg3[%c41] : memref<288xf32, #tpu.memory_space<smem>>
    %274 = vector.broadcast %273 : f32 to vector<1x1x256xf32>
    %275 = arith.mulf %274, %59 : vector<1x1x256xf32>
    %276 = arith.addf %272, %275 : vector<1x1x256xf32>
    %c45 = arith.constant 45 : index
    %277 = memref.load %arg3[%c45] : memref<288xf32, #tpu.memory_space<smem>>
    %278 = vector.broadcast %277 : f32 to vector<1x1x256xf32>
    %279 = arith.mulf %278, %60 : vector<1x1x256xf32>
    %280 = arith.addf %276, %279 : vector<1x1x256xf32>
    %c49 = arith.constant 49 : index
    %281 = memref.load %arg3[%c49] : memref<288xf32, #tpu.memory_space<smem>>
    %282 = vector.broadcast %281 : f32 to vector<1x1x256xf32>
    %283 = arith.mulf %282, %61 : vector<1x1x256xf32>
    %284 = arith.addf %280, %283 : vector<1x1x256xf32>
    %c53 = arith.constant 53 : index
    %285 = memref.load %arg3[%c53] : memref<288xf32, #tpu.memory_space<smem>>
    %286 = vector.broadcast %285 : f32 to vector<1x1x256xf32>
    %287 = arith.mulf %286, %62 : vector<1x1x256xf32>
    %288 = arith.addf %284, %287 : vector<1x1x256xf32>
    %c57 = arith.constant 57 : index
    %289 = memref.load %arg3[%c57] : memref<288xf32, #tpu.memory_space<smem>>
    %290 = vector.broadcast %289 : f32 to vector<1x1x256xf32>
    %291 = arith.mulf %290, %63 : vector<1x1x256xf32>
    %292 = arith.addf %288, %291 : vector<1x1x256xf32>
    %c61 = arith.constant 61 : index
    %293 = memref.load %arg3[%c61] : memref<288xf32, #tpu.memory_space<smem>>
    %294 = vector.broadcast %293 : f32 to vector<1x1x256xf32>
    %295 = arith.mulf %294, %64 : vector<1x1x256xf32>
    %296 = arith.addf %292, %295 : vector<1x1x256xf32>
    %c65 = arith.constant 65 : index
    %297 = memref.load %arg3[%c65] : memref<288xf32, #tpu.memory_space<smem>>
    %298 = vector.broadcast %297 : f32 to vector<1x1x256xf32>
    %299 = arith.mulf %298, %65 : vector<1x1x256xf32>
    %300 = arith.addf %296, %299 : vector<1x1x256xf32>
    %c69 = arith.constant 69 : index
    %301 = memref.load %arg3[%c69] : memref<288xf32, #tpu.memory_space<smem>>
    %302 = vector.broadcast %301 : f32 to vector<1x1x256xf32>
    %303 = arith.mulf %302, %66 : vector<1x1x256xf32>
    %304 = arith.addf %300, %303 : vector<1x1x256xf32>
    %c73 = arith.constant 73 : index
    %305 = memref.load %arg3[%c73] : memref<288xf32, #tpu.memory_space<smem>>
    %306 = vector.broadcast %305 : f32 to vector<1x1x256xf32>
    %307 = arith.mulf %306, %67 : vector<1x1x256xf32>
    %308 = arith.addf %304, %307 : vector<1x1x256xf32>
    %c77 = arith.constant 77 : index
    %309 = memref.load %arg3[%c77] : memref<288xf32, #tpu.memory_space<smem>>
    %310 = vector.broadcast %309 : f32 to vector<1x1x256xf32>
    %311 = arith.mulf %310, %68 : vector<1x1x256xf32>
    %312 = arith.addf %308, %311 : vector<1x1x256xf32>
    %c81 = arith.constant 81 : index
    %313 = memref.load %arg3[%c81] : memref<288xf32, #tpu.memory_space<smem>>
    %314 = vector.broadcast %313 : f32 to vector<1x1x256xf32>
    %315 = arith.mulf %314, %69 : vector<1x1x256xf32>
    %316 = arith.addf %312, %315 : vector<1x1x256xf32>
    %c85 = arith.constant 85 : index
    %317 = memref.load %arg3[%c85] : memref<288xf32, #tpu.memory_space<smem>>
    %318 = vector.broadcast %317 : f32 to vector<1x1x256xf32>
    %319 = arith.mulf %318, %70 : vector<1x1x256xf32>
    %320 = arith.addf %316, %319 : vector<1x1x256xf32>
    %c89 = arith.constant 89 : index
    %321 = memref.load %arg3[%c89] : memref<288xf32, #tpu.memory_space<smem>>
    %322 = vector.broadcast %321 : f32 to vector<1x1x256xf32>
    %323 = arith.mulf %322, %71 : vector<1x1x256xf32>
    %324 = arith.addf %320, %323 : vector<1x1x256xf32>
    %c93 = arith.constant 93 : index
    %325 = memref.load %arg3[%c93] : memref<288xf32, #tpu.memory_space<smem>>
    %326 = vector.broadcast %325 : f32 to vector<1x1x256xf32>
    %327 = arith.mulf %326, %72 : vector<1x1x256xf32>
    %328 = arith.addf %324, %327 : vector<1x1x256xf32>
    %c97 = arith.constant 97 : index
    %329 = memref.load %arg3[%c97] : memref<288xf32, #tpu.memory_space<smem>>
    %330 = vector.broadcast %329 : f32 to vector<1x1x256xf32>
    %331 = arith.mulf %330, %73 : vector<1x1x256xf32>
    %332 = arith.addf %328, %331 : vector<1x1x256xf32>
    %c101 = arith.constant 101 : index
    %333 = memref.load %arg3[%c101] : memref<288xf32, #tpu.memory_space<smem>>
    %334 = vector.broadcast %333 : f32 to vector<1x1x256xf32>
    %335 = arith.mulf %334, %74 : vector<1x1x256xf32>
    %336 = arith.addf %332, %335 : vector<1x1x256xf32>
    %c105 = arith.constant 105 : index
    %337 = memref.load %arg3[%c105] : memref<288xf32, #tpu.memory_space<smem>>
    %338 = vector.broadcast %337 : f32 to vector<1x1x256xf32>
    %339 = arith.mulf %338, %75 : vector<1x1x256xf32>
    %340 = arith.addf %336, %339 : vector<1x1x256xf32>
    %c109 = arith.constant 109 : index
    %341 = memref.load %arg3[%c109] : memref<288xf32, #tpu.memory_space<smem>>
    %342 = vector.broadcast %341 : f32 to vector<1x1x256xf32>
    %343 = arith.mulf %342, %76 : vector<1x1x256xf32>
    %344 = arith.addf %340, %343 : vector<1x1x256xf32>
    %c113 = arith.constant 113 : index
    %345 = memref.load %arg3[%c113] : memref<288xf32, #tpu.memory_space<smem>>
    %346 = vector.broadcast %345 : f32 to vector<1x1x256xf32>
    %347 = arith.mulf %346, %77 : vector<1x1x256xf32>
    %348 = arith.addf %344, %347 : vector<1x1x256xf32>
    %c117 = arith.constant 117 : index
    %349 = memref.load %arg3[%c117] : memref<288xf32, #tpu.memory_space<smem>>
    %350 = vector.broadcast %349 : f32 to vector<1x1x256xf32>
    %351 = arith.mulf %350, %78 : vector<1x1x256xf32>
    %352 = arith.addf %348, %351 : vector<1x1x256xf32>
    %c121 = arith.constant 121 : index
    %353 = memref.load %arg3[%c121] : memref<288xf32, #tpu.memory_space<smem>>
    %354 = vector.broadcast %353 : f32 to vector<1x1x256xf32>
    %355 = arith.mulf %354, %79 : vector<1x1x256xf32>
    %356 = arith.addf %352, %355 : vector<1x1x256xf32>
    %c125 = arith.constant 125 : index
    %357 = memref.load %arg3[%c125] : memref<288xf32, #tpu.memory_space<smem>>
    %358 = vector.broadcast %357 : f32 to vector<1x1x256xf32>
    %359 = arith.mulf %358, %80 : vector<1x1x256xf32>
    %360 = arith.addf %356, %359 : vector<1x1x256xf32>
    %c129 = arith.constant 129 : index
    %361 = memref.load %arg3[%c129] : memref<288xf32, #tpu.memory_space<smem>>
    %362 = vector.broadcast %361 : f32 to vector<1x1x256xf32>
    %363 = arith.mulf %362, %81 : vector<1x1x256xf32>
    %364 = arith.addf %360, %363 : vector<1x1x256xf32>
    %c133 = arith.constant 133 : index
    %365 = memref.load %arg3[%c133] : memref<288xf32, #tpu.memory_space<smem>>
    %366 = vector.broadcast %365 : f32 to vector<1x1x256xf32>
    %367 = arith.mulf %366, %82 : vector<1x1x256xf32>
    %368 = arith.addf %364, %367 : vector<1x1x256xf32>
    %c137 = arith.constant 137 : index
    %369 = memref.load %arg3[%c137] : memref<288xf32, #tpu.memory_space<smem>>
    %370 = vector.broadcast %369 : f32 to vector<1x1x256xf32>
    %371 = arith.mulf %370, %83 : vector<1x1x256xf32>
    %372 = arith.addf %368, %371 : vector<1x1x256xf32>
    %c141 = arith.constant 141 : index
    %373 = memref.load %arg3[%c141] : memref<288xf32, #tpu.memory_space<smem>>
    %374 = vector.broadcast %373 : f32 to vector<1x1x256xf32>
    %375 = arith.mulf %374, %84 : vector<1x1x256xf32>
    %376 = arith.addf %372, %375 : vector<1x1x256xf32>
    %c1_24 = arith.constant 1 : index
    %377 = memref.load %arg4[%c1_24] : memref<8xf32, #tpu.memory_space<smem>>
    %378 = vector.broadcast %377 : f32 to vector<1x1x256xf32>
    %379 = arith.addf %376, %378 : vector<1x1x256xf32>
    %cst_25 = arith.constant 0.000000e+00 : f32
    %380 = vector.broadcast %cst_25 : f32 to vector<1x1x256xf32>
    %381 = arith.maximumf %379, %380 : vector<1x1x256xf32>
    %382 = arith.addf %66, %381 : vector<1x1x256xf32>
    %c2_26 = arith.constant 2 : index
    %383 = memref.load %arg3[%c2_26] : memref<288xf32, #tpu.memory_space<smem>>
    %384 = vector.broadcast %383 : f32 to vector<1x1x256xf32>
    %385 = arith.mulf %384, %49 : vector<1x1x256xf32>
    %c6_27 = arith.constant 6 : index
    %386 = memref.load %arg3[%c6_27] : memref<288xf32, #tpu.memory_space<smem>>
    %387 = vector.broadcast %386 : f32 to vector<1x1x256xf32>
    %388 = arith.mulf %387, %50 : vector<1x1x256xf32>
    %389 = arith.addf %385, %388 : vector<1x1x256xf32>
    %c10 = arith.constant 10 : index
    %390 = memref.load %arg3[%c10] : memref<288xf32, #tpu.memory_space<smem>>
    %391 = vector.broadcast %390 : f32 to vector<1x1x256xf32>
    %392 = arith.mulf %391, %51 : vector<1x1x256xf32>
    %393 = arith.addf %389, %392 : vector<1x1x256xf32>
    %c14 = arith.constant 14 : index
    %394 = memref.load %arg3[%c14] : memref<288xf32, #tpu.memory_space<smem>>
    %395 = vector.broadcast %394 : f32 to vector<1x1x256xf32>
    %396 = arith.mulf %395, %52 : vector<1x1x256xf32>
    %397 = arith.addf %393, %396 : vector<1x1x256xf32>
    %c18 = arith.constant 18 : index
    %398 = memref.load %arg3[%c18] : memref<288xf32, #tpu.memory_space<smem>>
    %399 = vector.broadcast %398 : f32 to vector<1x1x256xf32>
    %400 = arith.mulf %399, %53 : vector<1x1x256xf32>
    %401 = arith.addf %397, %400 : vector<1x1x256xf32>
    %c22 = arith.constant 22 : index
    %402 = memref.load %arg3[%c22] : memref<288xf32, #tpu.memory_space<smem>>
    %403 = vector.broadcast %402 : f32 to vector<1x1x256xf32>
    %404 = arith.mulf %403, %54 : vector<1x1x256xf32>
    %405 = arith.addf %401, %404 : vector<1x1x256xf32>
    %c26 = arith.constant 26 : index
    %406 = memref.load %arg3[%c26] : memref<288xf32, #tpu.memory_space<smem>>
    %407 = vector.broadcast %406 : f32 to vector<1x1x256xf32>
    %408 = arith.mulf %407, %55 : vector<1x1x256xf32>
    %409 = arith.addf %405, %408 : vector<1x1x256xf32>
    %c30 = arith.constant 30 : index
    %410 = memref.load %arg3[%c30] : memref<288xf32, #tpu.memory_space<smem>>
    %411 = vector.broadcast %410 : f32 to vector<1x1x256xf32>
    %412 = arith.mulf %411, %56 : vector<1x1x256xf32>
    %413 = arith.addf %409, %412 : vector<1x1x256xf32>
    %c34 = arith.constant 34 : index
    %414 = memref.load %arg3[%c34] : memref<288xf32, #tpu.memory_space<smem>>
    %415 = vector.broadcast %414 : f32 to vector<1x1x256xf32>
    %416 = arith.mulf %415, %57 : vector<1x1x256xf32>
    %417 = arith.addf %413, %416 : vector<1x1x256xf32>
    %c38 = arith.constant 38 : index
    %418 = memref.load %arg3[%c38] : memref<288xf32, #tpu.memory_space<smem>>
    %419 = vector.broadcast %418 : f32 to vector<1x1x256xf32>
    %420 = arith.mulf %419, %58 : vector<1x1x256xf32>
    %421 = arith.addf %417, %420 : vector<1x1x256xf32>
    %c42 = arith.constant 42 : index
    %422 = memref.load %arg3[%c42] : memref<288xf32, #tpu.memory_space<smem>>
    %423 = vector.broadcast %422 : f32 to vector<1x1x256xf32>
    %424 = arith.mulf %423, %59 : vector<1x1x256xf32>
    %425 = arith.addf %421, %424 : vector<1x1x256xf32>
    %c46 = arith.constant 46 : index
    %426 = memref.load %arg3[%c46] : memref<288xf32, #tpu.memory_space<smem>>
    %427 = vector.broadcast %426 : f32 to vector<1x1x256xf32>
    %428 = arith.mulf %427, %60 : vector<1x1x256xf32>
    %429 = arith.addf %425, %428 : vector<1x1x256xf32>
    %c50 = arith.constant 50 : index
    %430 = memref.load %arg3[%c50] : memref<288xf32, #tpu.memory_space<smem>>
    %431 = vector.broadcast %430 : f32 to vector<1x1x256xf32>
    %432 = arith.mulf %431, %61 : vector<1x1x256xf32>
    %433 = arith.addf %429, %432 : vector<1x1x256xf32>
    %c54 = arith.constant 54 : index
    %434 = memref.load %arg3[%c54] : memref<288xf32, #tpu.memory_space<smem>>
    %435 = vector.broadcast %434 : f32 to vector<1x1x256xf32>
    %436 = arith.mulf %435, %62 : vector<1x1x256xf32>
    %437 = arith.addf %433, %436 : vector<1x1x256xf32>
    %c58 = arith.constant 58 : index
    %438 = memref.load %arg3[%c58] : memref<288xf32, #tpu.memory_space<smem>>
    %439 = vector.broadcast %438 : f32 to vector<1x1x256xf32>
    %440 = arith.mulf %439, %63 : vector<1x1x256xf32>
    %441 = arith.addf %437, %440 : vector<1x1x256xf32>
    %c62 = arith.constant 62 : index
    %442 = memref.load %arg3[%c62] : memref<288xf32, #tpu.memory_space<smem>>
    %443 = vector.broadcast %442 : f32 to vector<1x1x256xf32>
    %444 = arith.mulf %443, %64 : vector<1x1x256xf32>
    %445 = arith.addf %441, %444 : vector<1x1x256xf32>
    %c66 = arith.constant 66 : index
    %446 = memref.load %arg3[%c66] : memref<288xf32, #tpu.memory_space<smem>>
    %447 = vector.broadcast %446 : f32 to vector<1x1x256xf32>
    %448 = arith.mulf %447, %65 : vector<1x1x256xf32>
    %449 = arith.addf %445, %448 : vector<1x1x256xf32>
    %c70 = arith.constant 70 : index
    %450 = memref.load %arg3[%c70] : memref<288xf32, #tpu.memory_space<smem>>
    %451 = vector.broadcast %450 : f32 to vector<1x1x256xf32>
    %452 = arith.mulf %451, %66 : vector<1x1x256xf32>
    %453 = arith.addf %449, %452 : vector<1x1x256xf32>
    %c74 = arith.constant 74 : index
    %454 = memref.load %arg3[%c74] : memref<288xf32, #tpu.memory_space<smem>>
    %455 = vector.broadcast %454 : f32 to vector<1x1x256xf32>
    %456 = arith.mulf %455, %67 : vector<1x1x256xf32>
    %457 = arith.addf %453, %456 : vector<1x1x256xf32>
    %c78 = arith.constant 78 : index
    %458 = memref.load %arg3[%c78] : memref<288xf32, #tpu.memory_space<smem>>
    %459 = vector.broadcast %458 : f32 to vector<1x1x256xf32>
    %460 = arith.mulf %459, %68 : vector<1x1x256xf32>
    %461 = arith.addf %457, %460 : vector<1x1x256xf32>
    %c82 = arith.constant 82 : index
    %462 = memref.load %arg3[%c82] : memref<288xf32, #tpu.memory_space<smem>>
    %463 = vector.broadcast %462 : f32 to vector<1x1x256xf32>
    %464 = arith.mulf %463, %69 : vector<1x1x256xf32>
    %465 = arith.addf %461, %464 : vector<1x1x256xf32>
    %c86 = arith.constant 86 : index
    %466 = memref.load %arg3[%c86] : memref<288xf32, #tpu.memory_space<smem>>
    %467 = vector.broadcast %466 : f32 to vector<1x1x256xf32>
    %468 = arith.mulf %467, %70 : vector<1x1x256xf32>
    %469 = arith.addf %465, %468 : vector<1x1x256xf32>
    %c90 = arith.constant 90 : index
    %470 = memref.load %arg3[%c90] : memref<288xf32, #tpu.memory_space<smem>>
    %471 = vector.broadcast %470 : f32 to vector<1x1x256xf32>
    %472 = arith.mulf %471, %71 : vector<1x1x256xf32>
    %473 = arith.addf %469, %472 : vector<1x1x256xf32>
    %c94 = arith.constant 94 : index
    %474 = memref.load %arg3[%c94] : memref<288xf32, #tpu.memory_space<smem>>
    %475 = vector.broadcast %474 : f32 to vector<1x1x256xf32>
    %476 = arith.mulf %475, %72 : vector<1x1x256xf32>
    %477 = arith.addf %473, %476 : vector<1x1x256xf32>
    %c98 = arith.constant 98 : index
    %478 = memref.load %arg3[%c98] : memref<288xf32, #tpu.memory_space<smem>>
    %479 = vector.broadcast %478 : f32 to vector<1x1x256xf32>
    %480 = arith.mulf %479, %73 : vector<1x1x256xf32>
    %481 = arith.addf %477, %480 : vector<1x1x256xf32>
    %c102 = arith.constant 102 : index
    %482 = memref.load %arg3[%c102] : memref<288xf32, #tpu.memory_space<smem>>
    %483 = vector.broadcast %482 : f32 to vector<1x1x256xf32>
    %484 = arith.mulf %483, %74 : vector<1x1x256xf32>
    %485 = arith.addf %481, %484 : vector<1x1x256xf32>
    %c106 = arith.constant 106 : index
    %486 = memref.load %arg3[%c106] : memref<288xf32, #tpu.memory_space<smem>>
    %487 = vector.broadcast %486 : f32 to vector<1x1x256xf32>
    %488 = arith.mulf %487, %75 : vector<1x1x256xf32>
    %489 = arith.addf %485, %488 : vector<1x1x256xf32>
    %c110 = arith.constant 110 : index
    %490 = memref.load %arg3[%c110] : memref<288xf32, #tpu.memory_space<smem>>
    %491 = vector.broadcast %490 : f32 to vector<1x1x256xf32>
    %492 = arith.mulf %491, %76 : vector<1x1x256xf32>
    %493 = arith.addf %489, %492 : vector<1x1x256xf32>
    %c114 = arith.constant 114 : index
    %494 = memref.load %arg3[%c114] : memref<288xf32, #tpu.memory_space<smem>>
    %495 = vector.broadcast %494 : f32 to vector<1x1x256xf32>
    %496 = arith.mulf %495, %77 : vector<1x1x256xf32>
    %497 = arith.addf %493, %496 : vector<1x1x256xf32>
    %c118 = arith.constant 118 : index
    %498 = memref.load %arg3[%c118] : memref<288xf32, #tpu.memory_space<smem>>
    %499 = vector.broadcast %498 : f32 to vector<1x1x256xf32>
    %500 = arith.mulf %499, %78 : vector<1x1x256xf32>
    %501 = arith.addf %497, %500 : vector<1x1x256xf32>
    %c122 = arith.constant 122 : index
    %502 = memref.load %arg3[%c122] : memref<288xf32, #tpu.memory_space<smem>>
    %503 = vector.broadcast %502 : f32 to vector<1x1x256xf32>
    %504 = arith.mulf %503, %79 : vector<1x1x256xf32>
    %505 = arith.addf %501, %504 : vector<1x1x256xf32>
    %c126 = arith.constant 126 : index
    %506 = memref.load %arg3[%c126] : memref<288xf32, #tpu.memory_space<smem>>
    %507 = vector.broadcast %506 : f32 to vector<1x1x256xf32>
    %508 = arith.mulf %507, %80 : vector<1x1x256xf32>
    %509 = arith.addf %505, %508 : vector<1x1x256xf32>
    %c130 = arith.constant 130 : index
    %510 = memref.load %arg3[%c130] : memref<288xf32, #tpu.memory_space<smem>>
    %511 = vector.broadcast %510 : f32 to vector<1x1x256xf32>
    %512 = arith.mulf %511, %81 : vector<1x1x256xf32>
    %513 = arith.addf %509, %512 : vector<1x1x256xf32>
    %c134 = arith.constant 134 : index
    %514 = memref.load %arg3[%c134] : memref<288xf32, #tpu.memory_space<smem>>
    %515 = vector.broadcast %514 : f32 to vector<1x1x256xf32>
    %516 = arith.mulf %515, %82 : vector<1x1x256xf32>
    %517 = arith.addf %513, %516 : vector<1x1x256xf32>
    %c138 = arith.constant 138 : index
    %518 = memref.load %arg3[%c138] : memref<288xf32, #tpu.memory_space<smem>>
    %519 = vector.broadcast %518 : f32 to vector<1x1x256xf32>
    %520 = arith.mulf %519, %83 : vector<1x1x256xf32>
    %521 = arith.addf %517, %520 : vector<1x1x256xf32>
    %c142 = arith.constant 142 : index
    %522 = memref.load %arg3[%c142] : memref<288xf32, #tpu.memory_space<smem>>
    %523 = vector.broadcast %522 : f32 to vector<1x1x256xf32>
    %524 = arith.mulf %523, %84 : vector<1x1x256xf32>
    %525 = arith.addf %521, %524 : vector<1x1x256xf32>
    %c2_28 = arith.constant 2 : index
    %526 = memref.load %arg4[%c2_28] : memref<8xf32, #tpu.memory_space<smem>>
    %527 = vector.broadcast %526 : f32 to vector<1x1x256xf32>
    %528 = arith.addf %525, %527 : vector<1x1x256xf32>
    %cst_29 = arith.constant 0.000000e+00 : f32
    %529 = vector.broadcast %cst_29 : f32 to vector<1x1x256xf32>
    %530 = arith.maximumf %528, %529 : vector<1x1x256xf32>
    %531 = arith.addf %67, %530 : vector<1x1x256xf32>
    %c3_30 = arith.constant 3 : index
    %532 = memref.load %arg3[%c3_30] : memref<288xf32, #tpu.memory_space<smem>>
    %533 = vector.broadcast %532 : f32 to vector<1x1x256xf32>
    %534 = arith.mulf %533, %49 : vector<1x1x256xf32>
    %c7_31 = arith.constant 7 : index
    %535 = memref.load %arg3[%c7_31] : memref<288xf32, #tpu.memory_space<smem>>
    %536 = vector.broadcast %535 : f32 to vector<1x1x256xf32>
    %537 = arith.mulf %536, %50 : vector<1x1x256xf32>
    %538 = arith.addf %534, %537 : vector<1x1x256xf32>
    %c11 = arith.constant 11 : index
    %539 = memref.load %arg3[%c11] : memref<288xf32, #tpu.memory_space<smem>>
    %540 = vector.broadcast %539 : f32 to vector<1x1x256xf32>
    %541 = arith.mulf %540, %51 : vector<1x1x256xf32>
    %542 = arith.addf %538, %541 : vector<1x1x256xf32>
    %c15 = arith.constant 15 : index
    %543 = memref.load %arg3[%c15] : memref<288xf32, #tpu.memory_space<smem>>
    %544 = vector.broadcast %543 : f32 to vector<1x1x256xf32>
    %545 = arith.mulf %544, %52 : vector<1x1x256xf32>
    %546 = arith.addf %542, %545 : vector<1x1x256xf32>
    %c19 = arith.constant 19 : index
    %547 = memref.load %arg3[%c19] : memref<288xf32, #tpu.memory_space<smem>>
    %548 = vector.broadcast %547 : f32 to vector<1x1x256xf32>
    %549 = arith.mulf %548, %53 : vector<1x1x256xf32>
    %550 = arith.addf %546, %549 : vector<1x1x256xf32>
    %c23 = arith.constant 23 : index
    %551 = memref.load %arg3[%c23] : memref<288xf32, #tpu.memory_space<smem>>
    %552 = vector.broadcast %551 : f32 to vector<1x1x256xf32>
    %553 = arith.mulf %552, %54 : vector<1x1x256xf32>
    %554 = arith.addf %550, %553 : vector<1x1x256xf32>
    %c27 = arith.constant 27 : index
    %555 = memref.load %arg3[%c27] : memref<288xf32, #tpu.memory_space<smem>>
    %556 = vector.broadcast %555 : f32 to vector<1x1x256xf32>
    %557 = arith.mulf %556, %55 : vector<1x1x256xf32>
    %558 = arith.addf %554, %557 : vector<1x1x256xf32>
    %c31 = arith.constant 31 : index
    %559 = memref.load %arg3[%c31] : memref<288xf32, #tpu.memory_space<smem>>
    %560 = vector.broadcast %559 : f32 to vector<1x1x256xf32>
    %561 = arith.mulf %560, %56 : vector<1x1x256xf32>
    %562 = arith.addf %558, %561 : vector<1x1x256xf32>
    %c35 = arith.constant 35 : index
    %563 = memref.load %arg3[%c35] : memref<288xf32, #tpu.memory_space<smem>>
    %564 = vector.broadcast %563 : f32 to vector<1x1x256xf32>
    %565 = arith.mulf %564, %57 : vector<1x1x256xf32>
    %566 = arith.addf %562, %565 : vector<1x1x256xf32>
    %c39 = arith.constant 39 : index
    %567 = memref.load %arg3[%c39] : memref<288xf32, #tpu.memory_space<smem>>
    %568 = vector.broadcast %567 : f32 to vector<1x1x256xf32>
    %569 = arith.mulf %568, %58 : vector<1x1x256xf32>
    %570 = arith.addf %566, %569 : vector<1x1x256xf32>
    %c43 = arith.constant 43 : index
    %571 = memref.load %arg3[%c43] : memref<288xf32, #tpu.memory_space<smem>>
    %572 = vector.broadcast %571 : f32 to vector<1x1x256xf32>
    %573 = arith.mulf %572, %59 : vector<1x1x256xf32>
    %574 = arith.addf %570, %573 : vector<1x1x256xf32>
    %c47 = arith.constant 47 : index
    %575 = memref.load %arg3[%c47] : memref<288xf32, #tpu.memory_space<smem>>
    %576 = vector.broadcast %575 : f32 to vector<1x1x256xf32>
    %577 = arith.mulf %576, %60 : vector<1x1x256xf32>
    %578 = arith.addf %574, %577 : vector<1x1x256xf32>
    %c51 = arith.constant 51 : index
    %579 = memref.load %arg3[%c51] : memref<288xf32, #tpu.memory_space<smem>>
    %580 = vector.broadcast %579 : f32 to vector<1x1x256xf32>
    %581 = arith.mulf %580, %61 : vector<1x1x256xf32>
    %582 = arith.addf %578, %581 : vector<1x1x256xf32>
    %c55 = arith.constant 55 : index
    %583 = memref.load %arg3[%c55] : memref<288xf32, #tpu.memory_space<smem>>
    %584 = vector.broadcast %583 : f32 to vector<1x1x256xf32>
    %585 = arith.mulf %584, %62 : vector<1x1x256xf32>
    %586 = arith.addf %582, %585 : vector<1x1x256xf32>
    %c59 = arith.constant 59 : index
    %587 = memref.load %arg3[%c59] : memref<288xf32, #tpu.memory_space<smem>>
    %588 = vector.broadcast %587 : f32 to vector<1x1x256xf32>
    %589 = arith.mulf %588, %63 : vector<1x1x256xf32>
    %590 = arith.addf %586, %589 : vector<1x1x256xf32>
    %c63 = arith.constant 63 : index
    %591 = memref.load %arg3[%c63] : memref<288xf32, #tpu.memory_space<smem>>
    %592 = vector.broadcast %591 : f32 to vector<1x1x256xf32>
    %593 = arith.mulf %592, %64 : vector<1x1x256xf32>
    %594 = arith.addf %590, %593 : vector<1x1x256xf32>
    %c67 = arith.constant 67 : index
    %595 = memref.load %arg3[%c67] : memref<288xf32, #tpu.memory_space<smem>>
    %596 = vector.broadcast %595 : f32 to vector<1x1x256xf32>
    %597 = arith.mulf %596, %65 : vector<1x1x256xf32>
    %598 = arith.addf %594, %597 : vector<1x1x256xf32>
    %c71 = arith.constant 71 : index
    %599 = memref.load %arg3[%c71] : memref<288xf32, #tpu.memory_space<smem>>
    %600 = vector.broadcast %599 : f32 to vector<1x1x256xf32>
    %601 = arith.mulf %600, %66 : vector<1x1x256xf32>
    %602 = arith.addf %598, %601 : vector<1x1x256xf32>
    %c75 = arith.constant 75 : index
    %603 = memref.load %arg3[%c75] : memref<288xf32, #tpu.memory_space<smem>>
    %604 = vector.broadcast %603 : f32 to vector<1x1x256xf32>
    %605 = arith.mulf %604, %67 : vector<1x1x256xf32>
    %606 = arith.addf %602, %605 : vector<1x1x256xf32>
    %c79 = arith.constant 79 : index
    %607 = memref.load %arg3[%c79] : memref<288xf32, #tpu.memory_space<smem>>
    %608 = vector.broadcast %607 : f32 to vector<1x1x256xf32>
    %609 = arith.mulf %608, %68 : vector<1x1x256xf32>
    %610 = arith.addf %606, %609 : vector<1x1x256xf32>
    %c83 = arith.constant 83 : index
    %611 = memref.load %arg3[%c83] : memref<288xf32, #tpu.memory_space<smem>>
    %612 = vector.broadcast %611 : f32 to vector<1x1x256xf32>
    %613 = arith.mulf %612, %69 : vector<1x1x256xf32>
    %614 = arith.addf %610, %613 : vector<1x1x256xf32>
    %c87 = arith.constant 87 : index
    %615 = memref.load %arg3[%c87] : memref<288xf32, #tpu.memory_space<smem>>
    %616 = vector.broadcast %615 : f32 to vector<1x1x256xf32>
    %617 = arith.mulf %616, %70 : vector<1x1x256xf32>
    %618 = arith.addf %614, %617 : vector<1x1x256xf32>
    %c91 = arith.constant 91 : index
    %619 = memref.load %arg3[%c91] : memref<288xf32, #tpu.memory_space<smem>>
    %620 = vector.broadcast %619 : f32 to vector<1x1x256xf32>
    %621 = arith.mulf %620, %71 : vector<1x1x256xf32>
    %622 = arith.addf %618, %621 : vector<1x1x256xf32>
    %c95 = arith.constant 95 : index
    %623 = memref.load %arg3[%c95] : memref<288xf32, #tpu.memory_space<smem>>
    %624 = vector.broadcast %623 : f32 to vector<1x1x256xf32>
    %625 = arith.mulf %624, %72 : vector<1x1x256xf32>
    %626 = arith.addf %622, %625 : vector<1x1x256xf32>
    %c99 = arith.constant 99 : index
    %627 = memref.load %arg3[%c99] : memref<288xf32, #tpu.memory_space<smem>>
    %628 = vector.broadcast %627 : f32 to vector<1x1x256xf32>
    %629 = arith.mulf %628, %73 : vector<1x1x256xf32>
    %630 = arith.addf %626, %629 : vector<1x1x256xf32>
    %c103 = arith.constant 103 : index
    %631 = memref.load %arg3[%c103] : memref<288xf32, #tpu.memory_space<smem>>
    %632 = vector.broadcast %631 : f32 to vector<1x1x256xf32>
    %633 = arith.mulf %632, %74 : vector<1x1x256xf32>
    %634 = arith.addf %630, %633 : vector<1x1x256xf32>
    %c107 = arith.constant 107 : index
    %635 = memref.load %arg3[%c107] : memref<288xf32, #tpu.memory_space<smem>>
    %636 = vector.broadcast %635 : f32 to vector<1x1x256xf32>
    %637 = arith.mulf %636, %75 : vector<1x1x256xf32>
    %638 = arith.addf %634, %637 : vector<1x1x256xf32>
    %c111 = arith.constant 111 : index
    %639 = memref.load %arg3[%c111] : memref<288xf32, #tpu.memory_space<smem>>
    %640 = vector.broadcast %639 : f32 to vector<1x1x256xf32>
    %641 = arith.mulf %640, %76 : vector<1x1x256xf32>
    %642 = arith.addf %638, %641 : vector<1x1x256xf32>
    %c115 = arith.constant 115 : index
    %643 = memref.load %arg3[%c115] : memref<288xf32, #tpu.memory_space<smem>>
    %644 = vector.broadcast %643 : f32 to vector<1x1x256xf32>
    %645 = arith.mulf %644, %77 : vector<1x1x256xf32>
    %646 = arith.addf %642, %645 : vector<1x1x256xf32>
    %c119 = arith.constant 119 : index
    %647 = memref.load %arg3[%c119] : memref<288xf32, #tpu.memory_space<smem>>
    %648 = vector.broadcast %647 : f32 to vector<1x1x256xf32>
    %649 = arith.mulf %648, %78 : vector<1x1x256xf32>
    %650 = arith.addf %646, %649 : vector<1x1x256xf32>
    %c123 = arith.constant 123 : index
    %651 = memref.load %arg3[%c123] : memref<288xf32, #tpu.memory_space<smem>>
    %652 = vector.broadcast %651 : f32 to vector<1x1x256xf32>
    %653 = arith.mulf %652, %79 : vector<1x1x256xf32>
    %654 = arith.addf %650, %653 : vector<1x1x256xf32>
    %c127 = arith.constant 127 : index
    %655 = memref.load %arg3[%c127] : memref<288xf32, #tpu.memory_space<smem>>
    %656 = vector.broadcast %655 : f32 to vector<1x1x256xf32>
    %657 = arith.mulf %656, %80 : vector<1x1x256xf32>
    %658 = arith.addf %654, %657 : vector<1x1x256xf32>
    %c131 = arith.constant 131 : index
    %659 = memref.load %arg3[%c131] : memref<288xf32, #tpu.memory_space<smem>>
    %660 = vector.broadcast %659 : f32 to vector<1x1x256xf32>
    %661 = arith.mulf %660, %81 : vector<1x1x256xf32>
    %662 = arith.addf %658, %661 : vector<1x1x256xf32>
    %c135 = arith.constant 135 : index
    %663 = memref.load %arg3[%c135] : memref<288xf32, #tpu.memory_space<smem>>
    %664 = vector.broadcast %663 : f32 to vector<1x1x256xf32>
    %665 = arith.mulf %664, %82 : vector<1x1x256xf32>
    %666 = arith.addf %662, %665 : vector<1x1x256xf32>
    %c139 = arith.constant 139 : index
    %667 = memref.load %arg3[%c139] : memref<288xf32, #tpu.memory_space<smem>>
    %668 = vector.broadcast %667 : f32 to vector<1x1x256xf32>
    %669 = arith.mulf %668, %83 : vector<1x1x256xf32>
    %670 = arith.addf %666, %669 : vector<1x1x256xf32>
    %c143 = arith.constant 143 : index
    %671 = memref.load %arg3[%c143] : memref<288xf32, #tpu.memory_space<smem>>
    %672 = vector.broadcast %671 : f32 to vector<1x1x256xf32>
    %673 = arith.mulf %672, %84 : vector<1x1x256xf32>
    %674 = arith.addf %670, %673 : vector<1x1x256xf32>
    %c3_32 = arith.constant 3 : index
    %675 = memref.load %arg4[%c3_32] : memref<8xf32, #tpu.memory_space<smem>>
    %676 = vector.broadcast %675 : f32 to vector<1x1x256xf32>
    %677 = arith.addf %674, %676 : vector<1x1x256xf32>
    %cst_33 = arith.constant 0.000000e+00 : f32
    %678 = vector.broadcast %cst_33 : f32 to vector<1x1x256xf32>
    %679 = arith.maximumf %677, %678 : vector<1x1x256xf32>
    %680 = arith.addf %68, %679 : vector<1x1x256xf32>
    %681 = tpu.concatenate %233, %382, %531, %680 in 1 : vector<1x1x256xf32>, vector<1x1x256xf32>, vector<1x1x256xf32>, vector<1x1x256xf32> -> vector<1x4x256xf32>
    %c17_i32_34 = arith.constant 17 : i32
    %682 = tpu.dynamic_rotate %681 by %c17_i32_34 dim 2 : vector<1x4x256xf32>, i32 -> vector<1x4x256xf32>
    %c0_35 = arith.constant 0 : index
    %c0_36 = arith.constant 0 : index
    %c0_37 = arith.constant 0 : index
    %683 = vector.load %arg2[%c0_35, %c0_36, %c0_37] : memref<9x1x256xf32, #tpu.memory_space<vmem>>, vector<1x1x256xf32>
    %684 = vector.shape_cast %683 : vector<1x1x256xf32> to vector<1x256xf32>
    %685 = vector.shape_cast %684 : vector<1x256xf32> to vector<1x1x256xf32>
    %686 = vector.broadcast %685 : vector<1x1x256xf32> to vector<1x4x256xf32>
    %687 = arith.mulf %682, %686 : vector<1x4x256xf32>
    %c16_i32_38 = arith.constant 16 : i32
    %688 = tpu.dynamic_rotate %681 by %c16_i32_38 dim 2 : vector<1x4x256xf32>, i32 -> vector<1x4x256xf32>
    %c1_39 = arith.constant 1 : index
    %c0_40 = arith.constant 0 : index
    %c0_41 = arith.constant 0 : index
    %689 = vector.load %arg2[%c1_39, %c0_40, %c0_41] : memref<9x1x256xf32, #tpu.memory_space<vmem>>, vector<1x1x256xf32>
    %690 = vector.shape_cast %689 : vector<1x1x256xf32> to vector<1x256xf32>
    %691 = vector.shape_cast %690 : vector<1x256xf32> to vector<1x1x256xf32>
    %692 = vector.broadcast %691 : vector<1x1x256xf32> to vector<1x4x256xf32>
    %693 = arith.mulf %688, %692 : vector<1x4x256xf32>
    %c15_i32_42 = arith.constant 15 : i32
    %694 = tpu.dynamic_rotate %681 by %c15_i32_42 dim 2 : vector<1x4x256xf32>, i32 -> vector<1x4x256xf32>
    %c2_43 = arith.constant 2 : index
    %c0_44 = arith.constant 0 : index
    %c0_45 = arith.constant 0 : index
    %695 = vector.load %arg2[%c2_43, %c0_44, %c0_45] : memref<9x1x256xf32, #tpu.memory_space<vmem>>, vector<1x1x256xf32>
    %696 = vector.shape_cast %695 : vector<1x1x256xf32> to vector<1x256xf32>
    %697 = vector.shape_cast %696 : vector<1x256xf32> to vector<1x1x256xf32>
    %698 = vector.broadcast %697 : vector<1x1x256xf32> to vector<1x4x256xf32>
    %699 = arith.mulf %694, %698 : vector<1x4x256xf32>
    %c1_i32_46 = arith.constant 1 : i32
    %700 = tpu.dynamic_rotate %681 by %c1_i32_46 dim 2 : vector<1x4x256xf32>, i32 -> vector<1x4x256xf32>
    %c3_47 = arith.constant 3 : index
    %c0_48 = arith.constant 0 : index
    %c0_49 = arith.constant 0 : index
    %701 = vector.load %arg2[%c3_47, %c0_48, %c0_49] : memref<9x1x256xf32, #tpu.memory_space<vmem>>, vector<1x1x256xf32>
    %702 = vector.shape_cast %701 : vector<1x1x256xf32> to vector<1x256xf32>
    %703 = vector.shape_cast %702 : vector<1x256xf32> to vector<1x1x256xf32>
    %704 = vector.broadcast %703 : vector<1x1x256xf32> to vector<1x4x256xf32>
    %705 = arith.mulf %700, %704 : vector<1x4x256xf32>
    %c255_i32_50 = arith.constant 255 : i32
    %706 = tpu.dynamic_rotate %681 by %c255_i32_50 dim 2 : vector<1x4x256xf32>, i32 -> vector<1x4x256xf32>
    %c5_51 = arith.constant 5 : index
    %c0_52 = arith.constant 0 : index
    %c0_53 = arith.constant 0 : index
    %707 = vector.load %arg2[%c5_51, %c0_52, %c0_53] : memref<9x1x256xf32, #tpu.memory_space<vmem>>, vector<1x1x256xf32>
    %708 = vector.shape_cast %707 : vector<1x1x256xf32> to vector<1x256xf32>
    %709 = vector.shape_cast %708 : vector<1x256xf32> to vector<1x1x256xf32>
    %710 = vector.broadcast %709 : vector<1x1x256xf32> to vector<1x4x256xf32>
    %711 = arith.mulf %706, %710 : vector<1x4x256xf32>
    %c241_i32_54 = arith.constant 241 : i32
    %712 = tpu.dynamic_rotate %681 by %c241_i32_54 dim 2 : vector<1x4x256xf32>, i32 -> vector<1x4x256xf32>
    %c6_55 = arith.constant 6 : index
    %c0_56 = arith.constant 0 : index
    %c0_57 = arith.constant 0 : index
    %713 = vector.load %arg2[%c6_55, %c0_56, %c0_57] : memref<9x1x256xf32, #tpu.memory_space<vmem>>, vector<1x1x256xf32>
    %714 = vector.shape_cast %713 : vector<1x1x256xf32> to vector<1x256xf32>
    %715 = vector.shape_cast %714 : vector<1x256xf32> to vector<1x1x256xf32>
    %716 = vector.broadcast %715 : vector<1x1x256xf32> to vector<1x4x256xf32>
    %717 = arith.mulf %712, %716 : vector<1x4x256xf32>
    %c240_i32_58 = arith.constant 240 : i32
    %718 = tpu.dynamic_rotate %681 by %c240_i32_58 dim 2 : vector<1x4x256xf32>, i32 -> vector<1x4x256xf32>
    %c7_59 = arith.constant 7 : index
    %c0_60 = arith.constant 0 : index
    %c0_61 = arith.constant 0 : index
    %719 = vector.load %arg2[%c7_59, %c0_60, %c0_61] : memref<9x1x256xf32, #tpu.memory_space<vmem>>, vector<1x1x256xf32>
    %720 = vector.shape_cast %719 : vector<1x1x256xf32> to vector<1x256xf32>
    %721 = vector.shape_cast %720 : vector<1x256xf32> to vector<1x1x256xf32>
    %722 = vector.broadcast %721 : vector<1x1x256xf32> to vector<1x4x256xf32>
    %723 = arith.mulf %718, %722 : vector<1x4x256xf32>
    %c239_i32_62 = arith.constant 239 : i32
    %724 = tpu.dynamic_rotate %681 by %c239_i32_62 dim 2 : vector<1x4x256xf32>, i32 -> vector<1x4x256xf32>
    %c8_63 = arith.constant 8 : index
    %c0_64 = arith.constant 0 : index
    %c0_65 = arith.constant 0 : index
    %725 = vector.load %arg2[%c8_63, %c0_64, %c0_65] : memref<9x1x256xf32, #tpu.memory_space<vmem>>, vector<1x1x256xf32>
    %726 = vector.shape_cast %725 : vector<1x1x256xf32> to vector<1x256xf32>
    %727 = vector.shape_cast %726 : vector<1x256xf32> to vector<1x1x256xf32>
    %728 = vector.broadcast %727 : vector<1x1x256xf32> to vector<1x4x256xf32>
    %729 = arith.mulf %724, %728 : vector<1x4x256xf32>
    %730 = vector.extract_strided_slice %687 {offsets = [0, 0, 0], sizes = [1, 1, 256], strides = [1, 1, 1]} : vector<1x4x256xf32> to vector<1x1x256xf32>
    %731 = vector.extract_strided_slice %687 {offsets = [0, 1, 0], sizes = [1, 1, 256], strides = [1, 1, 1]} : vector<1x4x256xf32> to vector<1x1x256xf32>
    %732 = vector.extract_strided_slice %687 {offsets = [0, 2, 0], sizes = [1, 1, 256], strides = [1, 1, 1]} : vector<1x4x256xf32> to vector<1x1x256xf32>
    %733 = vector.extract_strided_slice %687 {offsets = [0, 3, 0], sizes = [1, 1, 256], strides = [1, 1, 1]} : vector<1x4x256xf32> to vector<1x1x256xf32>
    %734 = vector.extract_strided_slice %693 {offsets = [0, 0, 0], sizes = [1, 1, 256], strides = [1, 1, 1]} : vector<1x4x256xf32> to vector<1x1x256xf32>
    %735 = vector.extract_strided_slice %693 {offsets = [0, 1, 0], sizes = [1, 1, 256], strides = [1, 1, 1]} : vector<1x4x256xf32> to vector<1x1x256xf32>
    %736 = vector.extract_strided_slice %693 {offsets = [0, 2, 0], sizes = [1, 1, 256], strides = [1, 1, 1]} : vector<1x4x256xf32> to vector<1x1x256xf32>
    %737 = vector.extract_strided_slice %693 {offsets = [0, 3, 0], sizes = [1, 1, 256], strides = [1, 1, 1]} : vector<1x4x256xf32> to vector<1x1x256xf32>
    %738 = vector.extract_strided_slice %699 {offsets = [0, 0, 0], sizes = [1, 1, 256], strides = [1, 1, 1]} : vector<1x4x256xf32> to vector<1x1x256xf32>
    %739 = vector.extract_strided_slice %699 {offsets = [0, 1, 0], sizes = [1, 1, 256], strides = [1, 1, 1]} : vector<1x4x256xf32> to vector<1x1x256xf32>
    %740 = vector.extract_strided_slice %699 {offsets = [0, 2, 0], sizes = [1, 1, 256], strides = [1, 1, 1]} : vector<1x4x256xf32> to vector<1x1x256xf32>
    %741 = vector.extract_strided_slice %699 {offsets = [0, 3, 0], sizes = [1, 1, 256], strides = [1, 1, 1]} : vector<1x4x256xf32> to vector<1x1x256xf32>
    %742 = vector.extract_strided_slice %705 {offsets = [0, 0, 0], sizes = [1, 1, 256], strides = [1, 1, 1]} : vector<1x4x256xf32> to vector<1x1x256xf32>
    %743 = vector.extract_strided_slice %705 {offsets = [0, 1, 0], sizes = [1, 1, 256], strides = [1, 1, 1]} : vector<1x4x256xf32> to vector<1x1x256xf32>
    %744 = vector.extract_strided_slice %705 {offsets = [0, 2, 0], sizes = [1, 1, 256], strides = [1, 1, 1]} : vector<1x4x256xf32> to vector<1x1x256xf32>
    %745 = vector.extract_strided_slice %705 {offsets = [0, 3, 0], sizes = [1, 1, 256], strides = [1, 1, 1]} : vector<1x4x256xf32> to vector<1x1x256xf32>
    %746 = vector.extract_strided_slice %681 {offsets = [0, 0, 0], sizes = [1, 1, 256], strides = [1, 1, 1]} : vector<1x4x256xf32> to vector<1x1x256xf32>
    %747 = vector.extract_strided_slice %681 {offsets = [0, 1, 0], sizes = [1, 1, 256], strides = [1, 1, 1]} : vector<1x4x256xf32> to vector<1x1x256xf32>
    %748 = vector.extract_strided_slice %681 {offsets = [0, 2, 0], sizes = [1, 1, 256], strides = [1, 1, 1]} : vector<1x4x256xf32> to vector<1x1x256xf32>
    %749 = vector.extract_strided_slice %681 {offsets = [0, 3, 0], sizes = [1, 1, 256], strides = [1, 1, 1]} : vector<1x4x256xf32> to vector<1x1x256xf32>
    %750 = vector.extract_strided_slice %711 {offsets = [0, 0, 0], sizes = [1, 1, 256], strides = [1, 1, 1]} : vector<1x4x256xf32> to vector<1x1x256xf32>
    %751 = vector.extract_strided_slice %711 {offsets = [0, 1, 0], sizes = [1, 1, 256], strides = [1, 1, 1]} : vector<1x4x256xf32> to vector<1x1x256xf32>
    %752 = vector.extract_strided_slice %711 {offsets = [0, 2, 0], sizes = [1, 1, 256], strides = [1, 1, 1]} : vector<1x4x256xf32> to vector<1x1x256xf32>
    %753 = vector.extract_strided_slice %711 {offsets = [0, 3, 0], sizes = [1, 1, 256], strides = [1, 1, 1]} : vector<1x4x256xf32> to vector<1x1x256xf32>
    %754 = vector.extract_strided_slice %717 {offsets = [0, 0, 0], sizes = [1, 1, 256], strides = [1, 1, 1]} : vector<1x4x256xf32> to vector<1x1x256xf32>
    %755 = vector.extract_strided_slice %717 {offsets = [0, 1, 0], sizes = [1, 1, 256], strides = [1, 1, 1]} : vector<1x4x256xf32> to vector<1x1x256xf32>
    %756 = vector.extract_strided_slice %717 {offsets = [0, 2, 0], sizes = [1, 1, 256], strides = [1, 1, 1]} : vector<1x4x256xf32> to vector<1x1x256xf32>
    %757 = vector.extract_strided_slice %717 {offsets = [0, 3, 0], sizes = [1, 1, 256], strides = [1, 1, 1]} : vector<1x4x256xf32> to vector<1x1x256xf32>
    %758 = vector.extract_strided_slice %723 {offsets = [0, 0, 0], sizes = [1, 1, 256], strides = [1, 1, 1]} : vector<1x4x256xf32> to vector<1x1x256xf32>
    %759 = vector.extract_strided_slice %723 {offsets = [0, 1, 0], sizes = [1, 1, 256], strides = [1, 1, 1]} : vector<1x4x256xf32> to vector<1x1x256xf32>
    %760 = vector.extract_strided_slice %723 {offsets = [0, 2, 0], sizes = [1, 1, 256], strides = [1, 1, 1]} : vector<1x4x256xf32> to vector<1x1x256xf32>
    %761 = vector.extract_strided_slice %723 {offsets = [0, 3, 0], sizes = [1, 1, 256], strides = [1, 1, 1]} : vector<1x4x256xf32> to vector<1x1x256xf32>
    %762 = vector.extract_strided_slice %729 {offsets = [0, 0, 0], sizes = [1, 1, 256], strides = [1, 1, 1]} : vector<1x4x256xf32> to vector<1x1x256xf32>
    %763 = vector.extract_strided_slice %729 {offsets = [0, 1, 0], sizes = [1, 1, 256], strides = [1, 1, 1]} : vector<1x4x256xf32> to vector<1x1x256xf32>
    %764 = vector.extract_strided_slice %729 {offsets = [0, 2, 0], sizes = [1, 1, 256], strides = [1, 1, 1]} : vector<1x4x256xf32> to vector<1x1x256xf32>
    %765 = vector.extract_strided_slice %729 {offsets = [0, 3, 0], sizes = [1, 1, 256], strides = [1, 1, 1]} : vector<1x4x256xf32> to vector<1x1x256xf32>
    %c144 = arith.constant 144 : index
    %766 = memref.load %arg3[%c144] : memref<288xf32, #tpu.memory_space<smem>>
    %767 = vector.broadcast %766 : f32 to vector<1x1x256xf32>
    %768 = arith.mulf %767, %730 : vector<1x1x256xf32>
    %c148 = arith.constant 148 : index
    %769 = memref.load %arg3[%c148] : memref<288xf32, #tpu.memory_space<smem>>
    %770 = vector.broadcast %769 : f32 to vector<1x1x256xf32>
    %771 = arith.mulf %770, %731 : vector<1x1x256xf32>
    %772 = arith.addf %768, %771 : vector<1x1x256xf32>
    %c152 = arith.constant 152 : index
    %773 = memref.load %arg3[%c152] : memref<288xf32, #tpu.memory_space<smem>>
    %774 = vector.broadcast %773 : f32 to vector<1x1x256xf32>
    %775 = arith.mulf %774, %732 : vector<1x1x256xf32>
    %776 = arith.addf %772, %775 : vector<1x1x256xf32>
    %c156 = arith.constant 156 : index
    %777 = memref.load %arg3[%c156] : memref<288xf32, #tpu.memory_space<smem>>
    %778 = vector.broadcast %777 : f32 to vector<1x1x256xf32>
    %779 = arith.mulf %778, %733 : vector<1x1x256xf32>
    %780 = arith.addf %776, %779 : vector<1x1x256xf32>
    %c160 = arith.constant 160 : index
    %781 = memref.load %arg3[%c160] : memref<288xf32, #tpu.memory_space<smem>>
    %782 = vector.broadcast %781 : f32 to vector<1x1x256xf32>
    %783 = arith.mulf %782, %734 : vector<1x1x256xf32>
    %784 = arith.addf %780, %783 : vector<1x1x256xf32>
    %c164 = arith.constant 164 : index
    %785 = memref.load %arg3[%c164] : memref<288xf32, #tpu.memory_space<smem>>
    %786 = vector.broadcast %785 : f32 to vector<1x1x256xf32>
    %787 = arith.mulf %786, %735 : vector<1x1x256xf32>
    %788 = arith.addf %784, %787 : vector<1x1x256xf32>
    %c168 = arith.constant 168 : index
    %789 = memref.load %arg3[%c168] : memref<288xf32, #tpu.memory_space<smem>>
    %790 = vector.broadcast %789 : f32 to vector<1x1x256xf32>
    %791 = arith.mulf %790, %736 : vector<1x1x256xf32>
    %792 = arith.addf %788, %791 : vector<1x1x256xf32>
    %c172 = arith.constant 172 : index
    %793 = memref.load %arg3[%c172] : memref<288xf32, #tpu.memory_space<smem>>
    %794 = vector.broadcast %793 : f32 to vector<1x1x256xf32>
    %795 = arith.mulf %794, %737 : vector<1x1x256xf32>
    %796 = arith.addf %792, %795 : vector<1x1x256xf32>
    %c176 = arith.constant 176 : index
    %797 = memref.load %arg3[%c176] : memref<288xf32, #tpu.memory_space<smem>>
    %798 = vector.broadcast %797 : f32 to vector<1x1x256xf32>
    %799 = arith.mulf %798, %738 : vector<1x1x256xf32>
    %800 = arith.addf %796, %799 : vector<1x1x256xf32>
    %c180 = arith.constant 180 : index
    %801 = memref.load %arg3[%c180] : memref<288xf32, #tpu.memory_space<smem>>
    %802 = vector.broadcast %801 : f32 to vector<1x1x256xf32>
    %803 = arith.mulf %802, %739 : vector<1x1x256xf32>
    %804 = arith.addf %800, %803 : vector<1x1x256xf32>
    %c184 = arith.constant 184 : index
    %805 = memref.load %arg3[%c184] : memref<288xf32, #tpu.memory_space<smem>>
    %806 = vector.broadcast %805 : f32 to vector<1x1x256xf32>
    %807 = arith.mulf %806, %740 : vector<1x1x256xf32>
    %808 = arith.addf %804, %807 : vector<1x1x256xf32>
    %c188 = arith.constant 188 : index
    %809 = memref.load %arg3[%c188] : memref<288xf32, #tpu.memory_space<smem>>
    %810 = vector.broadcast %809 : f32 to vector<1x1x256xf32>
    %811 = arith.mulf %810, %741 : vector<1x1x256xf32>
    %812 = arith.addf %808, %811 : vector<1x1x256xf32>
    %c192 = arith.constant 192 : index
    %813 = memref.load %arg3[%c192] : memref<288xf32, #tpu.memory_space<smem>>
    %814 = vector.broadcast %813 : f32 to vector<1x1x256xf32>
    %815 = arith.mulf %814, %742 : vector<1x1x256xf32>
    %816 = arith.addf %812, %815 : vector<1x1x256xf32>
    %c196 = arith.constant 196 : index
    %817 = memref.load %arg3[%c196] : memref<288xf32, #tpu.memory_space<smem>>
    %818 = vector.broadcast %817 : f32 to vector<1x1x256xf32>
    %819 = arith.mulf %818, %743 : vector<1x1x256xf32>
    %820 = arith.addf %816, %819 : vector<1x1x256xf32>
    %c200 = arith.constant 200 : index
    %821 = memref.load %arg3[%c200] : memref<288xf32, #tpu.memory_space<smem>>
    %822 = vector.broadcast %821 : f32 to vector<1x1x256xf32>
    %823 = arith.mulf %822, %744 : vector<1x1x256xf32>
    %824 = arith.addf %820, %823 : vector<1x1x256xf32>
    %c204 = arith.constant 204 : index
    %825 = memref.load %arg3[%c204] : memref<288xf32, #tpu.memory_space<smem>>
    %826 = vector.broadcast %825 : f32 to vector<1x1x256xf32>
    %827 = arith.mulf %826, %745 : vector<1x1x256xf32>
    %828 = arith.addf %824, %827 : vector<1x1x256xf32>
    %c208 = arith.constant 208 : index
    %829 = memref.load %arg3[%c208] : memref<288xf32, #tpu.memory_space<smem>>
    %830 = vector.broadcast %829 : f32 to vector<1x1x256xf32>
    %831 = arith.mulf %830, %746 : vector<1x1x256xf32>
    %832 = arith.addf %828, %831 : vector<1x1x256xf32>
    %c212 = arith.constant 212 : index
    %833 = memref.load %arg3[%c212] : memref<288xf32, #tpu.memory_space<smem>>
    %834 = vector.broadcast %833 : f32 to vector<1x1x256xf32>
    %835 = arith.mulf %834, %747 : vector<1x1x256xf32>
    %836 = arith.addf %832, %835 : vector<1x1x256xf32>
    %c216 = arith.constant 216 : index
    %837 = memref.load %arg3[%c216] : memref<288xf32, #tpu.memory_space<smem>>
    %838 = vector.broadcast %837 : f32 to vector<1x1x256xf32>
    %839 = arith.mulf %838, %748 : vector<1x1x256xf32>
    %840 = arith.addf %836, %839 : vector<1x1x256xf32>
    %c220 = arith.constant 220 : index
    %841 = memref.load %arg3[%c220] : memref<288xf32, #tpu.memory_space<smem>>
    %842 = vector.broadcast %841 : f32 to vector<1x1x256xf32>
    %843 = arith.mulf %842, %749 : vector<1x1x256xf32>
    %844 = arith.addf %840, %843 : vector<1x1x256xf32>
    %c224 = arith.constant 224 : index
    %845 = memref.load %arg3[%c224] : memref<288xf32, #tpu.memory_space<smem>>
    %846 = vector.broadcast %845 : f32 to vector<1x1x256xf32>
    %847 = arith.mulf %846, %750 : vector<1x1x256xf32>
    %848 = arith.addf %844, %847 : vector<1x1x256xf32>
    %c228 = arith.constant 228 : index
    %849 = memref.load %arg3[%c228] : memref<288xf32, #tpu.memory_space<smem>>
    %850 = vector.broadcast %849 : f32 to vector<1x1x256xf32>
    %851 = arith.mulf %850, %751 : vector<1x1x256xf32>
    %852 = arith.addf %848, %851 : vector<1x1x256xf32>
    %c232 = arith.constant 232 : index
    %853 = memref.load %arg3[%c232] : memref<288xf32, #tpu.memory_space<smem>>
    %854 = vector.broadcast %853 : f32 to vector<1x1x256xf32>
    %855 = arith.mulf %854, %752 : vector<1x1x256xf32>
    %856 = arith.addf %852, %855 : vector<1x1x256xf32>
    %c236 = arith.constant 236 : index
    %857 = memref.load %arg3[%c236] : memref<288xf32, #tpu.memory_space<smem>>
    %858 = vector.broadcast %857 : f32 to vector<1x1x256xf32>
    %859 = arith.mulf %858, %753 : vector<1x1x256xf32>
    %860 = arith.addf %856, %859 : vector<1x1x256xf32>
    %c240 = arith.constant 240 : index
    %861 = memref.load %arg3[%c240] : memref<288xf32, #tpu.memory_space<smem>>
    %862 = vector.broadcast %861 : f32 to vector<1x1x256xf32>
    %863 = arith.mulf %862, %754 : vector<1x1x256xf32>
    %864 = arith.addf %860, %863 : vector<1x1x256xf32>
    %c244 = arith.constant 244 : index
    %865 = memref.load %arg3[%c244] : memref<288xf32, #tpu.memory_space<smem>>
    %866 = vector.broadcast %865 : f32 to vector<1x1x256xf32>
    %867 = arith.mulf %866, %755 : vector<1x1x256xf32>
    %868 = arith.addf %864, %867 : vector<1x1x256xf32>
    %c248 = arith.constant 248 : index
    %869 = memref.load %arg3[%c248] : memref<288xf32, #tpu.memory_space<smem>>
    %870 = vector.broadcast %869 : f32 to vector<1x1x256xf32>
    %871 = arith.mulf %870, %756 : vector<1x1x256xf32>
    %872 = arith.addf %868, %871 : vector<1x1x256xf32>
    %c252 = arith.constant 252 : index
    %873 = memref.load %arg3[%c252] : memref<288xf32, #tpu.memory_space<smem>>
    %874 = vector.broadcast %873 : f32 to vector<1x1x256xf32>
    %875 = arith.mulf %874, %757 : vector<1x1x256xf32>
    %876 = arith.addf %872, %875 : vector<1x1x256xf32>
    %c256 = arith.constant 256 : index
    %877 = memref.load %arg3[%c256] : memref<288xf32, #tpu.memory_space<smem>>
    %878 = vector.broadcast %877 : f32 to vector<1x1x256xf32>
    %879 = arith.mulf %878, %758 : vector<1x1x256xf32>
    %880 = arith.addf %876, %879 : vector<1x1x256xf32>
    %c260 = arith.constant 260 : index
    %881 = memref.load %arg3[%c260] : memref<288xf32, #tpu.memory_space<smem>>
    %882 = vector.broadcast %881 : f32 to vector<1x1x256xf32>
    %883 = arith.mulf %882, %759 : vector<1x1x256xf32>
    %884 = arith.addf %880, %883 : vector<1x1x256xf32>
    %c264 = arith.constant 264 : index
    %885 = memref.load %arg3[%c264] : memref<288xf32, #tpu.memory_space<smem>>
    %886 = vector.broadcast %885 : f32 to vector<1x1x256xf32>
    %887 = arith.mulf %886, %760 : vector<1x1x256xf32>
    %888 = arith.addf %884, %887 : vector<1x1x256xf32>
    %c268 = arith.constant 268 : index
    %889 = memref.load %arg3[%c268] : memref<288xf32, #tpu.memory_space<smem>>
    %890 = vector.broadcast %889 : f32 to vector<1x1x256xf32>
    %891 = arith.mulf %890, %761 : vector<1x1x256xf32>
    %892 = arith.addf %888, %891 : vector<1x1x256xf32>
    %c272 = arith.constant 272 : index
    %893 = memref.load %arg3[%c272] : memref<288xf32, #tpu.memory_space<smem>>
    %894 = vector.broadcast %893 : f32 to vector<1x1x256xf32>
    %895 = arith.mulf %894, %762 : vector<1x1x256xf32>
    %896 = arith.addf %892, %895 : vector<1x1x256xf32>
    %c276 = arith.constant 276 : index
    %897 = memref.load %arg3[%c276] : memref<288xf32, #tpu.memory_space<smem>>
    %898 = vector.broadcast %897 : f32 to vector<1x1x256xf32>
    %899 = arith.mulf %898, %763 : vector<1x1x256xf32>
    %900 = arith.addf %896, %899 : vector<1x1x256xf32>
    %c280 = arith.constant 280 : index
    %901 = memref.load %arg3[%c280] : memref<288xf32, #tpu.memory_space<smem>>
    %902 = vector.broadcast %901 : f32 to vector<1x1x256xf32>
    %903 = arith.mulf %902, %764 : vector<1x1x256xf32>
    %904 = arith.addf %900, %903 : vector<1x1x256xf32>
    %c284 = arith.constant 284 : index
    %905 = memref.load %arg3[%c284] : memref<288xf32, #tpu.memory_space<smem>>
    %906 = vector.broadcast %905 : f32 to vector<1x1x256xf32>
    %907 = arith.mulf %906, %765 : vector<1x1x256xf32>
    %908 = arith.addf %904, %907 : vector<1x1x256xf32>
    %c4_66 = arith.constant 4 : index
    %909 = memref.load %arg4[%c4_66] : memref<8xf32, #tpu.memory_space<smem>>
    %910 = vector.broadcast %909 : f32 to vector<1x1x256xf32>
    %911 = arith.addf %908, %910 : vector<1x1x256xf32>
    %cst_67 = arith.constant 0.000000e+00 : f32
    %912 = vector.broadcast %cst_67 : f32 to vector<1x1x256xf32>
    %913 = arith.maximumf %911, %912 : vector<1x1x256xf32>
    %914 = arith.addf %746, %913 : vector<1x1x256xf32>
    %c145 = arith.constant 145 : index
    %915 = memref.load %arg3[%c145] : memref<288xf32, #tpu.memory_space<smem>>
    %916 = vector.broadcast %915 : f32 to vector<1x1x256xf32>
    %917 = arith.mulf %916, %730 : vector<1x1x256xf32>
    %c149 = arith.constant 149 : index
    %918 = memref.load %arg3[%c149] : memref<288xf32, #tpu.memory_space<smem>>
    %919 = vector.broadcast %918 : f32 to vector<1x1x256xf32>
    %920 = arith.mulf %919, %731 : vector<1x1x256xf32>
    %921 = arith.addf %917, %920 : vector<1x1x256xf32>
    %c153 = arith.constant 153 : index
    %922 = memref.load %arg3[%c153] : memref<288xf32, #tpu.memory_space<smem>>
    %923 = vector.broadcast %922 : f32 to vector<1x1x256xf32>
    %924 = arith.mulf %923, %732 : vector<1x1x256xf32>
    %925 = arith.addf %921, %924 : vector<1x1x256xf32>
    %c157 = arith.constant 157 : index
    %926 = memref.load %arg3[%c157] : memref<288xf32, #tpu.memory_space<smem>>
    %927 = vector.broadcast %926 : f32 to vector<1x1x256xf32>
    %928 = arith.mulf %927, %733 : vector<1x1x256xf32>
    %929 = arith.addf %925, %928 : vector<1x1x256xf32>
    %c161 = arith.constant 161 : index
    %930 = memref.load %arg3[%c161] : memref<288xf32, #tpu.memory_space<smem>>
    %931 = vector.broadcast %930 : f32 to vector<1x1x256xf32>
    %932 = arith.mulf %931, %734 : vector<1x1x256xf32>
    %933 = arith.addf %929, %932 : vector<1x1x256xf32>
    %c165 = arith.constant 165 : index
    %934 = memref.load %arg3[%c165] : memref<288xf32, #tpu.memory_space<smem>>
    %935 = vector.broadcast %934 : f32 to vector<1x1x256xf32>
    %936 = arith.mulf %935, %735 : vector<1x1x256xf32>
    %937 = arith.addf %933, %936 : vector<1x1x256xf32>
    %c169 = arith.constant 169 : index
    %938 = memref.load %arg3[%c169] : memref<288xf32, #tpu.memory_space<smem>>
    %939 = vector.broadcast %938 : f32 to vector<1x1x256xf32>
    %940 = arith.mulf %939, %736 : vector<1x1x256xf32>
    %941 = arith.addf %937, %940 : vector<1x1x256xf32>
    %c173 = arith.constant 173 : index
    %942 = memref.load %arg3[%c173] : memref<288xf32, #tpu.memory_space<smem>>
    %943 = vector.broadcast %942 : f32 to vector<1x1x256xf32>
    %944 = arith.mulf %943, %737 : vector<1x1x256xf32>
    %945 = arith.addf %941, %944 : vector<1x1x256xf32>
    %c177 = arith.constant 177 : index
    %946 = memref.load %arg3[%c177] : memref<288xf32, #tpu.memory_space<smem>>
    %947 = vector.broadcast %946 : f32 to vector<1x1x256xf32>
    %948 = arith.mulf %947, %738 : vector<1x1x256xf32>
    %949 = arith.addf %945, %948 : vector<1x1x256xf32>
    %c181 = arith.constant 181 : index
    %950 = memref.load %arg3[%c181] : memref<288xf32, #tpu.memory_space<smem>>
    %951 = vector.broadcast %950 : f32 to vector<1x1x256xf32>
    %952 = arith.mulf %951, %739 : vector<1x1x256xf32>
    %953 = arith.addf %949, %952 : vector<1x1x256xf32>
    %c185 = arith.constant 185 : index
    %954 = memref.load %arg3[%c185] : memref<288xf32, #tpu.memory_space<smem>>
    %955 = vector.broadcast %954 : f32 to vector<1x1x256xf32>
    %956 = arith.mulf %955, %740 : vector<1x1x256xf32>
    %957 = arith.addf %953, %956 : vector<1x1x256xf32>
    %c189 = arith.constant 189 : index
    %958 = memref.load %arg3[%c189] : memref<288xf32, #tpu.memory_space<smem>>
    %959 = vector.broadcast %958 : f32 to vector<1x1x256xf32>
    %960 = arith.mulf %959, %741 : vector<1x1x256xf32>
    %961 = arith.addf %957, %960 : vector<1x1x256xf32>
    %c193 = arith.constant 193 : index
    %962 = memref.load %arg3[%c193] : memref<288xf32, #tpu.memory_space<smem>>
    %963 = vector.broadcast %962 : f32 to vector<1x1x256xf32>
    %964 = arith.mulf %963, %742 : vector<1x1x256xf32>
    %965 = arith.addf %961, %964 : vector<1x1x256xf32>
    %c197 = arith.constant 197 : index
    %966 = memref.load %arg3[%c197] : memref<288xf32, #tpu.memory_space<smem>>
    %967 = vector.broadcast %966 : f32 to vector<1x1x256xf32>
    %968 = arith.mulf %967, %743 : vector<1x1x256xf32>
    %969 = arith.addf %965, %968 : vector<1x1x256xf32>
    %c201 = arith.constant 201 : index
    %970 = memref.load %arg3[%c201] : memref<288xf32, #tpu.memory_space<smem>>
    %971 = vector.broadcast %970 : f32 to vector<1x1x256xf32>
    %972 = arith.mulf %971, %744 : vector<1x1x256xf32>
    %973 = arith.addf %969, %972 : vector<1x1x256xf32>
    %c205 = arith.constant 205 : index
    %974 = memref.load %arg3[%c205] : memref<288xf32, #tpu.memory_space<smem>>
    %975 = vector.broadcast %974 : f32 to vector<1x1x256xf32>
    %976 = arith.mulf %975, %745 : vector<1x1x256xf32>
    %977 = arith.addf %973, %976 : vector<1x1x256xf32>
    %c209 = arith.constant 209 : index
    %978 = memref.load %arg3[%c209] : memref<288xf32, #tpu.memory_space<smem>>
    %979 = vector.broadcast %978 : f32 to vector<1x1x256xf32>
    %980 = arith.mulf %979, %746 : vector<1x1x256xf32>
    %981 = arith.addf %977, %980 : vector<1x1x256xf32>
    %c213 = arith.constant 213 : index
    %982 = memref.load %arg3[%c213] : memref<288xf32, #tpu.memory_space<smem>>
    %983 = vector.broadcast %982 : f32 to vector<1x1x256xf32>
    %984 = arith.mulf %983, %747 : vector<1x1x256xf32>
    %985 = arith.addf %981, %984 : vector<1x1x256xf32>
    %c217 = arith.constant 217 : index
    %986 = memref.load %arg3[%c217] : memref<288xf32, #tpu.memory_space<smem>>
    %987 = vector.broadcast %986 : f32 to vector<1x1x256xf32>
    %988 = arith.mulf %987, %748 : vector<1x1x256xf32>
    %989 = arith.addf %985, %988 : vector<1x1x256xf32>
    %c221 = arith.constant 221 : index
    %990 = memref.load %arg3[%c221] : memref<288xf32, #tpu.memory_space<smem>>
    %991 = vector.broadcast %990 : f32 to vector<1x1x256xf32>
    %992 = arith.mulf %991, %749 : vector<1x1x256xf32>
    %993 = arith.addf %989, %992 : vector<1x1x256xf32>
    %c225 = arith.constant 225 : index
    %994 = memref.load %arg3[%c225] : memref<288xf32, #tpu.memory_space<smem>>
    %995 = vector.broadcast %994 : f32 to vector<1x1x256xf32>
    %996 = arith.mulf %995, %750 : vector<1x1x256xf32>
    %997 = arith.addf %993, %996 : vector<1x1x256xf32>
    %c229 = arith.constant 229 : index
    %998 = memref.load %arg3[%c229] : memref<288xf32, #tpu.memory_space<smem>>
    %999 = vector.broadcast %998 : f32 to vector<1x1x256xf32>
    %1000 = arith.mulf %999, %751 : vector<1x1x256xf32>
    %1001 = arith.addf %997, %1000 : vector<1x1x256xf32>
    %c233 = arith.constant 233 : index
    %1002 = memref.load %arg3[%c233] : memref<288xf32, #tpu.memory_space<smem>>
    %1003 = vector.broadcast %1002 : f32 to vector<1x1x256xf32>
    %1004 = arith.mulf %1003, %752 : vector<1x1x256xf32>
    %1005 = arith.addf %1001, %1004 : vector<1x1x256xf32>
    %c237 = arith.constant 237 : index
    %1006 = memref.load %arg3[%c237] : memref<288xf32, #tpu.memory_space<smem>>
    %1007 = vector.broadcast %1006 : f32 to vector<1x1x256xf32>
    %1008 = arith.mulf %1007, %753 : vector<1x1x256xf32>
    %1009 = arith.addf %1005, %1008 : vector<1x1x256xf32>
    %c241 = arith.constant 241 : index
    %1010 = memref.load %arg3[%c241] : memref<288xf32, #tpu.memory_space<smem>>
    %1011 = vector.broadcast %1010 : f32 to vector<1x1x256xf32>
    %1012 = arith.mulf %1011, %754 : vector<1x1x256xf32>
    %1013 = arith.addf %1009, %1012 : vector<1x1x256xf32>
    %c245 = arith.constant 245 : index
    %1014 = memref.load %arg3[%c245] : memref<288xf32, #tpu.memory_space<smem>>
    %1015 = vector.broadcast %1014 : f32 to vector<1x1x256xf32>
    %1016 = arith.mulf %1015, %755 : vector<1x1x256xf32>
    %1017 = arith.addf %1013, %1016 : vector<1x1x256xf32>
    %c249 = arith.constant 249 : index
    %1018 = memref.load %arg3[%c249] : memref<288xf32, #tpu.memory_space<smem>>
    %1019 = vector.broadcast %1018 : f32 to vector<1x1x256xf32>
    %1020 = arith.mulf %1019, %756 : vector<1x1x256xf32>
    %1021 = arith.addf %1017, %1020 : vector<1x1x256xf32>
    %c253 = arith.constant 253 : index
    %1022 = memref.load %arg3[%c253] : memref<288xf32, #tpu.memory_space<smem>>
    %1023 = vector.broadcast %1022 : f32 to vector<1x1x256xf32>
    %1024 = arith.mulf %1023, %757 : vector<1x1x256xf32>
    %1025 = arith.addf %1021, %1024 : vector<1x1x256xf32>
    %c257 = arith.constant 257 : index
    %1026 = memref.load %arg3[%c257] : memref<288xf32, #tpu.memory_space<smem>>
    %1027 = vector.broadcast %1026 : f32 to vector<1x1x256xf32>
    %1028 = arith.mulf %1027, %758 : vector<1x1x256xf32>
    %1029 = arith.addf %1025, %1028 : vector<1x1x256xf32>
    %c261 = arith.constant 261 : index
    %1030 = memref.load %arg3[%c261] : memref<288xf32, #tpu.memory_space<smem>>
    %1031 = vector.broadcast %1030 : f32 to vector<1x1x256xf32>
    %1032 = arith.mulf %1031, %759 : vector<1x1x256xf32>
    %1033 = arith.addf %1029, %1032 : vector<1x1x256xf32>
    %c265 = arith.constant 265 : index
    %1034 = memref.load %arg3[%c265] : memref<288xf32, #tpu.memory_space<smem>>
    %1035 = vector.broadcast %1034 : f32 to vector<1x1x256xf32>
    %1036 = arith.mulf %1035, %760 : vector<1x1x256xf32>
    %1037 = arith.addf %1033, %1036 : vector<1x1x256xf32>
    %c269 = arith.constant 269 : index
    %1038 = memref.load %arg3[%c269] : memref<288xf32, #tpu.memory_space<smem>>
    %1039 = vector.broadcast %1038 : f32 to vector<1x1x256xf32>
    %1040 = arith.mulf %1039, %761 : vector<1x1x256xf32>
    %1041 = arith.addf %1037, %1040 : vector<1x1x256xf32>
    %c273 = arith.constant 273 : index
    %1042 = memref.load %arg3[%c273] : memref<288xf32, #tpu.memory_space<smem>>
    %1043 = vector.broadcast %1042 : f32 to vector<1x1x256xf32>
    %1044 = arith.mulf %1043, %762 : vector<1x1x256xf32>
    %1045 = arith.addf %1041, %1044 : vector<1x1x256xf32>
    %c277 = arith.constant 277 : index
    %1046 = memref.load %arg3[%c277] : memref<288xf32, #tpu.memory_space<smem>>
    %1047 = vector.broadcast %1046 : f32 to vector<1x1x256xf32>
    %1048 = arith.mulf %1047, %763 : vector<1x1x256xf32>
    %1049 = arith.addf %1045, %1048 : vector<1x1x256xf32>
    %c281 = arith.constant 281 : index
    %1050 = memref.load %arg3[%c281] : memref<288xf32, #tpu.memory_space<smem>>
    %1051 = vector.broadcast %1050 : f32 to vector<1x1x256xf32>
    %1052 = arith.mulf %1051, %764 : vector<1x1x256xf32>
    %1053 = arith.addf %1049, %1052 : vector<1x1x256xf32>
    %c285 = arith.constant 285 : index
    %1054 = memref.load %arg3[%c285] : memref<288xf32, #tpu.memory_space<smem>>
    %1055 = vector.broadcast %1054 : f32 to vector<1x1x256xf32>
    %1056 = arith.mulf %1055, %765 : vector<1x1x256xf32>
    %1057 = arith.addf %1053, %1056 : vector<1x1x256xf32>
    %c5_68 = arith.constant 5 : index
    %1058 = memref.load %arg4[%c5_68] : memref<8xf32, #tpu.memory_space<smem>>
    %1059 = vector.broadcast %1058 : f32 to vector<1x1x256xf32>
    %1060 = arith.addf %1057, %1059 : vector<1x1x256xf32>
    %cst_69 = arith.constant 0.000000e+00 : f32
    %1061 = vector.broadcast %cst_69 : f32 to vector<1x1x256xf32>
    %1062 = arith.maximumf %1060, %1061 : vector<1x1x256xf32>
    %1063 = arith.addf %747, %1062 : vector<1x1x256xf32>
    %c146 = arith.constant 146 : index
    %1064 = memref.load %arg3[%c146] : memref<288xf32, #tpu.memory_space<smem>>
    %1065 = vector.broadcast %1064 : f32 to vector<1x1x256xf32>
    %1066 = arith.mulf %1065, %730 : vector<1x1x256xf32>
    %c150 = arith.constant 150 : index
    %1067 = memref.load %arg3[%c150] : memref<288xf32, #tpu.memory_space<smem>>
    %1068 = vector.broadcast %1067 : f32 to vector<1x1x256xf32>
    %1069 = arith.mulf %1068, %731 : vector<1x1x256xf32>
    %1070 = arith.addf %1066, %1069 : vector<1x1x256xf32>
    %c154 = arith.constant 154 : index
    %1071 = memref.load %arg3[%c154] : memref<288xf32, #tpu.memory_space<smem>>
    %1072 = vector.broadcast %1071 : f32 to vector<1x1x256xf32>
    %1073 = arith.mulf %1072, %732 : vector<1x1x256xf32>
    %1074 = arith.addf %1070, %1073 : vector<1x1x256xf32>
    %c158 = arith.constant 158 : index
    %1075 = memref.load %arg3[%c158] : memref<288xf32, #tpu.memory_space<smem>>
    %1076 = vector.broadcast %1075 : f32 to vector<1x1x256xf32>
    %1077 = arith.mulf %1076, %733 : vector<1x1x256xf32>
    %1078 = arith.addf %1074, %1077 : vector<1x1x256xf32>
    %c162 = arith.constant 162 : index
    %1079 = memref.load %arg3[%c162] : memref<288xf32, #tpu.memory_space<smem>>
    %1080 = vector.broadcast %1079 : f32 to vector<1x1x256xf32>
    %1081 = arith.mulf %1080, %734 : vector<1x1x256xf32>
    %1082 = arith.addf %1078, %1081 : vector<1x1x256xf32>
    %c166 = arith.constant 166 : index
    %1083 = memref.load %arg3[%c166] : memref<288xf32, #tpu.memory_space<smem>>
    %1084 = vector.broadcast %1083 : f32 to vector<1x1x256xf32>
    %1085 = arith.mulf %1084, %735 : vector<1x1x256xf32>
    %1086 = arith.addf %1082, %1085 : vector<1x1x256xf32>
    %c170 = arith.constant 170 : index
    %1087 = memref.load %arg3[%c170] : memref<288xf32, #tpu.memory_space<smem>>
    %1088 = vector.broadcast %1087 : f32 to vector<1x1x256xf32>
    %1089 = arith.mulf %1088, %736 : vector<1x1x256xf32>
    %1090 = arith.addf %1086, %1089 : vector<1x1x256xf32>
    %c174 = arith.constant 174 : index
    %1091 = memref.load %arg3[%c174] : memref<288xf32, #tpu.memory_space<smem>>
    %1092 = vector.broadcast %1091 : f32 to vector<1x1x256xf32>
    %1093 = arith.mulf %1092, %737 : vector<1x1x256xf32>
    %1094 = arith.addf %1090, %1093 : vector<1x1x256xf32>
    %c178 = arith.constant 178 : index
    %1095 = memref.load %arg3[%c178] : memref<288xf32, #tpu.memory_space<smem>>
    %1096 = vector.broadcast %1095 : f32 to vector<1x1x256xf32>
    %1097 = arith.mulf %1096, %738 : vector<1x1x256xf32>
    %1098 = arith.addf %1094, %1097 : vector<1x1x256xf32>
    %c182 = arith.constant 182 : index
    %1099 = memref.load %arg3[%c182] : memref<288xf32, #tpu.memory_space<smem>>
    %1100 = vector.broadcast %1099 : f32 to vector<1x1x256xf32>
    %1101 = arith.mulf %1100, %739 : vector<1x1x256xf32>
    %1102 = arith.addf %1098, %1101 : vector<1x1x256xf32>
    %c186 = arith.constant 186 : index
    %1103 = memref.load %arg3[%c186] : memref<288xf32, #tpu.memory_space<smem>>
    %1104 = vector.broadcast %1103 : f32 to vector<1x1x256xf32>
    %1105 = arith.mulf %1104, %740 : vector<1x1x256xf32>
    %1106 = arith.addf %1102, %1105 : vector<1x1x256xf32>
    %c190 = arith.constant 190 : index
    %1107 = memref.load %arg3[%c190] : memref<288xf32, #tpu.memory_space<smem>>
    %1108 = vector.broadcast %1107 : f32 to vector<1x1x256xf32>
    %1109 = arith.mulf %1108, %741 : vector<1x1x256xf32>
    %1110 = arith.addf %1106, %1109 : vector<1x1x256xf32>
    %c194 = arith.constant 194 : index
    %1111 = memref.load %arg3[%c194] : memref<288xf32, #tpu.memory_space<smem>>
    %1112 = vector.broadcast %1111 : f32 to vector<1x1x256xf32>
    %1113 = arith.mulf %1112, %742 : vector<1x1x256xf32>
    %1114 = arith.addf %1110, %1113 : vector<1x1x256xf32>
    %c198 = arith.constant 198 : index
    %1115 = memref.load %arg3[%c198] : memref<288xf32, #tpu.memory_space<smem>>
    %1116 = vector.broadcast %1115 : f32 to vector<1x1x256xf32>
    %1117 = arith.mulf %1116, %743 : vector<1x1x256xf32>
    %1118 = arith.addf %1114, %1117 : vector<1x1x256xf32>
    %c202 = arith.constant 202 : index
    %1119 = memref.load %arg3[%c202] : memref<288xf32, #tpu.memory_space<smem>>
    %1120 = vector.broadcast %1119 : f32 to vector<1x1x256xf32>
    %1121 = arith.mulf %1120, %744 : vector<1x1x256xf32>
    %1122 = arith.addf %1118, %1121 : vector<1x1x256xf32>
    %c206 = arith.constant 206 : index
    %1123 = memref.load %arg3[%c206] : memref<288xf32, #tpu.memory_space<smem>>
    %1124 = vector.broadcast %1123 : f32 to vector<1x1x256xf32>
    %1125 = arith.mulf %1124, %745 : vector<1x1x256xf32>
    %1126 = arith.addf %1122, %1125 : vector<1x1x256xf32>
    %c210 = arith.constant 210 : index
    %1127 = memref.load %arg3[%c210] : memref<288xf32, #tpu.memory_space<smem>>
    %1128 = vector.broadcast %1127 : f32 to vector<1x1x256xf32>
    %1129 = arith.mulf %1128, %746 : vector<1x1x256xf32>
    %1130 = arith.addf %1126, %1129 : vector<1x1x256xf32>
    %c214 = arith.constant 214 : index
    %1131 = memref.load %arg3[%c214] : memref<288xf32, #tpu.memory_space<smem>>
    %1132 = vector.broadcast %1131 : f32 to vector<1x1x256xf32>
    %1133 = arith.mulf %1132, %747 : vector<1x1x256xf32>
    %1134 = arith.addf %1130, %1133 : vector<1x1x256xf32>
    %c218 = arith.constant 218 : index
    %1135 = memref.load %arg3[%c218] : memref<288xf32, #tpu.memory_space<smem>>
    %1136 = vector.broadcast %1135 : f32 to vector<1x1x256xf32>
    %1137 = arith.mulf %1136, %748 : vector<1x1x256xf32>
    %1138 = arith.addf %1134, %1137 : vector<1x1x256xf32>
    %c222 = arith.constant 222 : index
    %1139 = memref.load %arg3[%c222] : memref<288xf32, #tpu.memory_space<smem>>
    %1140 = vector.broadcast %1139 : f32 to vector<1x1x256xf32>
    %1141 = arith.mulf %1140, %749 : vector<1x1x256xf32>
    %1142 = arith.addf %1138, %1141 : vector<1x1x256xf32>
    %c226 = arith.constant 226 : index
    %1143 = memref.load %arg3[%c226] : memref<288xf32, #tpu.memory_space<smem>>
    %1144 = vector.broadcast %1143 : f32 to vector<1x1x256xf32>
    %1145 = arith.mulf %1144, %750 : vector<1x1x256xf32>
    %1146 = arith.addf %1142, %1145 : vector<1x1x256xf32>
    %c230 = arith.constant 230 : index
    %1147 = memref.load %arg3[%c230] : memref<288xf32, #tpu.memory_space<smem>>
    %1148 = vector.broadcast %1147 : f32 to vector<1x1x256xf32>
    %1149 = arith.mulf %1148, %751 : vector<1x1x256xf32>
    %1150 = arith.addf %1146, %1149 : vector<1x1x256xf32>
    %c234 = arith.constant 234 : index
    %1151 = memref.load %arg3[%c234] : memref<288xf32, #tpu.memory_space<smem>>
    %1152 = vector.broadcast %1151 : f32 to vector<1x1x256xf32>
    %1153 = arith.mulf %1152, %752 : vector<1x1x256xf32>
    %1154 = arith.addf %1150, %1153 : vector<1x1x256xf32>
    %c238 = arith.constant 238 : index
    %1155 = memref.load %arg3[%c238] : memref<288xf32, #tpu.memory_space<smem>>
    %1156 = vector.broadcast %1155 : f32 to vector<1x1x256xf32>
    %1157 = arith.mulf %1156, %753 : vector<1x1x256xf32>
    %1158 = arith.addf %1154, %1157 : vector<1x1x256xf32>
    %c242 = arith.constant 242 : index
    %1159 = memref.load %arg3[%c242] : memref<288xf32, #tpu.memory_space<smem>>
    %1160 = vector.broadcast %1159 : f32 to vector<1x1x256xf32>
    %1161 = arith.mulf %1160, %754 : vector<1x1x256xf32>
    %1162 = arith.addf %1158, %1161 : vector<1x1x256xf32>
    %c246 = arith.constant 246 : index
    %1163 = memref.load %arg3[%c246] : memref<288xf32, #tpu.memory_space<smem>>
    %1164 = vector.broadcast %1163 : f32 to vector<1x1x256xf32>
    %1165 = arith.mulf %1164, %755 : vector<1x1x256xf32>
    %1166 = arith.addf %1162, %1165 : vector<1x1x256xf32>
    %c250 = arith.constant 250 : index
    %1167 = memref.load %arg3[%c250] : memref<288xf32, #tpu.memory_space<smem>>
    %1168 = vector.broadcast %1167 : f32 to vector<1x1x256xf32>
    %1169 = arith.mulf %1168, %756 : vector<1x1x256xf32>
    %1170 = arith.addf %1166, %1169 : vector<1x1x256xf32>
    %c254 = arith.constant 254 : index
    %1171 = memref.load %arg3[%c254] : memref<288xf32, #tpu.memory_space<smem>>
    %1172 = vector.broadcast %1171 : f32 to vector<1x1x256xf32>
    %1173 = arith.mulf %1172, %757 : vector<1x1x256xf32>
    %1174 = arith.addf %1170, %1173 : vector<1x1x256xf32>
    %c258 = arith.constant 258 : index
    %1175 = memref.load %arg3[%c258] : memref<288xf32, #tpu.memory_space<smem>>
    %1176 = vector.broadcast %1175 : f32 to vector<1x1x256xf32>
    %1177 = arith.mulf %1176, %758 : vector<1x1x256xf32>
    %1178 = arith.addf %1174, %1177 : vector<1x1x256xf32>
    %c262 = arith.constant 262 : index
    %1179 = memref.load %arg3[%c262] : memref<288xf32, #tpu.memory_space<smem>>
    %1180 = vector.broadcast %1179 : f32 to vector<1x1x256xf32>
    %1181 = arith.mulf %1180, %759 : vector<1x1x256xf32>
    %1182 = arith.addf %1178, %1181 : vector<1x1x256xf32>
    %c266 = arith.constant 266 : index
    %1183 = memref.load %arg3[%c266] : memref<288xf32, #tpu.memory_space<smem>>
    %1184 = vector.broadcast %1183 : f32 to vector<1x1x256xf32>
    %1185 = arith.mulf %1184, %760 : vector<1x1x256xf32>
    %1186 = arith.addf %1182, %1185 : vector<1x1x256xf32>
    %c270 = arith.constant 270 : index
    %1187 = memref.load %arg3[%c270] : memref<288xf32, #tpu.memory_space<smem>>
    %1188 = vector.broadcast %1187 : f32 to vector<1x1x256xf32>
    %1189 = arith.mulf %1188, %761 : vector<1x1x256xf32>
    %1190 = arith.addf %1186, %1189 : vector<1x1x256xf32>
    %c274 = arith.constant 274 : index
    %1191 = memref.load %arg3[%c274] : memref<288xf32, #tpu.memory_space<smem>>
    %1192 = vector.broadcast %1191 : f32 to vector<1x1x256xf32>
    %1193 = arith.mulf %1192, %762 : vector<1x1x256xf32>
    %1194 = arith.addf %1190, %1193 : vector<1x1x256xf32>
    %c278 = arith.constant 278 : index
    %1195 = memref.load %arg3[%c278] : memref<288xf32, #tpu.memory_space<smem>>
    %1196 = vector.broadcast %1195 : f32 to vector<1x1x256xf32>
    %1197 = arith.mulf %1196, %763 : vector<1x1x256xf32>
    %1198 = arith.addf %1194, %1197 : vector<1x1x256xf32>
    %c282 = arith.constant 282 : index
    %1199 = memref.load %arg3[%c282] : memref<288xf32, #tpu.memory_space<smem>>
    %1200 = vector.broadcast %1199 : f32 to vector<1x1x256xf32>
    %1201 = arith.mulf %1200, %764 : vector<1x1x256xf32>
    %1202 = arith.addf %1198, %1201 : vector<1x1x256xf32>
    %c286 = arith.constant 286 : index
    %1203 = memref.load %arg3[%c286] : memref<288xf32, #tpu.memory_space<smem>>
    %1204 = vector.broadcast %1203 : f32 to vector<1x1x256xf32>
    %1205 = arith.mulf %1204, %765 : vector<1x1x256xf32>
    %1206 = arith.addf %1202, %1205 : vector<1x1x256xf32>
    %c6_70 = arith.constant 6 : index
    %1207 = memref.load %arg4[%c6_70] : memref<8xf32, #tpu.memory_space<smem>>
    %1208 = vector.broadcast %1207 : f32 to vector<1x1x256xf32>
    %1209 = arith.addf %1206, %1208 : vector<1x1x256xf32>
    %cst_71 = arith.constant 0.000000e+00 : f32
    %1210 = vector.broadcast %cst_71 : f32 to vector<1x1x256xf32>
    %1211 = arith.maximumf %1209, %1210 : vector<1x1x256xf32>
    %1212 = arith.addf %748, %1211 : vector<1x1x256xf32>
    %c147 = arith.constant 147 : index
    %1213 = memref.load %arg3[%c147] : memref<288xf32, #tpu.memory_space<smem>>
    %1214 = vector.broadcast %1213 : f32 to vector<1x1x256xf32>
    %1215 = arith.mulf %1214, %730 : vector<1x1x256xf32>
    %c151 = arith.constant 151 : index
    %1216 = memref.load %arg3[%c151] : memref<288xf32, #tpu.memory_space<smem>>
    %1217 = vector.broadcast %1216 : f32 to vector<1x1x256xf32>
    %1218 = arith.mulf %1217, %731 : vector<1x1x256xf32>
    %1219 = arith.addf %1215, %1218 : vector<1x1x256xf32>
    %c155 = arith.constant 155 : index
    %1220 = memref.load %arg3[%c155] : memref<288xf32, #tpu.memory_space<smem>>
    %1221 = vector.broadcast %1220 : f32 to vector<1x1x256xf32>
    %1222 = arith.mulf %1221, %732 : vector<1x1x256xf32>
    %1223 = arith.addf %1219, %1222 : vector<1x1x256xf32>
    %c159 = arith.constant 159 : index
    %1224 = memref.load %arg3[%c159] : memref<288xf32, #tpu.memory_space<smem>>
    %1225 = vector.broadcast %1224 : f32 to vector<1x1x256xf32>
    %1226 = arith.mulf %1225, %733 : vector<1x1x256xf32>
    %1227 = arith.addf %1223, %1226 : vector<1x1x256xf32>
    %c163 = arith.constant 163 : index
    %1228 = memref.load %arg3[%c163] : memref<288xf32, #tpu.memory_space<smem>>
    %1229 = vector.broadcast %1228 : f32 to vector<1x1x256xf32>
    %1230 = arith.mulf %1229, %734 : vector<1x1x256xf32>
    %1231 = arith.addf %1227, %1230 : vector<1x1x256xf32>
    %c167 = arith.constant 167 : index
    %1232 = memref.load %arg3[%c167] : memref<288xf32, #tpu.memory_space<smem>>
    %1233 = vector.broadcast %1232 : f32 to vector<1x1x256xf32>
    %1234 = arith.mulf %1233, %735 : vector<1x1x256xf32>
    %1235 = arith.addf %1231, %1234 : vector<1x1x256xf32>
    %c171 = arith.constant 171 : index
    %1236 = memref.load %arg3[%c171] : memref<288xf32, #tpu.memory_space<smem>>
    %1237 = vector.broadcast %1236 : f32 to vector<1x1x256xf32>
    %1238 = arith.mulf %1237, %736 : vector<1x1x256xf32>
    %1239 = arith.addf %1235, %1238 : vector<1x1x256xf32>
    %c175 = arith.constant 175 : index
    %1240 = memref.load %arg3[%c175] : memref<288xf32, #tpu.memory_space<smem>>
    %1241 = vector.broadcast %1240 : f32 to vector<1x1x256xf32>
    %1242 = arith.mulf %1241, %737 : vector<1x1x256xf32>
    %1243 = arith.addf %1239, %1242 : vector<1x1x256xf32>
    %c179 = arith.constant 179 : index
    %1244 = memref.load %arg3[%c179] : memref<288xf32, #tpu.memory_space<smem>>
    %1245 = vector.broadcast %1244 : f32 to vector<1x1x256xf32>
    %1246 = arith.mulf %1245, %738 : vector<1x1x256xf32>
    %1247 = arith.addf %1243, %1246 : vector<1x1x256xf32>
    %c183 = arith.constant 183 : index
    %1248 = memref.load %arg3[%c183] : memref<288xf32, #tpu.memory_space<smem>>
    %1249 = vector.broadcast %1248 : f32 to vector<1x1x256xf32>
    %1250 = arith.mulf %1249, %739 : vector<1x1x256xf32>
    %1251 = arith.addf %1247, %1250 : vector<1x1x256xf32>
    %c187 = arith.constant 187 : index
    %1252 = memref.load %arg3[%c187] : memref<288xf32, #tpu.memory_space<smem>>
    %1253 = vector.broadcast %1252 : f32 to vector<1x1x256xf32>
    %1254 = arith.mulf %1253, %740 : vector<1x1x256xf32>
    %1255 = arith.addf %1251, %1254 : vector<1x1x256xf32>
    %c191 = arith.constant 191 : index
    %1256 = memref.load %arg3[%c191] : memref<288xf32, #tpu.memory_space<smem>>
    %1257 = vector.broadcast %1256 : f32 to vector<1x1x256xf32>
    %1258 = arith.mulf %1257, %741 : vector<1x1x256xf32>
    %1259 = arith.addf %1255, %1258 : vector<1x1x256xf32>
    %c195 = arith.constant 195 : index
    %1260 = memref.load %arg3[%c195] : memref<288xf32, #tpu.memory_space<smem>>
    %1261 = vector.broadcast %1260 : f32 to vector<1x1x256xf32>
    %1262 = arith.mulf %1261, %742 : vector<1x1x256xf32>
    %1263 = arith.addf %1259, %1262 : vector<1x1x256xf32>
    %c199 = arith.constant 199 : index
    %1264 = memref.load %arg3[%c199] : memref<288xf32, #tpu.memory_space<smem>>
    %1265 = vector.broadcast %1264 : f32 to vector<1x1x256xf32>
    %1266 = arith.mulf %1265, %743 : vector<1x1x256xf32>
    %1267 = arith.addf %1263, %1266 : vector<1x1x256xf32>
    %c203 = arith.constant 203 : index
    %1268 = memref.load %arg3[%c203] : memref<288xf32, #tpu.memory_space<smem>>
    %1269 = vector.broadcast %1268 : f32 to vector<1x1x256xf32>
    %1270 = arith.mulf %1269, %744 : vector<1x1x256xf32>
    %1271 = arith.addf %1267, %1270 : vector<1x1x256xf32>
    %c207 = arith.constant 207 : index
    %1272 = memref.load %arg3[%c207] : memref<288xf32, #tpu.memory_space<smem>>
    %1273 = vector.broadcast %1272 : f32 to vector<1x1x256xf32>
    %1274 = arith.mulf %1273, %745 : vector<1x1x256xf32>
    %1275 = arith.addf %1271, %1274 : vector<1x1x256xf32>
    %c211 = arith.constant 211 : index
    %1276 = memref.load %arg3[%c211] : memref<288xf32, #tpu.memory_space<smem>>
    %1277 = vector.broadcast %1276 : f32 to vector<1x1x256xf32>
    %1278 = arith.mulf %1277, %746 : vector<1x1x256xf32>
    %1279 = arith.addf %1275, %1278 : vector<1x1x256xf32>
    %c215 = arith.constant 215 : index
    %1280 = memref.load %arg3[%c215] : memref<288xf32, #tpu.memory_space<smem>>
    %1281 = vector.broadcast %1280 : f32 to vector<1x1x256xf32>
    %1282 = arith.mulf %1281, %747 : vector<1x1x256xf32>
    %1283 = arith.addf %1279, %1282 : vector<1x1x256xf32>
    %c219 = arith.constant 219 : index
    %1284 = memref.load %arg3[%c219] : memref<288xf32, #tpu.memory_space<smem>>
    %1285 = vector.broadcast %1284 : f32 to vector<1x1x256xf32>
    %1286 = arith.mulf %1285, %748 : vector<1x1x256xf32>
    %1287 = arith.addf %1283, %1286 : vector<1x1x256xf32>
    %c223 = arith.constant 223 : index
    %1288 = memref.load %arg3[%c223] : memref<288xf32, #tpu.memory_space<smem>>
    %1289 = vector.broadcast %1288 : f32 to vector<1x1x256xf32>
    %1290 = arith.mulf %1289, %749 : vector<1x1x256xf32>
    %1291 = arith.addf %1287, %1290 : vector<1x1x256xf32>
    %c227 = arith.constant 227 : index
    %1292 = memref.load %arg3[%c227] : memref<288xf32, #tpu.memory_space<smem>>
    %1293 = vector.broadcast %1292 : f32 to vector<1x1x256xf32>
    %1294 = arith.mulf %1293, %750 : vector<1x1x256xf32>
    %1295 = arith.addf %1291, %1294 : vector<1x1x256xf32>
    %c231 = arith.constant 231 : index
    %1296 = memref.load %arg3[%c231] : memref<288xf32, #tpu.memory_space<smem>>
    %1297 = vector.broadcast %1296 : f32 to vector<1x1x256xf32>
    %1298 = arith.mulf %1297, %751 : vector<1x1x256xf32>
    %1299 = arith.addf %1295, %1298 : vector<1x1x256xf32>
    %c235 = arith.constant 235 : index
    %1300 = memref.load %arg3[%c235] : memref<288xf32, #tpu.memory_space<smem>>
    %1301 = vector.broadcast %1300 : f32 to vector<1x1x256xf32>
    %1302 = arith.mulf %1301, %752 : vector<1x1x256xf32>
    %1303 = arith.addf %1299, %1302 : vector<1x1x256xf32>
    %c239 = arith.constant 239 : index
    %1304 = memref.load %arg3[%c239] : memref<288xf32, #tpu.memory_space<smem>>
    %1305 = vector.broadcast %1304 : f32 to vector<1x1x256xf32>
    %1306 = arith.mulf %1305, %753 : vector<1x1x256xf32>
    %1307 = arith.addf %1303, %1306 : vector<1x1x256xf32>
    %c243 = arith.constant 243 : index
    %1308 = memref.load %arg3[%c243] : memref<288xf32, #tpu.memory_space<smem>>
    %1309 = vector.broadcast %1308 : f32 to vector<1x1x256xf32>
    %1310 = arith.mulf %1309, %754 : vector<1x1x256xf32>
    %1311 = arith.addf %1307, %1310 : vector<1x1x256xf32>
    %c247 = arith.constant 247 : index
    %1312 = memref.load %arg3[%c247] : memref<288xf32, #tpu.memory_space<smem>>
    %1313 = vector.broadcast %1312 : f32 to vector<1x1x256xf32>
    %1314 = arith.mulf %1313, %755 : vector<1x1x256xf32>
    %1315 = arith.addf %1311, %1314 : vector<1x1x256xf32>
    %c251 = arith.constant 251 : index
    %1316 = memref.load %arg3[%c251] : memref<288xf32, #tpu.memory_space<smem>>
    %1317 = vector.broadcast %1316 : f32 to vector<1x1x256xf32>
    %1318 = arith.mulf %1317, %756 : vector<1x1x256xf32>
    %1319 = arith.addf %1315, %1318 : vector<1x1x256xf32>
    %c255 = arith.constant 255 : index
    %1320 = memref.load %arg3[%c255] : memref<288xf32, #tpu.memory_space<smem>>
    %1321 = vector.broadcast %1320 : f32 to vector<1x1x256xf32>
    %1322 = arith.mulf %1321, %757 : vector<1x1x256xf32>
    %1323 = arith.addf %1319, %1322 : vector<1x1x256xf32>
    %c259 = arith.constant 259 : index
    %1324 = memref.load %arg3[%c259] : memref<288xf32, #tpu.memory_space<smem>>
    %1325 = vector.broadcast %1324 : f32 to vector<1x1x256xf32>
    %1326 = arith.mulf %1325, %758 : vector<1x1x256xf32>
    %1327 = arith.addf %1323, %1326 : vector<1x1x256xf32>
    %c263 = arith.constant 263 : index
    %1328 = memref.load %arg3[%c263] : memref<288xf32, #tpu.memory_space<smem>>
    %1329 = vector.broadcast %1328 : f32 to vector<1x1x256xf32>
    %1330 = arith.mulf %1329, %759 : vector<1x1x256xf32>
    %1331 = arith.addf %1327, %1330 : vector<1x1x256xf32>
    %c267 = arith.constant 267 : index
    %1332 = memref.load %arg3[%c267] : memref<288xf32, #tpu.memory_space<smem>>
    %1333 = vector.broadcast %1332 : f32 to vector<1x1x256xf32>
    %1334 = arith.mulf %1333, %760 : vector<1x1x256xf32>
    %1335 = arith.addf %1331, %1334 : vector<1x1x256xf32>
    %c271 = arith.constant 271 : index
    %1336 = memref.load %arg3[%c271] : memref<288xf32, #tpu.memory_space<smem>>
    %1337 = vector.broadcast %1336 : f32 to vector<1x1x256xf32>
    %1338 = arith.mulf %1337, %761 : vector<1x1x256xf32>
    %1339 = arith.addf %1335, %1338 : vector<1x1x256xf32>
    %c275 = arith.constant 275 : index
    %1340 = memref.load %arg3[%c275] : memref<288xf32, #tpu.memory_space<smem>>
    %1341 = vector.broadcast %1340 : f32 to vector<1x1x256xf32>
    %1342 = arith.mulf %1341, %762 : vector<1x1x256xf32>
    %1343 = arith.addf %1339, %1342 : vector<1x1x256xf32>
    %c279 = arith.constant 279 : index
    %1344 = memref.load %arg3[%c279] : memref<288xf32, #tpu.memory_space<smem>>
    %1345 = vector.broadcast %1344 : f32 to vector<1x1x256xf32>
    %1346 = arith.mulf %1345, %763 : vector<1x1x256xf32>
    %1347 = arith.addf %1343, %1346 : vector<1x1x256xf32>
    %c283 = arith.constant 283 : index
    %1348 = memref.load %arg3[%c283] : memref<288xf32, #tpu.memory_space<smem>>
    %1349 = vector.broadcast %1348 : f32 to vector<1x1x256xf32>
    %1350 = arith.mulf %1349, %764 : vector<1x1x256xf32>
    %1351 = arith.addf %1347, %1350 : vector<1x1x256xf32>
    %c287 = arith.constant 287 : index
    %1352 = memref.load %arg3[%c287] : memref<288xf32, #tpu.memory_space<smem>>
    %1353 = vector.broadcast %1352 : f32 to vector<1x1x256xf32>
    %1354 = arith.mulf %1353, %765 : vector<1x1x256xf32>
    %1355 = arith.addf %1351, %1354 : vector<1x1x256xf32>
    %c7_72 = arith.constant 7 : index
    %1356 = memref.load %arg4[%c7_72] : memref<8xf32, #tpu.memory_space<smem>>
    %1357 = vector.broadcast %1356 : f32 to vector<1x1x256xf32>
    %1358 = arith.addf %1355, %1357 : vector<1x1x256xf32>
    %cst_73 = arith.constant 0.000000e+00 : f32
    %1359 = vector.broadcast %cst_73 : f32 to vector<1x1x256xf32>
    %1360 = arith.maximumf %1358, %1359 : vector<1x1x256xf32>
    %1361 = arith.addf %749, %1360 : vector<1x1x256xf32>
    %1362 = tpu.concatenate %914, %1063, %1212, %1361 in 1 : vector<1x1x256xf32>, vector<1x1x256xf32>, vector<1x1x256xf32>, vector<1x1x256xf32> -> vector<1x4x256xf32>
    %c0_74 = arith.constant 0 : index
    %c0_75 = arith.constant 0 : index
    %c0_76 = arith.constant 0 : index
    %1363 = vector.load %arg5[%c0_74, %c0_75, %c0_76] : memref<1x4x256xf32, #tpu.memory_space<vmem>>, vector<1x4x256xf32>
    tpu.vector_store %arg5[%c0_74, %c0_75, %c0_76], %1362 {strides = array<i32>} : memref<1x4x256xf32, #tpu.memory_space<vmem>>, vector<1x4x256xf32>,
    return
  }
  func.func @transform_0(%arg0: i32) -> (i32, i32, i32) {
    %c0_i32 = arith.constant 0 : i32
    %c0_i32_0 = arith.constant 0 : i32
    %c0_i32_1 = arith.constant 0 : i32
    return %arg0, %c0_i32, %c0_i32_0 : i32, i32, i32
  }
  func.func @transform_1(%arg0: i32) -> (i32, i32, i32) {
    %c0_i32 = arith.constant 0 : i32
    %c0_i32_0 = arith.constant 0 : i32
    %c0_i32_1 = arith.constant 0 : i32
    %c0_i32_2 = arith.constant 0 : i32
    return %c0_i32, %c0_i32_0, %c0_i32_1 : i32, i32, i32
  }
  func.func @transform_2(%arg0: i32) -> i32 {
    %c0_i32 = arith.constant 0 : i32
    %c0_i32_0 = arith.constant 0 : i32
    return %c0_i32 : i32
  }
  func.func @transform_3(%arg0: i32) -> i32 {
    %c0_i32 = arith.constant 0 : i32
    %c0_i32_0 = arith.constant 0 : i32
    return %c0_i32 : i32
  }
  func.func @transform_4(%arg0: i32) -> (i32, i32, i32) {
    %c0_i32 = arith.constant 0 : i32
    %c0_i32_0 = arith.constant 0 : i32
    %c0_i32_1 = arith.constant 0 : i32
    return %arg0, %c0_i32, %c0_i32_0 : i32, i32, i32
  }
}

</mosaic_0001>

<llo_original>
// kernel: tpu_custom_call.1
$region0: #{tpu_custom_call.1}
  #allocation0 [shape = 'u32[]', space=smem, size = 0x4, offset = 0x4, fixed_abs, tag = 'smem constant byte address 0x4 - core index']
  #allocation1 [shape = 'u32[144,128]{1,0:T(1,128)}', space=vmem, size = 0x12000, scoped, tag = 'internal scratch']
  %s0 = inlined_call_operand.hbm [shape: f32[2,4,256], index: 0, kind: input, shape index: {}]
  %s1 = inlined_call_operand.hbm [shape: f32[9,1,256], index: 1, kind: input, shape index: {}]
  %s2 = inlined_call_operand.vmem [shape: f32[288], index: 2, kind: input, shape index: {}]
  %s3 = inlined_call_operand.vmem [shape: f32[8], index: 3, kind: input, shape index: {}]
  %s4 = inlined_call_operand.hbm [shape: f32[2,4,256], index: 4, kind: output, shape index: {}]
  %s5 = sld [smem:[#allocation0]]
  $region65: #{tpu_custom_call.1} parent=0
    _
  %s7 = ssub.s32 1, %s5
  %s8 = scalar_select 0, %s7, %s5
  $region1: #{tpu_custom_call.1} parent=0
    #allocation2 [shape = 'u8[8192]{0}', space=vmem, size = 0x2000, scoped, tag = 'input window, operand 0']
    #allocation3 [shape = 's32[2]{0}', space=sflag, size = 0x8, scoped, tag = 'scoped memory for tpu_custom_call.1']
    #allocation4 [shape = 's32[2]{0}', space=sflag, size = 0x8, scoped, tag = 'scoped memory for tpu_custom_call.1']
    #allocation5 [shape = 's32[2]{0}', space=sflag, size = 0x8, scoped, tag = 'scoped memory for tpu_custom_call.1']
    #allocation6 [shape = 'u8[9216]{0}', space=vmem, size = 0x2400, scoped, tag = 'input window, operand 1, single buffered']
    #allocation7 [shape = 's32[1]{0}', space=sflag, size = 0x4, scoped, tag = 'scoped memory for tpu_custom_call.1']
    #allocation8 [shape = 'u8[1536]{0}', space=smem, size = 0x600, scoped, tag = 'input window, operand 2, single buffered']
    #allocation9 [shape = 'u8[512]{0}', space=smem, size = 0x200, scoped, tag = 'input window, operand 3, single buffered']
    #allocation10 [shape = 's32[1]{0}', space=sflag, size = 0x4, scoped, tag = 'scoped memory for tpu_custom_call.1']
    #allocation11 [shape = 'u8[8192]{0}', space=vmem, size = 0x2000, scoped, tag = 'output window, operand 0']
    %9 = vsyncpa [#allocation3], 0
    %s10 = scalar_lea.sflag [#allocation3], 1
    %11 = vsyncpa %s10, 0
    %12 = vsyncpa [#allocation7], 0
    %13 = vsyncpa [#allocation5], 0
    %14 = vsyncpa [#allocation10], 0
    %15 = vsyncpa [#allocation4], 0
    %s16 = scalar_lea.sflag [#allocation4], 1
    %17 = vsyncpa %s16, 0
    loop: start=0, step=1, limit=4
    $region2: #{tpu_custom_call.1} parent=1 // loop_pre_header
      _
    $region3: #{tpu_custom_call.1} parent=1 // loop_header
      %s19 = sphi 0, %s23
      %p20 = scmp.ge.s32.totalorder %s19, 4
      %s29 = sphi 0, %s31
      %s32 = sphi 0, %s29
      %s33 = sphi 0, %s32
      %s49 = sphi 0, %s33
      %s53 = sphi 0, %s53
      %s55 = sphi 0, %s53
      %s56 = sphi 0, %s55
      %s70 = sphi 0, %s56
      %s74 = sphi 0, %s74
      %s76 = sphi 0, %s74
      %s77 = sphi 0, %s76
      %s91 = sphi 0, %s77
      %s95 = sphi 0, %s95
      %s97 = sphi 0, %s95
      %s98 = sphi 0, %s97
      %s112 = sphi 0, %s98
      %s118 = sphi 0, %s120
      %s121 = sphi 0, %s118
      %s122 = sphi 0, %s121
      %s138 = sphi 0, %s122
    $region4: #{tpu_custom_call.1} parent=1 // loop_header_branch
      %22 = sbr.rel (%p20) target = $region8
    $region5: #{tpu_custom_call.1} parent=1 // loop_body
      %s24 = ssub.s32 %s19, 1
      %s25 = ssub.s32 %s19, 2
      %s26 = sadd.s32 %s19, 1
      %s27 = ssub.s32 %s19, %s26
      %p28 = scmp.eq.s32.totalorder %s27, 0
      %s30 = sadd.s32 %s29, 1
      %s31 = scalar_select %p28, %s29, %s30
      %p34 = pneg %p28
      %p35 = scmp.eq.s32.totalorder %s19, 1
      %p36 = por %p34, %p35
      %p37 = scmp.ne.s32.totalorder %s29, %s32
      %p38 = scmp.eq.s32.totalorder %s19, 0
      %p39 = por %p37, %p38
      %p40 = scmp.ne.s32.totalorder %s29, %s32
      %p41 = scmp.eq.s32.totalorder %s24, 1
      %p42 = por %p40, %p41
      %p43 = scmp.ne.s32.totalorder %s32, %s33
      %p44 = scmp.eq.s32.totalorder %s24, 0
      %p45 = por %p43, %p44
      %p46 = scmp.ne.s32.totalorder %s32, %s33
      %p47 = scmp.eq.s32.totalorder %s25, 1
      %p48 = por %p46, %p47
      %p50 = scmp.ne.s32.totalorder %s33, %s49
      %p51 = scmp.eq.s32.totalorder %s25, 0
      %p52 = por %p50, %p51
      %s54 = sadd.s32 %s53, 1
      %p57 = scmp.eq.s32.totalorder %s19, 1
      %p58 = scmp.ne.s32.totalorder %s53, %s55
      %p59 = scmp.eq.s32.totalorder %s19, 0
      %p60 = por %p58, %p59
      %p61 = scmp.ne.s32.totalorder %s53, %s55
      %p62 = scmp.eq.s32.totalorder %s24, 1
      %p63 = por %p61, %p62
      %p64 = scmp.ne.s32.totalorder %s55, %s56
      %p65 = scmp.eq.s32.totalorder %s24, 0
      %p66 = por %p64, %p65
      %p67 = scmp.ne.s32.totalorder %s55, %s56
      %p68 = scmp.eq.s32.totalorder %s25, 1
      %p69 = por %p67, %p68
      %p71 = scmp.ne.s32.totalorder %s56, %s70
      %p72 = scmp.eq.s32.totalorder %s25, 0
      %p73 = por %p71, %p72
      %s75 = sadd.s32 %s74, 1
      %p78 = scmp.eq.s32.totalorder %s19, 1
      %p79 = scmp.ne.s32.totalorder %s74, %s76
      %p80 = scmp.eq.s32.totalorder %s19, 0
      %p81 = por %p79, %p80
      %p82 = scmp.ne.s32.totalorder %s74, %s76
      %p83 = scmp.eq.s32.totalorder %s24, 1
      %p84 = por %p82, %p83
      %p85 = scmp.ne.s32.totalorder %s76, %s77
      %p86 = scmp.eq.s32.totalorder %s24, 0
      %p87 = por %p85, %p86
      %p88 = scmp.ne.s32.totalorder %s76, %s77
      %p89 = scmp.eq.s32.totalorder %s25, 1
      %p90 = por %p88, %p89
      %p92 = scmp.ne.s32.totalorder %s77, %s91
      %p93 = scmp.eq.s32.totalorder %s25, 0
      %p94 = por %p92, %p93
      %s96 = sadd.s32 %s95, 1
      %p99 = scmp.eq.s32.totalorder %s19, 1
      %p100 = scmp.ne.s32.totalorder %s95, %s97
      %p101 = scmp.eq.s32.totalorder %s19, 0
      %p102 = por %p100, %p101
      %p103 = scmp.ne.s32.totalorder %s95, %s97
      %p104 = scmp.eq.s32.totalorder %s24, 1
      %p105 = por %p103, %p104
      %p106 = scmp.ne.s32.totalorder %s97, %s98
      %p107 = scmp.eq.s32.totalorder %s24, 0
      %p108 = por %p106, %p107
      %p109 = scmp.ne.s32.totalorder %s97, %s98
      %p110 = scmp.eq.s32.totalorder %s25, 1
      %p111 = por %p109, %p110
      %p113 = scmp.ne.s32.totalorder %s98, %s112
      %p114 = scmp.eq.s32.totalorder %s25, 0
      %p115 = por %p113, %p114
      %s116 = ssub.s32 %s19, %s26
      %p117 = scmp.eq.s32.totalorder %s116, 0
      %s119 = sadd.s32 %s118, 1
      %s120 = scalar_select %p117, %s118, %s119
      %p123 = pneg %p117
      %p124 = scmp.eq.s32.totalorder %s19, 1
      %p125 = por %p123, %p124
      %p126 = scmp.ne.s32.totalorder %s118, %s121
      %p127 = scmp.eq.s32.totalorder %s19, 0
      %p128 = por %p126, %p127
      %p129 = scmp.ne.s32.totalorder %s118, %s121
      %p130 = scmp.eq.s32.totalorder %s24, 1
      %p131 = por %p129, %p130
      %p132 = scmp.ne.s32.totalorder %s121, %s122
      %p133 = scmp.eq.s32.totalorder %s24, 0
      %p134 = por %p132, %p133
      %p135 = scmp.ne.s32.totalorder %s121, %s122
      %p136 = scmp.eq.s32.totalorder %s25, 1
      %p137 = por %p135, %p136
      %p139 = scmp.ne.s32.totalorder %s122, %s138
      %p140 = scmp.eq.s32.totalorder %s25, 0
      %p141 = por %p139, %p140
      %p142 = scmp.le.s32.totalorder 1, %s19
      %p143 = scmp.lt.s32.totalorder %s19, 3
      %p144 = pnand %p142, %p143
      %p145 = pneg %p144
      // Predicated region
      $region9: #{tpu_custom_call.1} parent=5 // pred_check
        _
      $region10: #{tpu_custom_call.1} parent=5 // pred_check_branch
        %147 = sbr.rel (%p144) target = $region12
      $region11: #{tpu_custom_call.1} parent=5 // pred_region
        %s148 = ssub.s32 %s19, 1
        // Predicated region
        $region13: #{tpu_custom_call.1} parent=11 // pred_check
          %p149 = pneg %p66
        $region14: #{tpu_custom_call.1} parent=11 // pred_check_branch
          %151 = sbr.rel (%p149) target = $region16
        $region15: #{tpu_custom_call.1} parent=11 // pred_region
          %s153 = ssub.s32 288, 288
          %154 = vsyncadd [#allocation7], %s153
          %s155 = sshll.u32 [#allocation6], 4
          %s156 = int_to_ptr.vmem [resolvable:$true] %s155
          %161 = dma.hbm_to_vmem [thread:$0]  %s1, 288, %s156, [#allocation7], 32, 32, 2
        $region16: #{tpu_custom_call.1} parent=11 // pred_fallthru
          _
        // Predicated region
        $region17: #{tpu_custom_call.1} parent=11 // pred_check
          %p162 = pneg %p87
        $region18: #{tpu_custom_call.1} parent=11 // pred_check_branch
          %164 = sbr.rel (%p162) target = $region20
        $region19: #{tpu_custom_call.1} parent=11 // pred_region
          %s166 = ssub.s32 48, 48
          %167 = vsyncadd [#allocation5], %s166
          %s169 = sshll.u32 %s2, 4
          %s170 = int_to_ptr.vmem [resolvable:$true] %s169
          %172 = dma.vmem_to_smem %s170, 48, [#allocation8], [#allocation5]
        $region20: #{tpu_custom_call.1} parent=11 // pred_fallthru
          _
        // Predicated region
        $region21: #{tpu_custom_call.1} parent=11 // pred_check
          %p173 = pneg %p108
        $region22: #{tpu_custom_call.1} parent=11 // pred_check_branch
          %175 = sbr.rel (%p173) target = $region24
        $region23: #{tpu_custom_call.1} parent=11 // pred_region
          %s177 = ssub.s32 16, 16
          %178 = vsyncadd [#allocation10], %s177
          %s180 = sshll.u32 %s3, 4
          %s181 = int_to_ptr.vmem [resolvable:$true] %s180
          %183 = dma.vmem_to_smem %s181, 16, [#allocation9], [#allocation10]
        $region24: #{tpu_custom_call.1} parent=11 // pred_fallthru
          _
      $region12: #{tpu_custom_call.1} parent=5 // pred_fallthru
        _
      %p184 = scmp.lt.s32.totalorder %s19, 2
      // Predicated region
      $region25: #{tpu_custom_call.1} parent=5 // pred_check
        %p185 = pneg %p184
      $region26: #{tpu_custom_call.1} parent=5 // pred_check_branch
        %187 = sbr.rel (%p185) target = $region28
      $region27: #{tpu_custom_call.1} parent=5 // pred_region
        // Predicated region
        $region29: #{tpu_custom_call.1} parent=27 // pred_check
          %p188 = pneg %p39
        $region30: #{tpu_custom_call.1} parent=27 // pred_check_branch
          %190 = sbr.rel (%p188) target = $region32
        $region31: #{tpu_custom_call.1} parent=27 // pred_region
          %s191 = sand.u32 %s29, 1
          %s192 = scalar_lea.sflag [#allocation3], %s191
          %s193 = sand.u32 %s29, 1
          %s194 = smul.addr %s193, 8
          %s195 = scalar_lea.vmem [#allocation2], %s194
          %s197 = ssub.s32 128, 128
          %198 = vsyncadd %s192, %s197
          %s199 = smul.addr %s19, 2
          %s200 = smul.addr %s199, 64
          %s201 = scalar_lea.hbm %s0, %s200
          %s203 = sshll.u32 %s195, 4
          %s204 = int_to_ptr.vmem [resolvable:$true] %s203
          %206 = dma.hbm_to_vmem [thread:$0]  %s201, 128, %s204, %s192
        $region32: #{tpu_custom_call.1} parent=27 // pred_fallthru
          _
      $region28: #{tpu_custom_call.1} parent=5 // pred_fallthru
        _
      %p207 = scmp.le.s32.totalorder 1, %s19
      %p208 = scmp.lt.s32.totalorder %s19, 3
      %p209 = pnand %p207, %p208
      %p210 = pneg %p209
      // Predicated region
      $region33: #{tpu_custom_call.1} parent=5 // pred_check
        _
      $region34: #{tpu_custom_call.1} parent=5 // pred_check_branch
        %212 = sbr.rel (%p209) target = $region36
      $region35: #{tpu_custom_call.1} parent=5 // pred_region
        %s213 = ssub.s32 %s19, 1
        %s214 = sand.u32 %s32, 1
        %s215 = scalar_lea.sflag [#allocation3], %s214
        %s216 = sand.u32 %s32, 1
        %s217 = smul.addr %s216, 8
        %s218 = scalar_lea.vmem [#allocation2], %s217
        // Predicated region
        $region37: #{tpu_custom_call.1} parent=35 // pred_check
          %p219 = pneg %p45
        $region38: #{tpu_custom_call.1} parent=35 // pred_check_branch
          %221 = sbr.rel (%p219) target = $region40
        $region39: #{tpu_custom_call.1} parent=35 // pred_region
          %222 = dma.done %s215, 128
        $region40: #{tpu_custom_call.1} parent=35 // pred_fallthru
          _
        // Predicated region
        $region41: #{tpu_custom_call.1} parent=35 // pred_check
          %p223 = pneg %p66
        $region42: #{tpu_custom_call.1} parent=35 // pred_check_branch
          %225 = sbr.rel (%p223) target = $region44
        $region43: #{tpu_custom_call.1} parent=35 // pred_region
          %226 = dma.done [#allocation7], 288
        $region44: #{tpu_custom_call.1} parent=35 // pred_fallthru
          _
        // Predicated region
        $region45: #{tpu_custom_call.1} parent=35 // pred_check
          %p227 = pneg %p87
        $region46: #{tpu_custom_call.1} parent=35 // pred_check_branch
          %229 = sbr.rel (%p227) target = $region48
        $region47: #{tpu_custom_call.1} parent=35 // pred_region
          %230 = dma.done [#allocation5], 48
        $region48: #{tpu_custom_call.1} parent=35 // pred_fallthru
          _
        // Predicated region
        $region49: #{tpu_custom_call.1} parent=35 // pred_check
          %p231 = pneg %p108
        $region50: #{tpu_custom_call.1} parent=35 // pred_check_branch
          %233 = sbr.rel (%p231) target = $region52
        $region51: #{tpu_custom_call.1} parent=35 // pred_region
          %234 = dma.done [#allocation10], 16
        $region52: #{tpu_custom_call.1} parent=35 // pred_fallthru
          _
        %235 = sfence
        %s236 = sand.u32 %s32, 1
        %s237 = scalar_lea.sflag [#allocation3], %s236
        %s238 = sand.u32 %s32, 1
        %s239 = smul.addr %s238, 8
        %s240 = scalar_lea.vmem [#allocation2], %s239
        %p241 = pneg %p45
        %p242 = pneg %p42
        %p243 = pneg %p66
        %p244 = pneg %p63
        %p245 = pneg %p87
        %p246 = pneg %p84
        %p247 = pneg %p108
        %p248 = pneg %p105
        %p249 = pneg %p134
        %p250 = pneg %p131
        %s251 = sand.u32 %s121, 1
        %s252 = scalar_lea.sflag [#allocation4], %s251
        %s253 = sand.u32 %s121, 1
        %s254 = smul.addr %s253, 8
        %s255 = scalar_lea.vmem [#allocation11], %s254
        %v256 = vld [vmem:[%s218] sm:$0xff]
        %v258 = vcombine.high %v256, %v256
        %260 = vrot.lane.b32.xlu0 %v256, 17
        %v261 = vpop.permute.xlu0 %260
        %262 = vrot.lane.b32.xlu0 %v258, 17
        %v263 = vpop.permute.xlu0 %262
        %v264 = vlaneseq
        %v265 = vand.u32 %v264, 127
        %vm266 = vcmp.lt.s32.totalorder %v265, 17
        %v267 = vsel %vm266, %v261, %v263
        %v268 = vsel %vm266, %v263, %v261
        %v269 = vld [vmem:[#allocation6] sm:$0x3]
        %v271 = vlaneseq
        %v272 = vshrl.u32 %v271, 7
        %v273 = vsub.s32 0, %v272
        %v274 = vrot.slane %v269, %v273
        %v275 = vlaneseq
        %v276 = vshrl.u32 %v275, 7
        %v277 = vsub.s32 1, %v276
        %v278 = vrot.slane %v269, %v277
        %v281 = vmul.f32 %v268, %v274
        %v282 = vmul.f32 %v267, %v278
        %283 = vrot.lane.b32.xlu0 %v256, 16
        %v284 = vpop.permute.xlu0 %283
        %285 = vrot.lane.b32.xlu0 %v258, 16
        %v286 = vpop.permute.xlu0 %285
        %vm287 = vcmp.lt.s32.totalorder %v265, 16
        %v288 = vsel %vm287, %v284, %v286
        %v289 = vsel %vm287, %v286, %v284
        %s290 = scalar_lea.vmem [#allocation6], 2
        %v291 = vld [vmem:[%s290] sm:$0x3]
        %v293 = vlaneseq
        %v294 = vshrl.u32 %v293, 7
        %v295 = vsub.s32 0, %v294
        %v296 = vrot.slane %v291, %v295
        %v297 = vlaneseq
        %v298 = vshrl.u32 %v297, 7
        %v299 = vsub.s32 1, %v298
        %v300 = vrot.slane %v291, %v299
        %v303 = vmul.f32 %v289, %v296
        %v304 = vmul.f32 %v288, %v300
        %305 = vrot.lane.b32.xlu0 %v256, 15
        %v306 = vpop.permute.xlu0 %305
        %307 = vrot.lane.b32.xlu0 %v258, 15
        %v308 = vpop.permute.xlu0 %307
        %vm309 = vcmp.lt.s32.totalorder %v265, 15
        %v310 = vsel %vm309, %v306, %v308
        %v311 = vsel %vm309, %v308, %v306
        %s312 = scalar_lea.vmem [#allocation6], 4
        %v313 = vld [vmem:[%s312] sm:$0x3]
        %v315 = vlaneseq
        %v316 = vshrl.u32 %v315, 7
        %v317 = vsub.s32 0, %v316
        %v318 = vrot.slane %v313, %v317
        %v319 = vlaneseq
        %v320 = vshrl.u32 %v319, 7
        %v321 = vsub.s32 1, %v320
        %v322 = vrot.slane %v313, %v321
        %v325 = vmul.f32 %v311, %v318
        %v326 = vmul.f32 %v310, %v322
        %327 = vrot.lane.b32.xlu0 %v256, 1
        %v328 = vpop.permute.xlu0 %327
        %329 = vrot.lane.b32.xlu0 %v258, 1
        %v330 = vpop.permute.xlu0 %329
        %vm331 = vcmp.lt.s32.totalorder %v265, 1
        %v332 = vsel %vm331, %v328, %v330
        %v333 = vsel %vm331, %v330, %v328
        %s334 = scalar_lea.vmem [#allocation6], 6
        %v335 = vld [vmem:[%s334] sm:$0x3]
        %v337 = vlaneseq
        %v338 = vshrl.u32 %v337, 7
        %v339 = vsub.s32 0, %v338
        %v340 = vrot.slane %v335, %v339
        %v341 = vlaneseq
        %v342 = vshrl.u32 %v341, 7
        %v343 = vsub.s32 1, %v342
        %v344 = vrot.slane %v335, %v343
        %v347 = vmul.f32 %v333, %v340
        %v348 = vmul.f32 %v332, %v344
        %349 = vrot.lane.b32.xlu0 %v256, 127
        %v350 = vpop.permute.xlu0 %349
        %351 = vrot.lane.b32.xlu0 %v258, 127
        %v352 = vpop.permute.xlu0 %351
        %vm353 = vcmp.lt.s32.totalorder %v265, 127
        %v354 = vsel %vm353, %v350, %v352
        %v355 = vsel %vm353, %v352, %v350
        %s356 = scalar_lea.vmem [#allocation6], 10
        %v357 = vld [vmem:[%s356] sm:$0x3]
        %v359 = vlaneseq
        %v360 = vshrl.u32 %v359, 7
        %v361 = vsub.s32 0, %v360
        %v362 = vrot.slane %v357, %v361
        %v363 = vlaneseq
        %v364 = vshrl.u32 %v363, 7
        %v365 = vsub.s32 1, %v364
        %v366 = vrot.slane %v357, %v365
        %v369 = vmul.f32 %v354, %v362
        %v370 = vmul.f32 %v355, %v366
        %371 = vrot.lane.b32.xlu0 %v256, 113
        %v372 = vpop.permute.xlu0 %371
        %373 = vrot.lane.b32.xlu0 %v258, 113
        %v374 = vpop.permute.xlu0 %373
        %vm375 = vcmp.lt.s32.totalorder %v265, 113
        %v376 = vsel %vm375, %v372, %v374
        %v377 = vsel %vm375, %v374, %v372
        %s378 = scalar_lea.vmem [#allocation6], 12
        %v379 = vld [vmem:[%s378] sm:$0x3]
        %v381 = vlaneseq
        %v382 = vshrl.u32 %v381, 7
        %v383 = vsub.s32 0, %v382
        %v384 = vrot.slane %v379, %v383
        %v385 = vlaneseq
        %v386 = vshrl.u32 %v385, 7
        %v387 = vsub.s32 1, %v386
        %v388 = vrot.slane %v379, %v387
        %v391 = vmul.f32 %v376, %v384
        %v392 = vmul.f32 %v377, %v388
        %393 = vrot.lane.b32.xlu0 %v256, 112
        %v394 = vpop.permute.xlu0 %393
        %395 = vrot.lane.b32.xlu0 %v258, 112
        %v396 = vpop.permute.xlu0 %395
        %vm397 = vcmp.lt.s32.totalorder %v265, 112
        %v398 = vsel %vm397, %v394, %v396
        %v399 = vsel %vm397, %v396, %v394
        %s400 = scalar_lea.vmem [#allocation6], 14
        %v401 = vld [vmem:[%s400] sm:$0x3]
        %v403 = vlaneseq
        %v404 = vshrl.u32 %v403, 7
        %v405 = vsub.s32 0, %v404
        %v406 = vrot.slane %v401, %v405
        %v407 = vlaneseq
        %v408 = vshrl.u32 %v407, 7
        %v409 = vsub.s32 1, %v408
        %v410 = vrot.slane %v401, %v409
        %v413 = vmul.f32 %v398, %v406
        %v414 = vmul.f32 %v399, %v410
        %415 = vrot.lane.b32.xlu0 %v256, 111
        %v416 = vpop.permute.xlu0 %415
        %417 = vrot.lane.b32.xlu0 %v258, 111
        %v418 = vpop.permute.xlu0 %417
        %vm419 = vcmp.lt.s32.totalorder %v265, 111
        %v420 = vsel %vm419, %v416, %v418
        %v421 = vsel %vm419, %v418, %v416
        %s422 = scalar_lea.vmem [#allocation6], 16
        %v423 = vld [vmem:[%s422] sm:$0x3]
        %v425 = vlaneseq
        %v426 = vshrl.u32 %v425, 7
        %v427 = vsub.s32 0, %v426
        %v428 = vrot.slane %v423, %v427
        %v429 = vlaneseq
        %v430 = vshrl.u32 %v429, 7
        %v431 = vsub.s32 1, %v430
        %v432 = vrot.slane %v423, %v431
        %v435 = vmul.f32 %v420, %v428
        %v436 = vmul.f32 %v421, %v432
        %s437 = sld [smem:[#allocation8]]
        %v438 = vstv %s437
        %v439 = vmul.f32 %v438, %v281
        %v440 = vmul.f32 %v438, %v282
        %s441 = sld [smem:[#allocation8 + $0x4]]
        %v442 = vstv %s441
        %v443 = vmul.f32 %v442, %v281
        %v444 = vmul.f32 %v442, %v282
        %v447 = vrot.slane %v443, 1
        %v448 = vrot.slane %v444, 1
        %v451 = vadd.f32 %v439, %v447
        %v452 = vadd.f32 %v440, %v448
        %s453 = sld [smem:[#allocation8 + $0x8]]
        %v454 = vstv %s453
        %v455 = vmul.f32 %v454, %v281
        %v456 = vmul.f32 %v454, %v282
        %v459 = vrot.slane %v455, 2
        %v460 = vrot.slane %v456, 2
        %v463 = vadd.f32 %v451, %v459
        %v464 = vadd.f32 %v452, %v460
        %s465 = sld [smem:[#allocation8 + $0xc]]
        %v466 = vstv %s465
        %v467 = vmul.f32 %v466, %v281
        %v468 = vmul.f32 %v466, %v282
        %v471 = vrot.slane %v467, 3
        %v472 = vrot.slane %v468, 3
        %v475 = vadd.f32 %v463, %v471
        %v476 = vadd.f32 %v464, %v472
        %s477 = sld [smem:[#allocation8 + $0x10]]
        %v478 = vstv %s477
        %v479 = vmul.f32 %v478, %v303
        %v480 = vmul.f32 %v478, %v304
        %v481 = vadd.f32 %v475, %v479
        %v482 = vadd.f32 %v476, %v480
        %s483 = sld [smem:[#allocation8 + $0x14]]
        %v484 = vstv %s483
        %v485 = vmul.f32 %v484, %v303
        %v486 = vmul.f32 %v484, %v304
        %v489 = vrot.slane %v485, 1
        %v490 = vrot.slane %v486, 1
        %v493 = vadd.f32 %v481, %v489
        %v494 = vadd.f32 %v482, %v490
        %s495 = sld [smem:[#allocation8 + $0x18]]
        %v496 = vstv %s495
        %v497 = vmul.f32 %v496, %v303
        %v498 = vmul.f32 %v496, %v304
        %v501 = vrot.slane %v497, 2
        %v502 = vrot.slane %v498, 2
        %v505 = vadd.f32 %v493, %v501
        %v506 = vadd.f32 %v494, %v502
        %s507 = sld [smem:[#allocation8 + $0x1c]]
        %v508 = vstv %s507
        %v509 = vmul.f32 %v508, %v303
        %v510 = vmul.f32 %v508, %v304
        %v513 = vrot.slane %v509, 3
        %v514 = vrot.slane %v510, 3
        %v517 = vadd.f32 %v505, %v513
        %v518 = vadd.f32 %v506, %v514
        %s519 = sld [smem:[#allocation8 + $0x20]]
        %v520 = vstv %s519
        %v521 = vmul.f32 %v520, %v325
        %v522 = vmul.f32 %v520, %v326
        %v523 = vadd.f32 %v517, %v521
        %v524 = vadd.f32 %v518, %v522
        %s525 = sld [smem:[#allocation8 + $0x24]]
        %v526 = vstv %s525
        %v527 = vmul.f32 %v526, %v325
        %v528 = vmul.f32 %v526, %v326
        %v531 = vrot.slane %v527, 1
        %v532 = vrot.slane %v528, 1
        %v535 = vadd.f32 %v523, %v531
        %v536 = vadd.f32 %v524, %v532
        %s537 = sld [smem:[#allocation8 + $0x28]]
        %v538 = vstv %s537
        %v539 = vmul.f32 %v538, %v325
        %v540 = vmul.f32 %v538, %v326
        %v543 = vrot.slane %v539, 2
        %v544 = vrot.slane %v540, 2
        %v547 = vadd.f32 %v535, %v543
        %v548 = vadd.f32 %v536, %v544
        %s549 = sld [smem:[#allocation8 + $0x2c]]
        %v550 = vstv %s549
        %v551 = vmul.f32 %v550, %v325
        %v552 = vmul.f32 %v550, %v326
        %v555 = vrot.slane %v551, 3
        %v556 = vrot.slane %v552, 3
        %v559 = vadd.f32 %v547, %v555
        %v560 = vadd.f32 %v548, %v556
        %s561 = sld [smem:[#allocation8 + $0x30]]
        %v562 = vstv %s561
        %v563 = vmul.f32 %v562, %v347
        %v564 = vmul.f32 %v562, %v348
        %v565 = vadd.f32 %v559, %v563
        %v566 = vadd.f32 %v560, %v564
        %s567 = sld [smem:[#allocation8 + $0x34]]
        %v568 = vstv %s567
        %v569 = vmul.f32 %v568, %v347
        %v570 = vmul.f32 %v568, %v348
        %v573 = vrot.slane %v569, 1
        %v574 = vrot.slane %v570, 1
        %v577 = vadd.f32 %v565, %v573
        %v578 = vadd.f32 %v566, %v574
        %s579 = sld [smem:[#allocation8 + $0x38]]
        %v580 = vstv %s579
        %v581 = vmul.f32 %v580, %v347
        %v582 = vmul.f32 %v580, %v348
        %v585 = vrot.slane %v581, 2
        %v586 = vrot.slane %v582, 2
        %v589 = vadd.f32 %v577, %v585
        %v590 = vadd.f32 %v578, %v586
        %s591 = sld [smem:[#allocation8 + $0x3c]]
        %v592 = vstv %s591
        %v593 = vmul.f32 %v592, %v347
        %v594 = vmul.f32 %v592, %v348
        %v597 = vrot.slane %v593, 3
        %v598 = vrot.slane %v594, 3
        %v601 = vadd.f32 %v589, %v597
        %v602 = vadd.f32 %v590, %v598
        %s603 = sld [smem:[#allocation8 + $0x40]]
        %v604 = vstv %s603
        %v605 = vmul.f32 %v604, %v256
        %v607 = vlaneseq
        %v608 = vshrl.u32 %v607, 7
        %v609 = vsub.s32 0, %v608
        %v610 = vrot.slane %v605, %v609
        %v611 = vlaneseq
        %v612 = vshrl.u32 %v611, 7
        %v613 = vsub.s32 4, %v612
        %v614 = vrot.slane %v605, %v613
        %v617 = vadd.f32 %v601, %v610
        %v618 = vadd.f32 %v602, %v614
        %s619 = sld [smem:[#allocation8 + $0x44]]
        %v620 = vstv %s619
        %v621 = vmul.f32 %v620, %v256
        %v623 = vlaneseq
        %v624 = vshrl.u32 %v623, 7
        %v625 = vsub.s32 1, %v624
        %v626 = vrot.slane %v621, %v625
        %v627 = vlaneseq
        %v628 = vshrl.u32 %v627, 7
        %v629 = vsub.s32 5, %v628
        %v630 = vrot.slane %v621, %v629
        %v633 = vadd.f32 %v617, %v626
        %v634 = vadd.f32 %v618, %v630
        %s635 = sld [smem:[#allocation8 + $0x48]]
        %v636 = vstv %s635
        %v637 = vmul.f32 %v636, %v256
        %v639 = vlaneseq
        %v640 = vshrl.u32 %v639, 7
        %v641 = vsub.s32 2, %v640
        %v642 = vrot.slane %v637, %v641
        %v643 = vlaneseq
        %v644 = vshrl.u32 %v643, 7
        %v645 = vsub.s32 6, %v644
        %v646 = vrot.slane %v637, %v645
        %v649 = vadd.f32 %v633, %v642
        %v650 = vadd.f32 %v634, %v646
        %s651 = sld [smem:[#allocation8 + $0x4c]]
        %v652 = vstv %s651
        %v653 = vmul.f32 %v652, %v256
        %v655 = vlaneseq
        %v656 = vshrl.u32 %v655, 7
        %v657 = vsub.s32 3, %v656
        %v658 = vrot.slane %v653, %v657
        %v659 = vlaneseq
        %v660 = vshrl.u32 %v659, 7
        %v661 = vsub.s32 7, %v660
        %v662 = vrot.slane %v653, %v661
        %v665 = vadd.f32 %v649, %v658
        %v666 = vadd.f32 %v650, %v662
        %s667 = sld [smem:[#allocation8 + $0x50]]
        %v668 = vstv %s667
        %v669 = vmul.f32 %v668, %v369
        %v670 = vmul.f32 %v668, %v370
        %v671 = vadd.f32 %v665, %v669
        %v672 = vadd.f32 %v666, %v670
        %s673 = sld [smem:[#allocation8 + $0x54]]
        %v674 = vstv %s673
        %v675 = vmul.f32 %v674, %v369
        %v676 = vmul.f32 %v674, %v370
        %v679 = vrot.slane %v675, 1
        %v680 = vrot.slane %v676, 1
        %v683 = vadd.f32 %v671, %v679
        %v684 = vadd.f32 %v672, %v680
        %s685 = sld [smem:[#allocation8 + $0x58]]
        %v686 = vstv %s685
        %v687 = vmul.f32 %v686, %v369
        %v688 = vmul.f32 %v686, %v370
        %v691 = vrot.slane %v687, 2
        %v692 = vrot.slane %v688, 2
        %v695 = vadd.f32 %v683, %v691
        %v696 = vadd.f32 %v684, %v692
        %s697 = sld [smem:[#allocation8 + $0x5c]]
        %v698 = vstv %s697
        %v699 = vmul.f32 %v698, %v369
        %v700 = vmul.f32 %v698, %v370
        %v703 = vrot.slane %v699, 3
        %v704 = vrot.slane %v700, 3
        %v707 = vadd.f32 %v695, %v703
        %v708 = vadd.f32 %v696, %v704
        %s709 = sld [smem:[#allocation8 + $0x60]]
        %v710 = vstv %s709
        %v711 = vmul.f32 %v710, %v391
        %v712 = vmul.f32 %v710, %v392
        %v713 = vadd.f32 %v707, %v711
        %v714 = vadd.f32 %v708, %v712
        %s715 = sld [smem:[#allocation8 + $0x64]]
        %v716 = vstv %s715
        %v717 = vmul.f32 %v716, %v391
        %v718 = vmul.f32 %v716, %v392
        %v721 = vrot.slane %v717, 1
        %v722 = vrot.slane %v718, 1
        %v725 = vadd.f32 %v713, %v721
        %v726 = vadd.f32 %v714, %v722
        %s727 = sld [smem:[#allocation8 + $0x68]]
        %v728 = vstv %s727
        %v729 = vmul.f32 %v728, %v391
        %v730 = vmul.f32 %v728, %v392
        %v733 = vrot.slane %v729, 2
        %v734 = vrot.slane %v730, 2
        %v737 = vadd.f32 %v725, %v733
        %v738 = vadd.f32 %v726, %v734
        %s739 = sld [smem:[#allocation8 + $0x6c]]
        %v740 = vstv %s739
        %v741 = vmul.f32 %v740, %v391
        %v742 = vmul.f32 %v740, %v392
        %v745 = vrot.slane %v741, 3
        %v746 = vrot.slane %v742, 3
        %v749 = vadd.f32 %v737, %v745
        %v750 = vadd.f32 %v738, %v746
        %s751 = sld [smem:[#allocation8 + $0x70]]
        %v752 = vstv %s751
        %v753 = vmul.f32 %v752, %v413
        %v754 = vmul.f32 %v752, %v414
        %v755 = vadd.f32 %v749, %v753
        %v756 = vadd.f32 %v750, %v754
        %s757 = sld [smem:[#allocation8 + $0x74]]
        %v758 = vstv %s757
        %v759 = vmul.f32 %v758, %v413
        %v760 = vmul.f32 %v758, %v414
        %v763 = vrot.slane %v759, 1
        %v764 = vrot.slane %v760, 1
        %v767 = vadd.f32 %v755, %v763
        %v768 = vadd.f32 %v756, %v764
        %s769 = sld [smem:[#allocation8 + $0x78]]
        %v770 = vstv %s769
        %v771 = vmul.f32 %v770, %v413
        %v772 = vmul.f32 %v770, %v414
        %v775 = vrot.slane %v771, 2
        %v776 = vrot.slane %v772, 2
        %v779 = vadd.f32 %v767, %v775
        %v780 = vadd.f32 %v768, %v776
        %s781 = sld [smem:[#allocation8 + $0x7c]]
        %v782 = vstv %s781
        %v783 = vmul.f32 %v782, %v413
        %v784 = vmul.f32 %v782, %v414
        %v787 = vrot.slane %v783, 3
        %v788 = vrot.slane %v784, 3
        %v791 = vadd.f32 %v779, %v787
        %v792 = vadd.f32 %v780, %v788
        %s793 = sld [smem:[#allocation8 + $0x80]]
        %v794 = vstv %s793
        %v795 = vmul.f32 %v794, %v435
        %v796 = vmul.f32 %v794, %v436
        %v797 = vadd.f32 %v791, %v795
        %v798 = vadd.f32 %v792, %v796
        %s799 = sld [smem:[#allocation8 + $0x84]]
        %v800 = vstv %s799
        %v801 = vmul.f32 %v800, %v435
        %v802 = vmul.f32 %v800, %v436
        %v805 = vrot.slane %v801, 1
        %v806 = vrot.slane %v802, 1
        %v809 = vadd.f32 %v797, %v805
        %v810 = vadd.f32 %v798, %v806
        %s811 = sld [smem:[#allocation8 + $0x88]]
        %v812 = vstv %s811
        %v813 = vmul.f32 %v812, %v435
        %v814 = vmul.f32 %v812, %v436
        %v817 = vrot.slane %v813, 2
        %v818 = vrot.slane %v814, 2
        %v821 = vadd.f32 %v809, %v817
        %v822 = vadd.f32 %v810, %v818
        %s823 = sld [smem:[#allocation8 + $0x8c]]
        %v824 = vstv %s823
        %v825 = vmul.f32 %v824, %v435
        %v826 = vmul.f32 %v824, %v436
        %v829 = vrot.slane %v825, 3
        %v830 = vrot.slane %v826, 3
        %v833 = vadd.f32 %v821, %v829
        %v834 = vadd.f32 %v822, %v830
        %s835 = sld [smem:[#allocation9]]
        %v836 = vstv %s835
        %v837 = vadd.f32 %v833, %v836
        %v838 = vadd.f32 %v834, %v836
        %v839 = vmax.f32 %v837, 0.0
        %v840 = vmax.f32 %v838, 0.0
        %v843 = vcombine.low %v839, %v840
        %v845 = vadd.f32 %v256, %v843
        %s846 = sld [smem:[#allocation8 + $0x1]]
        %v847 = vstv %s846
        %v848 = vmul.f32 %v847, %v281
        %v849 = vmul.f32 %v847, %v282
        %s850 = sld [smem:[#allocation8 + $0x5]]
        %v851 = vstv %s850
        %v852 = vmul.f32 %v851, %v281
        %v853 = vmul.f32 %v851, %v282
        %v856 = vrot.slane %v852, 1
        %v857 = vrot.slane %v853, 1
        %v860 = vadd.f32 %v848, %v856
        %v861 = vadd.f32 %v849, %v857
        %s862 = sld [smem:[#allocation8 + $0x9]]
        %v863 = vstv %s862
        %v864 = vmul.f32 %v863, %v281
        %v865 = vmul.f32 %v863, %v282
        %v868 = vrot.slane %v864, 2
        %v869 = vrot.slane %v865, 2
        %v872 = vadd.f32 %v860, %v868
        %v873 = vadd.f32 %v861, %v869
        %s874 = sld [smem:[#allocation8 + $0xd]]
        %v875 = vstv %s874
        %v876 = vmul.f32 %v875, %v281
        %v877 = vmul.f32 %v875, %v282
        %v880 = vrot.slane %v876, 3
        %v881 = vrot.slane %v877, 3
        %v884 = vadd.f32 %v872, %v880
        %v885 = vadd.f32 %v873, %v881
        %s886 = sld [smem:[#allocation8 + $0x11]]
        %v887 = vstv %s886
        %v888 = vmul.f32 %v887, %v303
        %v889 = vmul.f32 %v887, %v304
        %v890 = vadd.f32 %v884, %v888
        %v891 = vadd.f32 %v885, %v889
        %s892 = sld [smem:[#allocation8 + $0x15]]
        %v893 = vstv %s892
        %v894 = vmul.f32 %v893, %v303
        %v895 = vmul.f32 %v893, %v304
        %v898 = vrot.slane %v894, 1
        %v899 = vrot.slane %v895, 1
        %v902 = vadd.f32 %v890, %v898
        %v903 = vadd.f32 %v891, %v899
        %s904 = sld [smem:[#allocation8 + $0x19]]
        %v905 = vstv %s904
        %v906 = vmul.f32 %v905, %v303
        %v907 = vmul.f32 %v905, %v304
        %v910 = vrot.slane %v906, 2
        %v911 = vrot.slane %v907, 2
        %v914 = vadd.f32 %v902, %v910
        %v915 = vadd.f32 %v903, %v911
        %s916 = sld [smem:[#allocation8 + $0x1d]]
        %v917 = vstv %s916
        %v918 = vmul.f32 %v917, %v303
        %v919 = vmul.f32 %v917, %v304
        %v922 = vrot.slane %v918, 3
        %v923 = vrot.slane %v919, 3
        %v926 = vadd.f32 %v914, %v922
        %v927 = vadd.f32 %v915, %v923
        %s928 = sld [smem:[#allocation8 + $0x21]]
        %v929 = vstv %s928
        %v930 = vmul.f32 %v929, %v325
        %v931 = vmul.f32 %v929, %v326
        %v932 = vadd.f32 %v926, %v930
        %v933 = vadd.f32 %v927, %v931
        %s934 = sld [smem:[#allocation8 + $0x25]]
        %v935 = vstv %s934
        %v936 = vmul.f32 %v935, %v325
        %v937 = vmul.f32 %v935, %v326
        %v940 = vrot.slane %v936, 1
        %v941 = vrot.slane %v937, 1
        %v944 = vadd.f32 %v932, %v940
        %v945 = vadd.f32 %v933, %v941
        %s946 = sld [smem:[#allocation8 + $0x29]]
        %v947 = vstv %s946
        %v948 = vmul.f32 %v947, %v325
        %v949 = vmul.f32 %v947, %v326
        %v952 = vrot.slane %v948, 2
        %v953 = vrot.slane %v949, 2
        %v956 = vadd.f32 %v944, %v952
        %v957 = vadd.f32 %v945, %v953
        %s958 = sld [smem:[#allocation8 + $0x2d]]
        %v959 = vstv %s958
        %v960 = vmul.f32 %v959, %v325
        %v961 = vmul.f32 %v959, %v326
        %v964 = vrot.slane %v960, 3
        %v965 = vrot.slane %v961, 3
        %v968 = vadd.f32 %v956, %v964
        %v969 = vadd.f32 %v957, %v965
        %s970 = sld [smem:[#allocation8 + $0x31]]
        %v971 = vstv %s970
        %v972 = vmul.f32 %v971, %v347
        %v973 = vmul.f32 %v971, %v348
        %v974 = vadd.f32 %v968, %v972
        %v975 = vadd.f32 %v969, %v973
        %s976 = sld [smem:[#allocation8 + $0x35]]
        %v977 = vstv %s976
        %v978 = vmul.f32 %v977, %v347
        %v979 = vmul.f32 %v977, %v348
        %v982 = vrot.slane %v978, 1
        %v983 = vrot.slane %v979, 1
        %v986 = vadd.f32 %v974, %v982
        %v987 = vadd.f32 %v975, %v983
        %s988 = sld [smem:[#allocation8 + $0x39]]
        %v989 = vstv %s988
        %v990 = vmul.f32 %v989, %v347
        %v991 = vmul.f32 %v989, %v348
        %v994 = vrot.slane %v990, 2
        %v995 = vrot.slane %v991, 2
        %v998 = vadd.f32 %v986, %v994
        %v999 = vadd.f32 %v987, %v995
        %s1000 = sld [smem:[#allocation8 + $0x3d]]
        %v1001 = vstv %s1000
        %v1002 = vmul.f32 %v1001, %v347
        %v1003 = vmul.f32 %v1001, %v348
        %v1006 = vrot.slane %v1002, 3
        %v1007 = vrot.slane %v1003, 3
        %v1010 = vadd.f32 %v998, %v1006
        %v1011 = vadd.f32 %v999, %v1007
        %s1012 = sld [smem:[#allocation8 + $0x41]]
        %v1013 = vstv %s1012
        %v1014 = vmul.f32 %v1013, %v256
        %v1016 = vlaneseq
        %v1017 = vshrl.u32 %v1016, 7
        %v1018 = vsub.s32 0, %v1017
        %v1019 = vrot.slane %v1014, %v1018
        %v1020 = vlaneseq
        %v1021 = vshrl.u32 %v1020, 7
        %v1022 = vsub.s32 4, %v1021
        %v1023 = vrot.slane %v1014, %v1022
        %v1026 = vadd.f32 %v1010, %v1019
        %v1027 = vadd.f32 %v1011, %v1023
        %s1028 = sld [smem:[#allocation8 + $0x45]]
        %v1029 = vstv %s1028
        %v1030 = vmul.f32 %v1029, %v256
        %v1032 = vlaneseq
        %v1033 = vshrl.u32 %v1032, 7
        %v1034 = vsub.s32 1, %v1033
        %v1035 = vrot.slane %v1030, %v1034
        %v1036 = vlaneseq
        %v1037 = vshrl.u32 %v1036, 7
        %v1038 = vsub.s32 5, %v1037
        %v1039 = vrot.slane %v1030, %v1038
        %v1042 = vadd.f32 %v1026, %v1035
        %v1043 = vadd.f32 %v1027, %v1039
        %s1044 = sld [smem:[#allocation8 + $0x49]]
        %v1045 = vstv %s1044
        %v1046 = vmul.f32 %v1045, %v256
        %v1048 = vlaneseq
        %v1049 = vshrl.u32 %v1048, 7
        %v1050 = vsub.s32 2, %v1049
        %v1051 = vrot.slane %v1046, %v1050
        %v1052 = vlaneseq
        %v1053 = vshrl.u32 %v1052, 7
        %v1054 = vsub.s32 6, %v1053
        %v1055 = vrot.slane %v1046, %v1054
        %v1058 = vadd.f32 %v1042, %v1051
        %v1059 = vadd.f32 %v1043, %v1055
        %s1060 = sld [smem:[#allocation8 + $0x4d]]
        %v1061 = vstv %s1060
        %v1062 = vmul.f32 %v1061, %v256
        %v1064 = vlaneseq
        %v1065 = vshrl.u32 %v1064, 7
        %v1066 = vsub.s32 3, %v1065
        %v1067 = vrot.slane %v1062, %v1066
        %v1068 = vlaneseq
        %v1069 = vshrl.u32 %v1068, 7
        %v1070 = vsub.s32 7, %v1069
        %v1071 = vrot.slane %v1062, %v1070
        %v1074 = vadd.f32 %v1058, %v1067
        %v1075 = vadd.f32 %v1059, %v1071
        %s1076 = sld [smem:[#allocation8 + $0x51]]
        %v1077 = vstv %s1076
        %v1078 = vmul.f32 %v1077, %v369
        %v1079 = vmul.f32 %v1077, %v370
        %v1080 = vadd.f32 %v1074, %v1078
        %v1081 = vadd.f32 %v1075, %v1079
        %s1082 = sld [smem:[#allocation8 + $0x55]]
        %v1083 = vstv %s1082
        %v1084 = vmul.f32 %v1083, %v369
        %v1085 = vmul.f32 %v1083, %v370
        %v1088 = vrot.slane %v1084, 1
        %v1089 = vrot.slane %v1085, 1
        %v1092 = vadd.f32 %v1080, %v1088
        %v1093 = vadd.f32 %v1081, %v1089
        %s1094 = sld [smem:[#allocation8 + $0x59]]
        %v1095 = vstv %s1094
        %v1096 = vmul.f32 %v1095, %v369
        %v1097 = vmul.f32 %v1095, %v370
        %v1100 = vrot.slane %v1096, 2
        %v1101 = vrot.slane %v1097, 2
        %v1104 = vadd.f32 %v1092, %v1100
        %v1105 = vadd.f32 %v1093, %v1101
        %s1106 = sld [smem:[#allocation8 + $0x5d]]
        %v1107 = vstv %s1106
        %v1108 = vmul.f32 %v1107, %v369
        %v1109 = vmul.f32 %v1107, %v370
        %v1112 = vrot.slane %v1108, 3
        %v1113 = vrot.slane %v1109, 3
        %v1116 = vadd.f32 %v1104, %v1112
        %v1117 = vadd.f32 %v1105, %v1113
        %s1118 = sld [smem:[#allocation8 + $0x61]]
        %v1119 = vstv %s1118
        %v1120 = vmul.f32 %v1119, %v391
        %v1121 = vmul.f32 %v1119, %v392
        %v1122 = vadd.f32 %v1116, %v1120
        %v1123 = vadd.f32 %v1117, %v1121
        %s1124 = sld [smem:[#allocation8 + $0x65]]
        %v1125 = vstv %s1124
        %v1126 = vmul.f32 %v1125, %v391
        %v1127 = vmul.f32 %v1125, %v392
        %v1130 = vrot.slane %v1126, 1
        %v1131 = vrot.slane %v1127, 1
        %v1134 = vadd.f32 %v1122, %v1130
        %v1135 = vadd.f32 %v1123, %v1131
        %s1136 = sld [smem:[#allocation8 + $0x69]]
        %v1137 = vstv %s1136
        %v1138 = vmul.f32 %v1137, %v391
        %v1139 = vmul.f32 %v1137, %v392
        %v1142 = vrot.slane %v1138, 2
        %v1143 = vrot.slane %v1139, 2
        %v1146 = vadd.f32 %v1134, %v1142
        %v1147 = vadd.f32 %v1135, %v1143
        %s1148 = sld [smem:[#allocation8 + $0x6d]]
        %v1149 = vstv %s1148
        %v1150 = vmul.f32 %v1149, %v391
        %v1151 = vmul.f32 %v1149, %v392
        %v1154 = vrot.slane %v1150, 3
        %v1155 = vrot.slane %v1151, 3
        %v1158 = vadd.f32 %v1146, %v1154
        %v1159 = vadd.f32 %v1147, %v1155
        %s1160 = sld [smem:[#allocation8 + $0x71]]
        %v1161 = vstv %s1160
        %v1162 = vmul.f32 %v1161, %v413
        %v1163 = vmul.f32 %v1161, %v414
        %v1164 = vadd.f32 %v1158, %v1162
        %v1165 = vadd.f32 %v1159, %v1163
        %s1166 = sld [smem:[#allocation8 + $0x75]]
        %v1167 = vstv %s1166
        %v1168 = vmul.f32 %v1167, %v413
        %v1169 = vmul.f32 %v1167, %v414
        %v1172 = vrot.slane %v1168, 1
        %v1173 = vrot.slane %v1169, 1
        %v1176 = vadd.f32 %v1164, %v1172
        %v1177 = vadd.f32 %v1165, %v1173
        %s1178 = sld [smem:[#allocation8 + $0x79]]
        %v1179 = vstv %s1178
        %v1180 = vmul.f32 %v1179, %v413
        %v1181 = vmul.f32 %v1179, %v414
        %v1184 = vrot.slane %v1180, 2
        %v1185 = vrot.slane %v1181, 2
        %v1188 = vadd.f32 %v1176, %v1184
        %v1189 = vadd.f32 %v1177, %v1185
        %s1190 = sld [smem:[#allocation8 + $0x7d]]
        %v1191 = vstv %s1190
        %v1192 = vmul.f32 %v1191, %v413
        %v1193 = vmul.f32 %v1191, %v414
        %v1196 = vrot.slane %v1192, 3
        %v1197 = vrot.slane %v1193, 3
        %v1200 = vadd.f32 %v1188, %v1196
        %v1201 = vadd.f32 %v1189, %v1197
        %s1202 = sld [smem:[#allocation8 + $0x81]]
        %v1203 = vstv %s1202
        %v1204 = vmul.f32 %v1203, %v435
        %v1205 = vmul.f32 %v1203, %v436
        %v1206 = vadd.f32 %v1200, %v1204
        %v1207 = vadd.f32 %v1201, %v1205
        %s1208 = sld [smem:[#allocation8 + $0x85]]
        %v1209 = vstv %s1208
        %v1210 = vmul.f32 %v1209, %v435
        %v1211 = vmul.f32 %v1209, %v436
        %v1214 = vrot.slane %v1210, 1
        %v1215 = vrot.slane %v1211, 1
        %v1218 = vadd.f32 %v1206, %v1214
        %v1219 = vadd.f32 %v1207, %v1215
        %s1220 = sld [smem:[#allocation8 + $0x89]]
        %v1221 = vstv %s1220
        %v1222 = vmul.f32 %v1221, %v435
        %v1223 = vmul.f32 %v1221, %v436
        %v1226 = vrot.slane %v1222, 2
        %v1227 = vrot.slane %v1223, 2
        %v1230 = vadd.f32 %v1218, %v1226
        %v1231 = vadd.f32 %v1219, %v1227
        %s1232 = sld [smem:[#allocation8 + $0x8d]]
        %v1233 = vstv %s1232
        %v1234 = vmul.f32 %v1233, %v435
        %v1235 = vmul.f32 %v1233, %v436
        %v1238 = vrot.slane %v1234, 3
        %v1239 = vrot.slane %v1235, 3
        %v1242 = vadd.f32 %v1230, %v1238
        %v1243 = vadd.f32 %v1231, %v1239
        %s1244 = sld [smem:[#allocation9 + $0x1]]
        %v1245 = vstv %s1244
        %v1246 = vadd.f32 %v1242, %v1245
        %v1247 = vadd.f32 %v1243, %v1245
        %v1248 = vmax.f32 %v1246, 0.0
        %v1249 = vmax.f32 %v1247, 0.0
        %v1252 = vcombine.low %v1248, %v1249
        %v1253 = vrot.slane %v1252, 7
        %v1255 = vadd.f32 %v256, %v1253
        %s1256 = sld [smem:[#allocation8 + $0x2]]
        %v1257 = vstv %s1256
        %v1258 = vmul.f32 %v1257, %v281
        %v1259 = vmul.f32 %v1257, %v282
        %s1260 = sld [smem:[#allocation8 + $0x6]]
        %v1261 = vstv %s1260
        %v1262 = vmul.f32 %v1261, %v281
        %v1263 = vmul.f32 %v1261, %v282
        %v1266 = vrot.slane %v1262, 1
        %v1267 = vrot.slane %v1263, 1
        %v1270 = vadd.f32 %v1258, %v1266
        %v1271 = vadd.f32 %v1259, %v1267
        %s1272 = sld [smem:[#allocation8 + $0xa]]
        %v1273 = vstv %s1272
        %v1274 = vmul.f32 %v1273, %v281
        %v1275 = vmul.f32 %v1273, %v282
        %v1278 = vrot.slane %v1274, 2
        %v1279 = vrot.slane %v1275, 2
        %v1282 = vadd.f32 %v1270, %v1278
        %v1283 = vadd.f32 %v1271, %v1279
        %s1284 = sld [smem:[#allocation8 + $0xe]]
        %v1285 = vstv %s1284
        %v1286 = vmul.f32 %v1285, %v281
        %v1287 = vmul.f32 %v1285, %v282
        %v1290 = vrot.slane %v1286, 3
        %v1291 = vrot.slane %v1287, 3
        %v1294 = vadd.f32 %v1282, %v1290
        %v1295 = vadd.f32 %v1283, %v1291
        %s1296 = sld [smem:[#allocation8 + $0x12]]
        %v1297 = vstv %s1296
        %v1298 = vmul.f32 %v1297, %v303
        %v1299 = vmul.f32 %v1297, %v304
        %v1300 = vadd.f32 %v1294, %v1298
        %v1301 = vadd.f32 %v1295, %v1299
        %s1302 = sld [smem:[#allocation8 + $0x16]]
        %v1303 = vstv %s1302
        %v1304 = vmul.f32 %v1303, %v303
        %v1305 = vmul.f32 %v1303, %v304
        %v1308 = vrot.slane %v1304, 1
        %v1309 = vrot.slane %v1305, 1
        %v1312 = vadd.f32 %v1300, %v1308
        %v1313 = vadd.f32 %v1301, %v1309
        %s1314 = sld [smem:[#allocation8 + $0x1a]]
        %v1315 = vstv %s1314
        %v1316 = vmul.f32 %v1315, %v303
        %v1317 = vmul.f32 %v1315, %v304
        %v1320 = vrot.slane %v1316, 2
        %v1321 = vrot.slane %v1317, 2
        %v1324 = vadd.f32 %v1312, %v1320
        %v1325 = vadd.f32 %v1313, %v1321
        %s1326 = sld [smem:[#allocation8 + $0x1e]]
        %v1327 = vstv %s1326
        %v1328 = vmul.f32 %v1327, %v303
        %v1329 = vmul.f32 %v1327, %v304
        %v1332 = vrot.slane %v1328, 3
        %v1333 = vrot.slane %v1329, 3
        %v1336 = vadd.f32 %v1324, %v1332
        %v1337 = vadd.f32 %v1325, %v1333
        %s1338 = sld [smem:[#allocation8 + $0x22]]
        %v1339 = vstv %s1338
        %v1340 = vmul.f32 %v1339, %v325
        %v1341 = vmul.f32 %v1339, %v326
        %v1342 = vadd.f32 %v1336, %v1340
        %v1343 = vadd.f32 %v1337, %v1341
        %s1344 = sld [smem:[#allocation8 + $0x26]]
        %v1345 = vstv %s1344
        %v1346 = vmul.f32 %v1345, %v325
        %v1347 = vmul.f32 %v1345, %v326
        %v1350 = vrot.slane %v1346, 1
        %v1351 = vrot.slane %v1347, 1
        %v1354 = vadd.f32 %v1342, %v1350
        %v1355 = vadd.f32 %v1343, %v1351
        %s1356 = sld [smem:[#allocation8 + $0x2a]]
        %v1357 = vstv %s1356
        %v1358 = vmul.f32 %v1357, %v325
        %v1359 = vmul.f32 %v1357, %v326
        %v1362 = vrot.slane %v1358, 2
        %v1363 = vrot.slane %v1359, 2
        %v1366 = vadd.f32 %v1354, %v1362
        %v1367 = vadd.f32 %v1355, %v1363
        %s1368 = sld [smem:[#allocation8 + $0x2e]]
        %v1369 = vstv %s1368
        %v1370 = vmul.f32 %v1369, %v325
        %v1371 = vmul.f32 %v1369, %v326
        %v1374 = vrot.slane %v1370, 3
        %v1375 = vrot.slane %v1371, 3
        %v1378 = vadd.f32 %v1366, %v1374
        %v1379 = vadd.f32 %v1367, %v1375
        %s1380 = sld [smem:[#allocation8 + $0x32]]
        %v1381 = vstv %s1380
        %v1382 = vmul.f32 %v1381, %v347
        %v1383 = vmul.f32 %v1381, %v348
        %v1384 = vadd.f32 %v1378, %v1382
        %v1385 = vadd.f32 %v1379, %v1383
        %s1386 = sld [smem:[#allocation8 + $0x36]]
        %v1387 = vstv %s1386
        %v1388 = vmul.f32 %v1387, %v347
        %v1389 = vmul.f32 %v1387, %v348
        %v1392 = vrot.slane %v1388, 1
        %v1393 = vrot.slane %v1389, 1
        %v1396 = vadd.f32 %v1384, %v1392
        %v1397 = vadd.f32 %v1385, %v1393
        %s1398 = sld [smem:[#allocation8 + $0x3a]]
        %v1399 = vstv %s1398
        %v1400 = vmul.f32 %v1399, %v347
        %v1401 = vmul.f32 %v1399, %v348
        %v1404 = vrot.slane %v1400, 2
        %v1405 = vrot.slane %v1401, 2
        %v1408 = vadd.f32 %v1396, %v1404
        %v1409 = vadd.f32 %v1397, %v1405
        %s1410 = sld [smem:[#allocation8 + $0x3e]]
        %v1411 = vstv %s1410
        %v1412 = vmul.f32 %v1411, %v347
        %v1413 = vmul.f32 %v1411, %v348
        %v1416 = vrot.slane %v1412, 3
        %v1417 = vrot.slane %v1413, 3
        %v1420 = vadd.f32 %v1408, %v1416
        %v1421 = vadd.f32 %v1409, %v1417
        %s1422 = sld [smem:[#allocation8 + $0x42]]
        %v1423 = vstv %s1422
        %v1424 = vmul.f32 %v1423, %v256
        %v1426 = vlaneseq
        %v1427 = vshrl.u32 %v1426, 7
        %v1428 = vsub.s32 0, %v1427
        %v1429 = vrot.slane %v1424, %v1428
        %v1430 = vlaneseq
        %v1431 = vshrl.u32 %v1430, 7
        %v1432 = vsub.s32 4, %v1431
        %v1433 = vrot.slane %v1424, %v1432
        %v1436 = vadd.f32 %v1420, %v1429
        %v1437 = vadd.f32 %v1421, %v1433
        %s1438 = sld [smem:[#allocation8 + $0x46]]
        %v1439 = vstv %s1438
        %v1440 = vmul.f32 %v1439, %v256
        %v1442 = vlaneseq
        %v1443 = vshrl.u32 %v1442, 7
        %v1444 = vsub.s32 1, %v1443
        %v1445 = vrot.slane %v1440, %v1444
        %v1446 = vlaneseq
        %v1447 = vshrl.u32 %v1446, 7
        %v1448 = vsub.s32 5, %v1447
        %v1449 = vrot.slane %v1440, %v1448
        %v1452 = vadd.f32 %v1436, %v1445
        %v1453 = vadd.f32 %v1437, %v1449
        %s1454 = sld [smem:[#allocation8 + $0x4a]]
        %v1455 = vstv %s1454
        %v1456 = vmul.f32 %v1455, %v256
        %v1458 = vlaneseq
        %v1459 = vshrl.u32 %v1458, 7
        %v1460 = vsub.s32 2, %v1459
        %v1461 = vrot.slane %v1456, %v1460
        %v1462 = vlaneseq
        %v1463 = vshrl.u32 %v1462, 7
        %v1464 = vsub.s32 6, %v1463
        %v1465 = vrot.slane %v1456, %v1464
        %v1468 = vadd.f32 %v1452, %v1461
        %v1469 = vadd.f32 %v1453, %v1465
        %s1470 = sld [smem:[#allocation8 + $0x4e]]
        %v1471 = vstv %s1470
        %v1472 = vmul.f32 %v1471, %v256
        %v1474 = vlaneseq
        %v1475 = vshrl.u32 %v1474, 7
        %v1476 = vsub.s32 3, %v1475
        %v1477 = vrot.slane %v1472, %v1476
        %v1478 = vlaneseq
        %v1479 = vshrl.u32 %v1478, 7
        %v1480 = vsub.s32 7, %v1479
        %v1481 = vrot.slane %v1472, %v1480
        %v1484 = vadd.f32 %v1468, %v1477
        %v1485 = vadd.f32 %v1469, %v1481
        %s1486 = sld [smem:[#allocation8 + $0x52]]
        %v1487 = vstv %s1486
        %v1488 = vmul.f32 %v1487, %v369
        %v1489 = vmul.f32 %v1487, %v370
        %v1490 = vadd.f32 %v1484, %v1488
        %v1491 = vadd.f32 %v1485, %v1489
        %s1492 = sld [smem:[#allocation8 + $0x56]]
        %v1493 = vstv %s1492
        %v1494 = vmul.f32 %v1493, %v369
        %v1495 = vmul.f32 %v1493, %v370
        %v1498 = vrot.slane %v1494, 1
        %v1499 = vrot.slane %v1495, 1
        %v1502 = vadd.f32 %v1490, %v1498
        %v1503 = vadd.f32 %v1491, %v1499
        %s1504 = sld [smem:[#allocation8 + $0x5a]]
        %v1505 = vstv %s1504
        %v1506 = vmul.f32 %v1505, %v369
        %v1507 = vmul.f32 %v1505, %v370
        %v1510 = vrot.slane %v1506, 2
        %v1511 = vrot.slane %v1507, 2
        %v1514 = vadd.f32 %v1502, %v1510
        %v1515 = vadd.f32 %v1503, %v1511
        %s1516 = sld [smem:[#allocation8 + $0x5e]]
        %v1517 = vstv %s1516
        %v1518 = vmul.f32 %v1517, %v369
        %v1519 = vmul.f32 %v1517, %v370
        %v1522 = vrot.slane %v1518, 3
        %v1523 = vrot.slane %v1519, 3
        %v1526 = vadd.f32 %v1514, %v1522
        %v1527 = vadd.f32 %v1515, %v1523
        %s1528 = sld [smem:[#allocation8 + $0x62]]
        %v1529 = vstv %s1528
        %v1530 = vmul.f32 %v1529, %v391
        %v1531 = vmul.f32 %v1529, %v392
        %v1532 = vadd.f32 %v1526, %v1530
        %v1533 = vadd.f32 %v1527, %v1531
        %s1534 = sld [smem:[#allocation8 + $0x66]]
        %v1535 = vstv %s1534
        %v1536 = vmul.f32 %v1535, %v391
        %v1537 = vmul.f32 %v1535, %v392
        %v1540 = vrot.slane %v1536, 1
        %v1541 = vrot.slane %v1537, 1
        %v1544 = vadd.f32 %v1532, %v1540
        %v1545 = vadd.f32 %v1533, %v1541
        %s1546 = sld [smem:[#allocation8 + $0x6a]]
        %v1547 = vstv %s1546
        %v1548 = vmul.f32 %v1547, %v391
        %v1549 = vmul.f32 %v1547, %v392
        %v1552 = vrot.slane %v1548, 2
        %v1553 = vrot.slane %v1549, 2
        %v1556 = vadd.f32 %v1544, %v1552
        %v1557 = vadd.f32 %v1545, %v1553
        %s1558 = sld [smem:[#allocation8 + $0x6e]]
        %v1559 = vstv %s1558
        %v1560 = vmul.f32 %v1559, %v391
        %v1561 = vmul.f32 %v1559, %v392
        %v1564 = vrot.slane %v1560, 3
        %v1565 = vrot.slane %v1561, 3
        %v1568 = vadd.f32 %v1556, %v1564
        %v1569 = vadd.f32 %v1557, %v1565
        %s1570 = sld [smem:[#allocation8 + $0x72]]
        %v1571 = vstv %s1570
        %v1572 = vmul.f32 %v1571, %v413
        %v1573 = vmul.f32 %v1571, %v414
        %v1574 = vadd.f32 %v1568, %v1572
        %v1575 = vadd.f32 %v1569, %v1573
        %s1576 = sld [smem:[#allocation8 + $0x76]]
        %v1577 = vstv %s1576
        %v1578 = vmul.f32 %v1577, %v413
        %v1579 = vmul.f32 %v1577, %v414
        %v1582 = vrot.slane %v1578, 1
        %v1583 = vrot.slane %v1579, 1
        %v1586 = vadd.f32 %v1574, %v1582
        %v1587 = vadd.f32 %v1575, %v1583
        %s1588 = sld [smem:[#allocation8 + $0x7a]]
        %v1589 = vstv %s1588
        %v1590 = vmul.f32 %v1589, %v413
        %v1591 = vmul.f32 %v1589, %v414
        %v1594 = vrot.slane %v1590, 2
        %v1595 = vrot.slane %v1591, 2
        %v1598 = vadd.f32 %v1586, %v1594
        %v1599 = vadd.f32 %v1587, %v1595
        %s1600 = sld [smem:[#allocation8 + $0x7e]]
        %v1601 = vstv %s1600
        %v1602 = vmul.f32 %v1601, %v413
        %v1603 = vmul.f32 %v1601, %v414
        %v1606 = vrot.slane %v1602, 3
        %v1607 = vrot.slane %v1603, 3
        %v1610 = vadd.f32 %v1598, %v1606
        %v1611 = vadd.f32 %v1599, %v1607
        %s1612 = sld [smem:[#allocation8 + $0x82]]
        %v1613 = vstv %s1612
        %v1614 = vmul.f32 %v1613, %v435
        %v1615 = vmul.f32 %v1613, %v436
        %v1616 = vadd.f32 %v1610, %v1614
        %v1617 = vadd.f32 %v1611, %v1615
        %s1618 = sld [smem:[#allocation8 + $0x86]]
        %v1619 = vstv %s1618
        %v1620 = vmul.f32 %v1619, %v435
        %v1621 = vmul.f32 %v1619, %v436
        %v1624 = vrot.slane %v1620, 1
        %v1625 = vrot.slane %v1621, 1
        %v1628 = vadd.f32 %v1616, %v1624
        %v1629 = vadd.f32 %v1617, %v1625
        %s1630 = sld [smem:[#allocation8 + $0x8a]]
        %v1631 = vstv %s1630
        %v1632 = vmul.f32 %v1631, %v435
        %v1633 = vmul.f32 %v1631, %v436
        %v1636 = vrot.slane %v1632, 2
        %v1637 = vrot.slane %v1633, 2
        %v1640 = vadd.f32 %v1628, %v1636
        %v1641 = vadd.f32 %v1629, %v1637
        %s1642 = sld [smem:[#allocation8 + $0x8e]]
        %v1643 = vstv %s1642
        %v1644 = vmul.f32 %v1643, %v435
        %v1645 = vmul.f32 %v1643, %v436
        %v1648 = vrot.slane %v1644, 3
        %v1649 = vrot.slane %v1645, 3
        %v1652 = vadd.f32 %v1640, %v1648
        %v1653 = vadd.f32 %v1641, %v1649
        %s1654 = sld [smem:[#allocation9 + $0x2]]
        %v1655 = vstv %s1654
        %v1656 = vadd.f32 %v1652, %v1655
        %v1657 = vadd.f32 %v1653, %v1655
        %v1658 = vmax.f32 %v1656, 0.0
        %v1659 = vmax.f32 %v1657, 0.0
        %v1662 = vcombine.low %v1658, %v1659
        %v1663 = vrot.slane %v1662, 6
        %v1665 = vadd.f32 %v256, %v1663
        %s1666 = sld [smem:[#allocation8 + $0x3]]
        %v1667 = vstv %s1666
        %v1668 = vmul.f32 %v1667, %v281
        %v1669 = vmul.f32 %v1667, %v282
        %s1670 = sld [smem:[#allocation8 + $0x7]]
        %v1671 = vstv %s1670
        %v1672 = vmul.f32 %v1671, %v281
        %v1673 = vmul.f32 %v1671, %v282
        %v1676 = vrot.slane %v1672, 1
        %v1677 = vrot.slane %v1673, 1
        %v1680 = vadd.f32 %v1668, %v1676
        %v1681 = vadd.f32 %v1669, %v1677
        %s1682 = sld [smem:[#allocation8 + $0xb]]
        %v1683 = vstv %s1682
        %v1684 = vmul.f32 %v1683, %v281
        %v1685 = vmul.f32 %v1683, %v282
        %v1688 = vrot.slane %v1684, 2
        %v1689 = vrot.slane %v1685, 2
        %v1692 = vadd.f32 %v1680, %v1688
        %v1693 = vadd.f32 %v1681, %v1689
        %s1694 = sld [smem:[#allocation8 + $0xf]]
        %v1695 = vstv %s1694
        %v1696 = vmul.f32 %v1695, %v281
        %v1697 = vmul.f32 %v1695, %v282
        %v1700 = vrot.slane %v1696, 3
        %v1701 = vrot.slane %v1697, 3
        %v1704 = vadd.f32 %v1692, %v1700
        %v1705 = vadd.f32 %v1693, %v1701
        %s1706 = sld [smem:[#allocation8 + $0x13]]
        %v1707 = vstv %s1706
        %v1708 = vmul.f32 %v1707, %v303
        %v1709 = vmul.f32 %v1707, %v304
        %v1710 = vadd.f32 %v1704, %v1708
        %v1711 = vadd.f32 %v1705, %v1709
        %s1712 = sld [smem:[#allocation8 + $0x17]]
        %v1713 = vstv %s1712
        %v1714 = vmul.f32 %v1713, %v303
        %v1715 = vmul.f32 %v1713, %v304
        %v1718 = vrot.slane %v1714, 1
        %v1719 = vrot.slane %v1715, 1
        %v1722 = vadd.f32 %v1710, %v1718
        %v1723 = vadd.f32 %v1711, %v1719
        %s1724 = sld [smem:[#allocation8 + $0x1b]]
        %v1725 = vstv %s1724
        %v1726 = vmul.f32 %v1725, %v303
        %v1727 = vmul.f32 %v1725, %v304
        %v1730 = vrot.slane %v1726, 2
        %v1731 = vrot.slane %v1727, 2
        %v1734 = vadd.f32 %v1722, %v1730
        %v1735 = vadd.f32 %v1723, %v1731
        %s1736 = sld [smem:[#allocation8 + $0x1f]]
        %v1737 = vstv %s1736
        %v1738 = vmul.f32 %v1737, %v303
        %v1739 = vmul.f32 %v1737, %v304
        %v1742 = vrot.slane %v1738, 3
        %v1743 = vrot.slane %v1739, 3
        %v1746 = vadd.f32 %v1734, %v1742
        %v1747 = vadd.f32 %v1735, %v1743
        %s1748 = sld [smem:[#allocation8 + $0x23]]
        %v1749 = vstv %s1748
        %v1750 = vmul.f32 %v1749, %v325
        %v1751 = vmul.f32 %v1749, %v326
        %v1752 = vadd.f32 %v1746, %v1750
        %v1753 = vadd.f32 %v1747, %v1751
        %s1754 = sld [smem:[#allocation8 + $0x27]]
        %v1755 = vstv %s1754
        %v1756 = vmul.f32 %v1755, %v325
        %v1757 = vmul.f32 %v1755, %v326
        %v1760 = vrot.slane %v1756, 1
        %v1761 = vrot.slane %v1757, 1
        %v1764 = vadd.f32 %v1752, %v1760
        %v1765 = vadd.f32 %v1753, %v1761
        %s1766 = sld [smem:[#allocation8 + $0x2b]]
        %v1767 = vstv %s1766
        %v1768 = vmul.f32 %v1767, %v325
        %v1769 = vmul.f32 %v1767, %v326
        %v1772 = vrot.slane %v1768, 2
        %v1773 = vrot.slane %v1769, 2
        %v1776 = vadd.f32 %v1764, %v1772
        %v1777 = vadd.f32 %v1765, %v1773
        %s1778 = sld [smem:[#allocation8 + $0x2f]]
        %v1779 = vstv %s1778
        %v1780 = vmul.f32 %v1779, %v325
        %v1781 = vmul.f32 %v1779, %v326
        %v1784 = vrot.slane %v1780, 3
        %v1785 = vrot.slane %v1781, 3
        %v1788 = vadd.f32 %v1776, %v1784
        %v1789 = vadd.f32 %v1777, %v1785
        %s1790 = sld [smem:[#allocation8 + $0x33]]
        %v1791 = vstv %s1790
        %v1792 = vmul.f32 %v1791, %v347
        %v1793 = vmul.f32 %v1791, %v348
        %v1794 = vadd.f32 %v1788, %v1792
        %v1795 = vadd.f32 %v1789, %v1793
        %s1796 = sld [smem:[#allocation8 + $0x37]]
        %v1797 = vstv %s1796
        %v1798 = vmul.f32 %v1797, %v347
        %v1799 = vmul.f32 %v1797, %v348
        %v1802 = vrot.slane %v1798, 1
        %v1803 = vrot.slane %v1799, 1
        %v1806 = vadd.f32 %v1794, %v1802
        %v1807 = vadd.f32 %v1795, %v1803
        %s1808 = sld [smem:[#allocation8 + $0x3b]]
        %v1809 = vstv %s1808
        %v1810 = vmul.f32 %v1809, %v347
        %v1811 = vmul.f32 %v1809, %v348
        %v1814 = vrot.slane %v1810, 2
        %v1815 = vrot.slane %v1811, 2
        %v1818 = vadd.f32 %v1806, %v1814
        %v1819 = vadd.f32 %v1807, %v1815
        %s1820 = sld [smem:[#allocation8 + $0x3f]]
        %v1821 = vstv %s1820
        %v1822 = vmul.f32 %v1821, %v347
        %v1823 = vmul.f32 %v1821, %v348
        %v1826 = vrot.slane %v1822, 3
        %v1827 = vrot.slane %v1823, 3
        %v1830 = vadd.f32 %v1818, %v1826
        %v1831 = vadd.f32 %v1819, %v1827
        %s1832 = sld [smem:[#allocation8 + $0x43]]
        %v1833 = vstv %s1832
        %v1834 = vmul.f32 %v1833, %v256
        %v1836 = vlaneseq
        %v1837 = vshrl.u32 %v1836, 7
        %v1838 = vsub.s32 0, %v1837
        %v1839 = vrot.slane %v1834, %v1838
        %v1840 = vlaneseq
        %v1841 = vshrl.u32 %v1840, 7
        %v1842 = vsub.s32 4, %v1841
        %v1843 = vrot.slane %v1834, %v1842
        %v1846 = vadd.f32 %v1830, %v1839
        %v1847 = vadd.f32 %v1831, %v1843
        %s1848 = sld [smem:[#allocation8 + $0x47]]
        %v1849 = vstv %s1848
        %v1850 = vmul.f32 %v1849, %v256
        %v1852 = vlaneseq
        %v1853 = vshrl.u32 %v1852, 7
        %v1854 = vsub.s32 1, %v1853
        %v1855 = vrot.slane %v1850, %v1854
        %v1856 = vlaneseq
        %v1857 = vshrl.u32 %v1856, 7
        %v1858 = vsub.s32 5, %v1857
        %v1859 = vrot.slane %v1850, %v1858
        %v1862 = vadd.f32 %v1846, %v1855
        %v1863 = vadd.f32 %v1847, %v1859
        %s1864 = sld [smem:[#allocation8 + $0x4b]]
        %v1865 = vstv %s1864
        %v1866 = vmul.f32 %v1865, %v256
        %v1868 = vlaneseq
        %v1869 = vshrl.u32 %v1868, 7
        %v1870 = vsub.s32 2, %v1869
        %v1871 = vrot.slane %v1866, %v1870
        %v1872 = vlaneseq
        %v1873 = vshrl.u32 %v1872, 7
        %v1874 = vsub.s32 6, %v1873
        %v1875 = vrot.slane %v1866, %v1874
        %v1878 = vadd.f32 %v1862, %v1871
        %v1879 = vadd.f32 %v1863, %v1875
        %s1880 = sld [smem:[#allocation8 + $0x4f]]
        %v1881 = vstv %s1880
        %v1882 = vmul.f32 %v1881, %v256
        %v1884 = vlaneseq
        %v1885 = vshrl.u32 %v1884, 7
        %v1886 = vsub.s32 3, %v1885
        %v1887 = vrot.slane %v1882, %v1886
        %v1888 = vlaneseq
        %v1889 = vshrl.u32 %v1888, 7
        %v1890 = vsub.s32 7, %v1889
        %v1891 = vrot.slane %v1882, %v1890
        %v1894 = vadd.f32 %v1878, %v1887
        %v1895 = vadd.f32 %v1879, %v1891
        %s1896 = sld [smem:[#allocation8 + $0x53]]
        %v1897 = vstv %s1896
        %v1898 = vmul.f32 %v1897, %v369
        %v1899 = vmul.f32 %v1897, %v370
        %v1900 = vadd.f32 %v1894, %v1898
        %v1901 = vadd.f32 %v1895, %v1899
        %s1902 = sld [smem:[#allocation8 + $0x57]]
        %v1903 = vstv %s1902
        %v1904 = vmul.f32 %v1903, %v369
        %v1905 = vmul.f32 %v1903, %v370
        %v1908 = vrot.slane %v1904, 1
        %v1909 = vrot.slane %v1905, 1
        %v1912 = vadd.f32 %v1900, %v1908
        %v1913 = vadd.f32 %v1901, %v1909
        %s1914 = sld [smem:[#allocation8 + $0x5b]]
        %v1915 = vstv %s1914
        %v1916 = vmul.f32 %v1915, %v369
        %v1917 = vmul.f32 %v1915, %v370
        %v1920 = vrot.slane %v1916, 2
        %v1921 = vrot.slane %v1917, 2
        %v1924 = vadd.f32 %v1912, %v1920
        %v1925 = vadd.f32 %v1913, %v1921
        %s1926 = sld [smem:[#allocation8 + $0x5f]]
        %v1927 = vstv %s1926
        %v1928 = vmul.f32 %v1927, %v369
        %v1929 = vmul.f32 %v1927, %v370
        %v1932 = vrot.slane %v1928, 3
        %v1933 = vrot.slane %v1929, 3
        %v1936 = vadd.f32 %v1924, %v1932
        %v1937 = vadd.f32 %v1925, %v1933
        %s1938 = sld [smem:[#allocation8 + $0x63]]
        %v1939 = vstv %s1938
        %v1940 = vmul.f32 %v1939, %v391
        %v1941 = vmul.f32 %v1939, %v392
        %v1942 = vadd.f32 %v1936, %v1940
        %v1943 = vadd.f32 %v1937, %v1941
        %s1944 = sld [smem:[#allocation8 + $0x67]]
        %v1945 = vstv %s1944
        %v1946 = vmul.f32 %v1945, %v391
        %v1947 = vmul.f32 %v1945, %v392
        %v1950 = vrot.slane %v1946, 1
        %v1951 = vrot.slane %v1947, 1
        %v1954 = vadd.f32 %v1942, %v1950
        %v1955 = vadd.f32 %v1943, %v1951
        %s1956 = sld [smem:[#allocation8 + $0x6b]]
        %v1957 = vstv %s1956
        %v1958 = vmul.f32 %v1957, %v391
        %v1959 = vmul.f32 %v1957, %v392
        %v1962 = vrot.slane %v1958, 2
        %v1963 = vrot.slane %v1959, 2
        %v1966 = vadd.f32 %v1954, %v1962
        %v1967 = vadd.f32 %v1955, %v1963
        %s1968 = sld [smem:[#allocation8 + $0x6f]]
        %v1969 = vstv %s1968
        %v1970 = vmul.f32 %v1969, %v391
        %v1971 = vmul.f32 %v1969, %v392
        %v1974 = vrot.slane %v1970, 3
        %v1975 = vrot.slane %v1971, 3
        %v1978 = vadd.f32 %v1966, %v1974
        %v1979 = vadd.f32 %v1967, %v1975
        %s1980 = sld [smem:[#allocation8 + $0x73]]
        %v1981 = vstv %s1980
        %v1982 = vmul.f32 %v1981, %v413
        %v1983 = vmul.f32 %v1981, %v414
        %v1984 = vadd.f32 %v1978, %v1982
        %v1985 = vadd.f32 %v1979, %v1983
        %s1986 = sld [smem:[#allocation8 + $0x77]]
        %v1987 = vstv %s1986
        %v1988 = vmul.f32 %v1987, %v413
        %v1989 = vmul.f32 %v1987, %v414
        %v1992 = vrot.slane %v1988, 1
        %v1993 = vrot.slane %v1989, 1
        %v1996 = vadd.f32 %v1984, %v1992
        %v1997 = vadd.f32 %v1985, %v1993
        %s1998 = sld [smem:[#allocation8 + $0x7b]]
        %v1999 = vstv %s1998
        %v2000 = vmul.f32 %v1999, %v413
        %v2001 = vmul.f32 %v1999, %v414
        %v2004 = vrot.slane %v2000, 2
        %v2005 = vrot.slane %v2001, 2
        %v2008 = vadd.f32 %v1996, %v2004
        %v2009 = vadd.f32 %v1997, %v2005
        %s2010 = sld [smem:[#allocation8 + $0x7f]]
        %v2011 = vstv %s2010
        %v2012 = vmul.f32 %v2011, %v413
        %v2013 = vmul.f32 %v2011, %v414
        %v2016 = vrot.slane %v2012, 3
        %v2017 = vrot.slane %v2013, 3
        %v2020 = vadd.f32 %v2008, %v2016
        %v2021 = vadd.f32 %v2009, %v2017
        %s2022 = sld [smem:[#allocation8 + $0x83]]
        %v2023 = vstv %s2022
        %v2024 = vmul.f32 %v2023, %v435
        %v2025 = vmul.f32 %v2023, %v436
        %v2026 = vadd.f32 %v2020, %v2024
        %v2027 = vadd.f32 %v2021, %v2025
        %s2028 = sld [smem:[#allocation8 + $0x87]]
        %v2029 = vstv %s2028
        %v2030 = vmul.f32 %v2029, %v435
        %v2031 = vmul.f32 %v2029, %v436
        %v2034 = vrot.slane %v2030, 1
        %v2035 = vrot.slane %v2031, 1
        %v2038 = vadd.f32 %v2026, %v2034
        %v2039 = vadd.f32 %v2027, %v2035
        %s2040 = sld [smem:[#allocation8 + $0x8b]]
        %v2041 = vstv %s2040
        %v2042 = vmul.f32 %v2041, %v435
        %v2043 = vmul.f32 %v2041, %v436
        %v2046 = vrot.slane %v2042, 2
        %v2047 = vrot.slane %v2043, 2
        %v2050 = vadd.f32 %v2038, %v2046
        %v2051 = vadd.f32 %v2039, %v2047
        %s2052 = sld [smem:[#allocation8 + $0x8f]]
        %v2053 = vstv %s2052
        %v2054 = vmul.f32 %v2053, %v435
        %v2055 = vmul.f32 %v2053, %v436
        %v2058 = vrot.slane %v2054, 3
        %v2059 = vrot.slane %v2055, 3
        %v2062 = vadd.f32 %v2050, %v2058
        %v2063 = vadd.f32 %v2051, %v2059
        %s2064 = sld [smem:[#allocation9 + $0x3]]
        %v2065 = vstv %s2064
        %v2066 = vadd.f32 %v2062, %v2065
        %v2067 = vadd.f32 %v2063, %v2065
        %v2068 = vmax.f32 %v2066, 0.0
        %v2069 = vmax.f32 %v2067, 0.0
        %v2072 = vcombine.low %v2068, %v2069
        %v2073 = vrot.slane %v2072, 5
        %v2075 = vadd.f32 %v256, %v2073
        %v2077 = vlaneseq
        %v2078 = vshrl.u32 %v2077, 7
        %v2079 = vsub.s32 0, %v2078
        %v2080 = vrot.slane %v845, %v2079
        %v2081 = vlaneseq
        %v2082 = vshrl.u32 %v2081, 7
        %v2083 = vsub.s32 4, %v2082
        %v2084 = vrot.slane %v845, %v2083
        %v2088 = vlaneseq
        %v2089 = vshrl.u32 %v2088, 7
        %v2090 = vsub.s32 1, %v2089
        %v2091 = vrot.slane %v1255, %v2090
        %v2092 = vlaneseq
        %v2093 = vshrl.u32 %v2092, 7
        %v2094 = vsub.s32 5, %v2093
        %v2095 = vrot.slane %v1255, %v2094
        %v2099 = vlaneseq
        %v2100 = vshrl.u32 %v2099, 7
        %v2101 = vsub.s32 2, %v2100
        %v2102 = vrot.slane %v1665, %v2101
        %v2103 = vlaneseq
        %v2104 = vshrl.u32 %v2103, 7
        %v2105 = vsub.s32 6, %v2104
        %v2106 = vrot.slane %v1665, %v2105
        %v2110 = vlaneseq
        %v2111 = vshrl.u32 %v2110, 7
        %v2112 = vsub.s32 3, %v2111
        %v2113 = vrot.slane %v2075, %v2112
        %v2114 = vlaneseq
        %v2115 = vshrl.u32 %v2114, 7
        %v2116 = vsub.s32 7, %v2115
        %v2117 = vrot.slane %v2075, %v2116
        %vm2120 = vcmask 1040384
        %v2121 = vsel %vm2120, %v2080, %v2091
        %v2122 = vsel %vm2120, %v2084, %v2095
        %vm2123 = vcmask 1041408
        %v2124 = vsel %vm2123, %v2121, %v2102
        %v2125 = vsel %vm2123, %v2122, %v2106
        %vm2126 = vcmask 1042432
        %v2127 = vsel %vm2126, %v2124, %v2113
        %v2128 = vsel %vm2126, %v2125, %v2117
        %2129 = vrot.lane.b32.xlu0 %v2127, 17
        %v2130 = vpop.permute.xlu0 %2129
        %2131 = vrot.lane.b32.xlu0 %v2128, 17
        %v2132 = vpop.permute.xlu0 %2131
        %v2133 = vsel %vm266, %v2130, %v2132
        %v2134 = vsel %vm266, %v2132, %v2130
        %v2135 = vmul.f32 %v2134, %v274
        %v2136 = vmul.f32 %v2133, %v278
        %2137 = vrot.lane.b32.xlu0 %v2127, 16
        %v2138 = vpop.permute.xlu0 %2137
        %2139 = vrot.lane.b32.xlu0 %v2128, 16
        %v2140 = vpop.permute.xlu0 %2139
        %v2141 = vsel %vm287, %v2138, %v2140
        %v2142 = vsel %vm287, %v2140, %v2138
        %v2143 = vmul.f32 %v2142, %v296
        %v2144 = vmul.f32 %v2141, %v300
        %2145 = vrot.lane.b32.xlu0 %v2127, 15
        %v2146 = vpop.permute.xlu0 %2145
        %2147 = vrot.lane.b32.xlu0 %v2128, 15
        %v2148 = vpop.permute.xlu0 %2147
        %v2149 = vsel %vm309, %v2146, %v2148
        %v2150 = vsel %vm309, %v2148, %v2146
        %v2151 = vmul.f32 %v2150, %v318
        %v2152 = vmul.f32 %v2149, %v322
        %2153 = vrot.lane.b32.xlu0 %v2127, 1
        %v2154 = vpop.permute.xlu0 %2153
        %2155 = vrot.lane.b32.xlu0 %v2128, 1
        %v2156 = vpop.permute.xlu0 %2155
        %v2157 = vsel %vm331, %v2154, %v2156
        %v2158 = vsel %vm331, %v2156, %v2154
        %v2159 = vmul.f32 %v2158, %v340
        %v2160 = vmul.f32 %v2157, %v344
        %2161 = vrot.lane.b32.xlu0 %v2127, 127
        %v2162 = vpop.permute.xlu0 %2161
        %2163 = vrot.lane.b32.xlu0 %v2128, 127
        %v2164 = vpop.permute.xlu0 %2163
        %v2165 = vsel %vm353, %v2162, %v2164
        %v2166 = vsel %vm353, %v2164, %v2162
        %v2167 = vmul.f32 %v2165, %v362
        %v2168 = vmul.f32 %v2166, %v366
        %2169 = vrot.lane.b32.xlu0 %v2127, 113
        %v2170 = vpop.permute.xlu0 %2169
        %2171 = vrot.lane.b32.xlu0 %v2128, 113
        %v2172 = vpop.permute.xlu0 %2171
        %v2173 = vsel %vm375, %v2170, %v2172
        %v2174 = vsel %vm375, %v2172, %v2170
        %v2175 = vmul.f32 %v2173, %v384
        %v2176 = vmul.f32 %v2174, %v388
        %2177 = vrot.lane.b32.xlu0 %v2127, 112
        %v2178 = vpop.permute.xlu0 %2177
        %2179 = vrot.lane.b32.xlu0 %v2128, 112
        %v2180 = vpop.permute.xlu0 %2179
        %v2181 = vsel %vm397, %v2178, %v2180
        %v2182 = vsel %vm397, %v2180, %v2178
        %v2183 = vmul.f32 %v2181, %v406
        %v2184 = vmul.f32 %v2182, %v410
        %2185 = vrot.lane.b32.xlu0 %v2127, 111
        %v2186 = vpop.permute.xlu0 %2185
        %2187 = vrot.lane.b32.xlu0 %v2128, 111
        %v2188 = vpop.permute.xlu0 %2187
        %v2189 = vsel %vm419, %v2186, %v2188
        %v2190 = vsel %vm419, %v2188, %v2186
        %v2191 = vmul.f32 %v2189, %v428
        %v2192 = vmul.f32 %v2190, %v432
        %s2193 = sld [smem:[#allocation8 + $0x90]]
        %v2194 = vstv %s2193
        %v2195 = vmul.f32 %v2194, %v2135
        %v2196 = vmul.f32 %v2194, %v2136
        %s2197 = sld [smem:[#allocation8 + $0x94]]
        %v2198 = vstv %s2197
        %v2199 = vmul.f32 %v2198, %v2135
        %v2200 = vmul.f32 %v2198, %v2136
        %v2203 = vrot.slane %v2199, 1
        %v2204 = vrot.slane %v2200, 1
        %v2207 = vadd.f32 %v2195, %v2203
        %v2208 = vadd.f32 %v2196, %v2204
        %s2209 = sld [smem:[#allocation8 + $0x98]]
        %v2210 = vstv %s2209
        %v2211 = vmul.f32 %v2210, %v2135
        %v2212 = vmul.f32 %v2210, %v2136
        %v2215 = vrot.slane %v2211, 2
        %v2216 = vrot.slane %v2212, 2
        %v2219 = vadd.f32 %v2207, %v2215
        %v2220 = vadd.f32 %v2208, %v2216
        %s2221 = sld [smem:[#allocation8 + $0x9c]]
        %v2222 = vstv %s2221
        %v2223 = vmul.f32 %v2222, %v2135
        %v2224 = vmul.f32 %v2222, %v2136
        %v2227 = vrot.slane %v2223, 3
        %v2228 = vrot.slane %v2224, 3
        %v2231 = vadd.f32 %v2219, %v2227
        %v2232 = vadd.f32 %v2220, %v2228
        %s2233 = sld [smem:[#allocation8 + $0xa0]]
        %v2234 = vstv %s2233
        %v2235 = vmul.f32 %v2234, %v2143
        %v2236 = vmul.f32 %v2234, %v2144
        %v2237 = vadd.f32 %v2231, %v2235
        %v2238 = vadd.f32 %v2232, %v2236
        %s2239 = sld [smem:[#allocation8 + $0xa4]]
        %v2240 = vstv %s2239
        %v2241 = vmul.f32 %v2240, %v2143
        %v2242 = vmul.f32 %v2240, %v2144
        %v2245 = vrot.slane %v2241, 1
        %v2246 = vrot.slane %v2242, 1
        %v2249 = vadd.f32 %v2237, %v2245
        %v2250 = vadd.f32 %v2238, %v2246
        %s2251 = sld [smem:[#allocation8 + $0xa8]]
        %v2252 = vstv %s2251
        %v2253 = vmul.f32 %v2252, %v2143
        %v2254 = vmul.f32 %v2252, %v2144
        %v2257 = vrot.slane %v2253, 2
        %v2258 = vrot.slane %v2254, 2
        %v2261 = vadd.f32 %v2249, %v2257
        %v2262 = vadd.f32 %v2250, %v2258
        %s2263 = sld [smem:[#allocation8 + $0xac]]
        %v2264 = vstv %s2263
        %v2265 = vmul.f32 %v2264, %v2143
        %v2266 = vmul.f32 %v2264, %v2144
        %v2269 = vrot.slane %v2265, 3
        %v2270 = vrot.slane %v2266, 3
        %v2273 = vadd.f32 %v2261, %v2269
        %v2274 = vadd.f32 %v2262, %v2270
        %s2275 = sld [smem:[#allocation8 + $0xb0]]
        %v2276 = vstv %s2275
        %v2277 = vmul.f32 %v2276, %v2151
        %v2278 = vmul.f32 %v2276, %v2152
        %v2279 = vadd.f32 %v2273, %v2277
        %v2280 = vadd.f32 %v2274, %v2278
        %s2281 = sld [smem:[#allocation8 + $0xb4]]
        %v2282 = vstv %s2281
        %v2283 = vmul.f32 %v2282, %v2151
        %v2284 = vmul.f32 %v2282, %v2152
        %v2287 = vrot.slane %v2283, 1
        %v2288 = vrot.slane %v2284, 1
        %v2291 = vadd.f32 %v2279, %v2287
        %v2292 = vadd.f32 %v2280, %v2288
        %s2293 = sld [smem:[#allocation8 + $0xb8]]
        %v2294 = vstv %s2293
        %v2295 = vmul.f32 %v2294, %v2151
        %v2296 = vmul.f32 %v2294, %v2152
        %v2299 = vrot.slane %v2295, 2
        %v2300 = vrot.slane %v2296, 2
        %v2303 = vadd.f32 %v2291, %v2299
        %v2304 = vadd.f32 %v2292, %v2300
        %s2305 = sld [smem:[#allocation8 + $0xbc]]
        %v2306 = vstv %s2305
        %v2307 = vmul.f32 %v2306, %v2151
        %v2308 = vmul.f32 %v2306, %v2152
        %v2311 = vrot.slane %v2307, 3
        %v2312 = vrot.slane %v2308, 3
        %v2315 = vadd.f32 %v2303, %v2311
        %v2316 = vadd.f32 %v2304, %v2312
        %s2317 = sld [smem:[#allocation8 + $0xc0]]
        %v2318 = vstv %s2317
        %v2319 = vmul.f32 %v2318, %v2159
        %v2320 = vmul.f32 %v2318, %v2160
        %v2321 = vadd.f32 %v2315, %v2319
        %v2322 = vadd.f32 %v2316, %v2320
        %s2323 = sld [smem:[#allocation8 + $0xc4]]
        %v2324 = vstv %s2323
        %v2325 = vmul.f32 %v2324, %v2159
        %v2326 = vmul.f32 %v2324, %v2160
        %v2329 = vrot.slane %v2325, 1
        %v2330 = vrot.slane %v2326, 1
        %v2333 = vadd.f32 %v2321, %v2329
        %v2334 = vadd.f32 %v2322, %v2330
        %s2335 = sld [smem:[#allocation8 + $0xc8]]
        %v2336 = vstv %s2335
        %v2337 = vmul.f32 %v2336, %v2159
        %v2338 = vmul.f32 %v2336, %v2160
        %v2341 = vrot.slane %v2337, 2
        %v2342 = vrot.slane %v2338, 2
        %v2345 = vadd.f32 %v2333, %v2341
        %v2346 = vadd.f32 %v2334, %v2342
        %s2347 = sld [smem:[#allocation8 + $0xcc]]
        %v2348 = vstv %s2347
        %v2349 = vmul.f32 %v2348, %v2159
        %v2350 = vmul.f32 %v2348, %v2160
        %v2353 = vrot.slane %v2349, 3
        %v2354 = vrot.slane %v2350, 3
        %v2357 = vadd.f32 %v2345, %v2353
        %v2358 = vadd.f32 %v2346, %v2354
        %s2359 = sld [smem:[#allocation8 + $0xd0]]
        %v2360 = vstv %s2359
        %v2361 = vmul.f32 %v2360, %v2127
        %v2362 = vmul.f32 %v2360, %v2128
        %v2363 = vadd.f32 %v2357, %v2361
        %v2364 = vadd.f32 %v2358, %v2362
        %s2365 = sld [smem:[#allocation8 + $0xd4]]
        %v2366 = vstv %s2365
        %v2367 = vmul.f32 %v2366, %v2127
        %v2368 = vmul.f32 %v2366, %v2128
        %v2371 = vrot.slane %v2367, 1
        %v2372 = vrot.slane %v2368, 1
        %v2375 = vadd.f32 %v2363, %v2371
        %v2376 = vadd.f32 %v2364, %v2372
        %s2377 = sld [smem:[#allocation8 + $0xd8]]
        %v2378 = vstv %s2377
        %v2379 = vmul.f32 %v2378, %v2127
        %v2380 = vmul.f32 %v2378, %v2128
        %v2383 = vrot.slane %v2379, 2
        %v2384 = vrot.slane %v2380, 2
        %v2387 = vadd.f32 %v2375, %v2383
        %v2388 = vadd.f32 %v2376, %v2384
        %s2389 = sld [smem:[#allocation8 + $0xdc]]
        %v2390 = vstv %s2389
        %v2391 = vmul.f32 %v2390, %v2127
        %v2392 = vmul.f32 %v2390, %v2128
        %v2395 = vrot.slane %v2391, 3
        %v2396 = vrot.slane %v2392, 3
        %v2399 = vadd.f32 %v2387, %v2395
        %v2400 = vadd.f32 %v2388, %v2396
        %s2401 = sld [smem:[#allocation8 + $0xe0]]
        %v2402 = vstv %s2401
        %v2403 = vmul.f32 %v2402, %v2167
        %v2404 = vmul.f32 %v2402, %v2168
        %v2405 = vadd.f32 %v2399, %v2403
        %v2406 = vadd.f32 %v2400, %v2404
        %s2407 = sld [smem:[#allocation8 + $0xe4]]
        %v2408 = vstv %s2407
        %v2409 = vmul.f32 %v2408, %v2167
        %v2410 = vmul.f32 %v2408, %v2168
        %v2413 = vrot.slane %v2409, 1
        %v2414 = vrot.slane %v2410, 1
        %v2417 = vadd.f32 %v2405, %v2413
        %v2418 = vadd.f32 %v2406, %v2414
        %s2419 = sld [smem:[#allocation8 + $0xe8]]
        %v2420 = vstv %s2419
        %v2421 = vmul.f32 %v2420, %v2167
        %v2422 = vmul.f32 %v2420, %v2168
        %v2425 = vrot.slane %v2421, 2
        %v2426 = vrot.slane %v2422, 2
        %v2429 = vadd.f32 %v2417, %v2425
        %v2430 = vadd.f32 %v2418, %v2426
        %s2431 = sld [smem:[#allocation8 + $0xec]]
        %v2432 = vstv %s2431
        %v2433 = vmul.f32 %v2432, %v2167
        %v2434 = vmul.f32 %v2432, %v2168
        %v2437 = vrot.slane %v2433, 3
        %v2438 = vrot.slane %v2434, 3
        %v2441 = vadd.f32 %v2429, %v2437
        %v2442 = vadd.f32 %v2430, %v2438
        %s2443 = sld [smem:[#allocation8 + $0xf0]]
        %v2444 = vstv %s2443
        %v2445 = vmul.f32 %v2444, %v2175
        %v2446 = vmul.f32 %v2444, %v2176
        %v2447 = vadd.f32 %v2441, %v2445
        %v2448 = vadd.f32 %v2442, %v2446
        %s2449 = sld [smem:[#allocation8 + $0xf4]]
        %v2450 = vstv %s2449
        %v2451 = vmul.f32 %v2450, %v2175
        %v2452 = vmul.f32 %v2450, %v2176
        %v2455 = vrot.slane %v2451, 1
        %v2456 = vrot.slane %v2452, 1
        %v2459 = vadd.f32 %v2447, %v2455
        %v2460 = vadd.f32 %v2448, %v2456
        %s2461 = sld [smem:[#allocation8 + $0xf8]]
        %v2462 = vstv %s2461
        %v2463 = vmul.f32 %v2462, %v2175
        %v2464 = vmul.f32 %v2462, %v2176
        %v2467 = vrot.slane %v2463, 2
        %v2468 = vrot.slane %v2464, 2
        %v2471 = vadd.f32 %v2459, %v2467
        %v2472 = vadd.f32 %v2460, %v2468
        %s2473 = sld [smem:[#allocation8 + $0xfc]]
        %v2474 = vstv %s2473
        %v2475 = vmul.f32 %v2474, %v2175
        %v2476 = vmul.f32 %v2474, %v2176
        %v2479 = vrot.slane %v2475, 3
        %v2480 = vrot.slane %v2476, 3
        %v2483 = vadd.f32 %v2471, %v2479
        %v2484 = vadd.f32 %v2472, %v2480
        %s2485 = sld [smem:[#allocation8 + $0x100]]
        %v2486 = vstv %s2485
        %v2487 = vmul.f32 %v2486, %v2183
        %v2488 = vmul.f32 %v2486, %v2184
        %v2489 = vadd.f32 %v2483, %v2487
        %v2490 = vadd.f32 %v2484, %v2488
        %s2491 = sld [smem:[#allocation8 + $0x104]]
        %v2492 = vstv %s2491
        %v2493 = vmul.f32 %v2492, %v2183
        %v2494 = vmul.f32 %v2492, %v2184
        %v2497 = vrot.slane %v2493, 1
        %v2498 = vrot.slane %v2494, 1
        %v2501 = vadd.f32 %v2489, %v2497
        %v2502 = vadd.f32 %v2490, %v2498
        %s2503 = sld [smem:[#allocation8 + $0x108]]
        %v2504 = vstv %s2503
        %v2505 = vmul.f32 %v2504, %v2183
        %v2506 = vmul.f32 %v2504, %v2184
        %v2509 = vrot.slane %v2505, 2
        %v2510 = vrot.slane %v2506, 2
        %v2513 = vadd.f32 %v2501, %v2509
        %v2514 = vadd.f32 %v2502, %v2510
        %s2515 = sld [smem:[#allocation8 + $0x10c]]
        %v2516 = vstv %s2515
        %v2517 = vmul.f32 %v2516, %v2183
        %v2518 = vmul.f32 %v2516, %v2184
        %v2521 = vrot.slane %v2517, 3
        %v2522 = vrot.slane %v2518, 3
        %v2525 = vadd.f32 %v2513, %v2521
        %v2526 = vadd.f32 %v2514, %v2522
        %s2527 = sld [smem:[#allocation8 + $0x110]]
        %v2528 = vstv %s2527
        %v2529 = vmul.f32 %v2528, %v2191
        %v2530 = vmul.f32 %v2528, %v2192
        %v2531 = vadd.f32 %v2525, %v2529
        %v2532 = vadd.f32 %v2526, %v2530
        %s2533 = sld [smem:[#allocation8 + $0x114]]
        %v2534 = vstv %s2533
        %v2535 = vmul.f32 %v2534, %v2191
        %v2536 = vmul.f32 %v2534, %v2192
        %v2539 = vrot.slane %v2535, 1
        %v2540 = vrot.slane %v2536, 1
        %v2543 = vadd.f32 %v2531, %v2539
        %v2544 = vadd.f32 %v2532, %v2540
        %s2545 = sld [smem:[#allocation8 + $0x118]]
        %v2546 = vstv %s2545
        %v2547 = vmul.f32 %v2546, %v2191
        %v2548 = vmul.f32 %v2546, %v2192
        %v2551 = vrot.slane %v2547, 2
        %v2552 = vrot.slane %v2548, 2
        %v2555 = vadd.f32 %v2543, %v2551
        %v2556 = vadd.f32 %v2544, %v2552
        %s2557 = sld [smem:[#allocation8 + $0x11c]]
        %v2558 = vstv %s2557
        %v2559 = vmul.f32 %v2558, %v2191
        %v2560 = vmul.f32 %v2558, %v2192
        %v2563 = vrot.slane %v2559, 3
        %v2564 = vrot.slane %v2560, 3
        %v2567 = vadd.f32 %v2555, %v2563
        %v2568 = vadd.f32 %v2556, %v2564
        %s2569 = sld [smem:[#allocation9 + $0x4]]
        %v2570 = vstv %s2569
        %v2571 = vadd.f32 %v2567, %v2570
        %v2572 = vadd.f32 %v2568, %v2570
        %v2573 = vmax.f32 %v2571, 0.0
        %v2574 = vmax.f32 %v2572, 0.0
        %v2575 = vadd.f32 %v2127, %v2573
        %v2576 = vadd.f32 %v2128, %v2574
        %s2577 = sld [smem:[#allocation8 + $0x91]]
        %v2578 = vstv %s2577
        %v2579 = vmul.f32 %v2578, %v2135
        %v2580 = vmul.f32 %v2578, %v2136
        %s2581 = sld [smem:[#allocation8 + $0x95]]
        %v2582 = vstv %s2581
        %v2583 = vmul.f32 %v2582, %v2135
        %v2584 = vmul.f32 %v2582, %v2136
        %v2587 = vrot.slane %v2583, 1
        %v2588 = vrot.slane %v2584, 1
        %v2591 = vadd.f32 %v2579, %v2587
        %v2592 = vadd.f32 %v2580, %v2588
        %s2593 = sld [smem:[#allocation8 + $0x99]]
        %v2594 = vstv %s2593
        %v2595 = vmul.f32 %v2594, %v2135
        %v2596 = vmul.f32 %v2594, %v2136
        %v2599 = vrot.slane %v2595, 2
        %v2600 = vrot.slane %v2596, 2
        %v2603 = vadd.f32 %v2591, %v2599
        %v2604 = vadd.f32 %v2592, %v2600
        %s2605 = sld [smem:[#allocation8 + $0x9d]]
        %v2606 = vstv %s2605
        %v2607 = vmul.f32 %v2606, %v2135
        %v2608 = vmul.f32 %v2606, %v2136
        %v2611 = vrot.slane %v2607, 3
        %v2612 = vrot.slane %v2608, 3
        %v2615 = vadd.f32 %v2603, %v2611
        %v2616 = vadd.f32 %v2604, %v2612
        %s2617 = sld [smem:[#allocation8 + $0xa1]]
        %v2618 = vstv %s2617
        %v2619 = vmul.f32 %v2618, %v2143
        %v2620 = vmul.f32 %v2618, %v2144
        %v2621 = vadd.f32 %v2615, %v2619
        %v2622 = vadd.f32 %v2616, %v2620
        %s2623 = sld [smem:[#allocation8 + $0xa5]]
        %v2624 = vstv %s2623
        %v2625 = vmul.f32 %v2624, %v2143
        %v2626 = vmul.f32 %v2624, %v2144
        %v2629 = vrot.slane %v2625, 1
        %v2630 = vrot.slane %v2626, 1
        %v2633 = vadd.f32 %v2621, %v2629
        %v2634 = vadd.f32 %v2622, %v2630
        %s2635 = sld [smem:[#allocation8 + $0xa9]]
        %v2636 = vstv %s2635
        %v2637 = vmul.f32 %v2636, %v2143
        %v2638 = vmul.f32 %v2636, %v2144
        %v2641 = vrot.slane %v2637, 2
        %v2642 = vrot.slane %v2638, 2
        %v2645 = vadd.f32 %v2633, %v2641
        %v2646 = vadd.f32 %v2634, %v2642
        %s2647 = sld [smem:[#allocation8 + $0xad]]
        %v2648 = vstv %s2647
        %v2649 = vmul.f32 %v2648, %v2143
        %v2650 = vmul.f32 %v2648, %v2144
        %v2653 = vrot.slane %v2649, 3
        %v2654 = vrot.slane %v2650, 3
        %v2657 = vadd.f32 %v2645, %v2653
        %v2658 = vadd.f32 %v2646, %v2654
        %s2659 = sld [smem:[#allocation8 + $0xb1]]
        %v2660 = vstv %s2659
        %v2661 = vmul.f32 %v2660, %v2151
        %v2662 = vmul.f32 %v2660, %v2152
        %v2663 = vadd.f32 %v2657, %v2661
        %v2664 = vadd.f32 %v2658, %v2662
        %s2665 = sld [smem:[#allocation8 + $0xb5]]
        %v2666 = vstv %s2665
        %v2667 = vmul.f32 %v2666, %v2151
        %v2668 = vmul.f32 %v2666, %v2152
        %v2671 = vrot.slane %v2667, 1
        %v2672 = vrot.slane %v2668, 1
        %v2675 = vadd.f32 %v2663, %v2671
        %v2676 = vadd.f32 %v2664, %v2672
        %s2677 = sld [smem:[#allocation8 + $0xb9]]
        %v2678 = vstv %s2677
        %v2679 = vmul.f32 %v2678, %v2151
        %v2680 = vmul.f32 %v2678, %v2152
        %v2683 = vrot.slane %v2679, 2
        %v2684 = vrot.slane %v2680, 2
        %v2687 = vadd.f32 %v2675, %v2683
        %v2688 = vadd.f32 %v2676, %v2684
        %s2689 = sld [smem:[#allocation8 + $0xbd]]
        %v2690 = vstv %s2689
        %v2691 = vmul.f32 %v2690, %v2151
        %v2692 = vmul.f32 %v2690, %v2152
        %v2695 = vrot.slane %v2691, 3
        %v2696 = vrot.slane %v2692, 3
        %v2699 = vadd.f32 %v2687, %v2695
        %v2700 = vadd.f32 %v2688, %v2696
        %s2701 = sld [smem:[#allocation8 + $0xc1]]
        %v2702 = vstv %s2701
        %v2703 = vmul.f32 %v2702, %v2159
        %v2704 = vmul.f32 %v2702, %v2160
        %v2705 = vadd.f32 %v2699, %v2703
        %v2706 = vadd.f32 %v2700, %v2704
        %s2707 = sld [smem:[#allocation8 + $0xc5]]
        %v2708 = vstv %s2707
        %v2709 = vmul.f32 %v2708, %v2159
        %v2710 = vmul.f32 %v2708, %v2160
        %v2713 = vrot.slane %v2709, 1
        %v2714 = vrot.slane %v2710, 1
        %v2717 = vadd.f32 %v2705, %v2713
        %v2718 = vadd.f32 %v2706, %v2714
        %s2719 = sld [smem:[#allocation8 + $0xc9]]
        %v2720 = vstv %s2719
        %v2721 = vmul.f32 %v2720, %v2159
        %v2722 = vmul.f32 %v2720, %v2160
        %v2725 = vrot.slane %v2721, 2
        %v2726 = vrot.slane %v2722, 2
        %v2729 = vadd.f32 %v2717, %v2725
        %v2730 = vadd.f32 %v2718, %v2726
        %s2731 = sld [smem:[#allocation8 + $0xcd]]
        %v2732 = vstv %s2731
        %v2733 = vmul.f32 %v2732, %v2159
        %v2734 = vmul.f32 %v2732, %v2160
        %v2737 = vrot.slane %v2733, 3
        %v2738 = vrot.slane %v2734, 3
        %v2741 = vadd.f32 %v2729, %v2737
        %v2742 = vadd.f32 %v2730, %v2738
        %s2743 = sld [smem:[#allocation8 + $0xd1]]
        %v2744 = vstv %s2743
        %v2745 = vmul.f32 %v2744, %v2127
        %v2746 = vmul.f32 %v2744, %v2128
        %v2747 = vadd.f32 %v2741, %v2745
        %v2748 = vadd.f32 %v2742, %v2746
        %s2749 = sld [smem:[#allocation8 + $0xd5]]
        %v2750 = vstv %s2749
        %v2751 = vmul.f32 %v2750, %v2127
        %v2752 = vmul.f32 %v2750, %v2128
        %v2755 = vrot.slane %v2751, 1
        %v2756 = vrot.slane %v2752, 1
        %v2759 = vadd.f32 %v2747, %v2755
        %v2760 = vadd.f32 %v2748, %v2756
        %s2761 = sld [smem:[#allocation8 + $0xd9]]
        %v2762 = vstv %s2761
        %v2763 = vmul.f32 %v2762, %v2127
        %v2764 = vmul.f32 %v2762, %v2128
        %v2767 = vrot.slane %v2763, 2
        %v2768 = vrot.slane %v2764, 2
        %v2771 = vadd.f32 %v2759, %v2767
        %v2772 = vadd.f32 %v2760, %v2768
        %s2773 = sld [smem:[#allocation8 + $0xdd]]
        %v2774 = vstv %s2773
        %v2775 = vmul.f32 %v2774, %v2127
        %v2776 = vmul.f32 %v2774, %v2128
        %v2779 = vrot.slane %v2775, 3
        %v2780 = vrot.slane %v2776, 3
        %v2783 = vadd.f32 %v2771, %v2779
        %v2784 = vadd.f32 %v2772, %v2780
        %s2785 = sld [smem:[#allocation8 + $0xe1]]
        %v2786 = vstv %s2785
        %v2787 = vmul.f32 %v2786, %v2167
        %v2788 = vmul.f32 %v2786, %v2168
        %v2789 = vadd.f32 %v2783, %v2787
        %v2790 = vadd.f32 %v2784, %v2788
        %s2791 = sld [smem:[#allocation8 + $0xe5]]
        %v2792 = vstv %s2791
        %v2793 = vmul.f32 %v2792, %v2167
        %v2794 = vmul.f32 %v2792, %v2168
        %v2797 = vrot.slane %v2793, 1
        %v2798 = vrot.slane %v2794, 1
        %v2801 = vadd.f32 %v2789, %v2797
        %v2802 = vadd.f32 %v2790, %v2798
        %s2803 = sld [smem:[#allocation8 + $0xe9]]
        %v2804 = vstv %s2803
        %v2805 = vmul.f32 %v2804, %v2167
        %v2806 = vmul.f32 %v2804, %v2168
        %v2809 = vrot.slane %v2805, 2
        %v2810 = vrot.slane %v2806, 2
        %v2813 = vadd.f32 %v2801, %v2809
        %v2814 = vadd.f32 %v2802, %v2810
        %s2815 = sld [smem:[#allocation8 + $0xed]]
        %v2816 = vstv %s2815
        %v2817 = vmul.f32 %v2816, %v2167
        %v2818 = vmul.f32 %v2816, %v2168
        %v2821 = vrot.slane %v2817, 3
        %v2822 = vrot.slane %v2818, 3
        %v2825 = vadd.f32 %v2813, %v2821
        %v2826 = vadd.f32 %v2814, %v2822
        %s2827 = sld [smem:[#allocation8 + $0xf1]]
        %v2828 = vstv %s2827
        %v2829 = vmul.f32 %v2828, %v2175
        %v2830 = vmul.f32 %v2828, %v2176
        %v2831 = vadd.f32 %v2825, %v2829
        %v2832 = vadd.f32 %v2826, %v2830
        %s2833 = sld [smem:[#allocation8 + $0xf5]]
        %v2834 = vstv %s2833
        %v2835 = vmul.f32 %v2834, %v2175
        %v2836 = vmul.f32 %v2834, %v2176
        %v2839 = vrot.slane %v2835, 1
        %v2840 = vrot.slane %v2836, 1
        %v2843 = vadd.f32 %v2831, %v2839
        %v2844 = vadd.f32 %v2832, %v2840
        %s2845 = sld [smem:[#allocation8 + $0xf9]]
        %v2846 = vstv %s2845
        %v2847 = vmul.f32 %v2846, %v2175
        %v2848 = vmul.f32 %v2846, %v2176
        %v2851 = vrot.slane %v2847, 2
        %v2852 = vrot.slane %v2848, 2
        %v2855 = vadd.f32 %v2843, %v2851
        %v2856 = vadd.f32 %v2844, %v2852
        %s2857 = sld [smem:[#allocation8 + $0xfd]]
        %v2858 = vstv %s2857
        %v2859 = vmul.f32 %v2858, %v2175
        %v2860 = vmul.f32 %v2858, %v2176
        %v2863 = vrot.slane %v2859, 3
        %v2864 = vrot.slane %v2860, 3
        %v2867 = vadd.f32 %v2855, %v2863
        %v2868 = vadd.f32 %v2856, %v2864
        %s2869 = sld [smem:[#allocation8 + $0x101]]
        %v2870 = vstv %s2869
        %v2871 = vmul.f32 %v2870, %v2183
        %v2872 = vmul.f32 %v2870, %v2184
        %v2873 = vadd.f32 %v2867, %v2871
        %v2874 = vadd.f32 %v2868, %v2872
        %s2875 = sld [smem:[#allocation8 + $0x105]]
        %v2876 = vstv %s2875
        %v2877 = vmul.f32 %v2876, %v2183
        %v2878 = vmul.f32 %v2876, %v2184
        %v2881 = vrot.slane %v2877, 1
        %v2882 = vrot.slane %v2878, 1
        %v2885 = vadd.f32 %v2873, %v2881
        %v2886 = vadd.f32 %v2874, %v2882
        %s2887 = sld [smem:[#allocation8 + $0x109]]
        %v2888 = vstv %s2887
        %v2889 = vmul.f32 %v2888, %v2183
        %v2890 = vmul.f32 %v2888, %v2184
        %v2893 = vrot.slane %v2889, 2
        %v2894 = vrot.slane %v2890, 2
        %v2897 = vadd.f32 %v2885, %v2893
        %v2898 = vadd.f32 %v2886, %v2894
        %s2899 = sld [smem:[#allocation8 + $0x10d]]
        %v2900 = vstv %s2899
        %v2901 = vmul.f32 %v2900, %v2183
        %v2902 = vmul.f32 %v2900, %v2184
        %v2905 = vrot.slane %v2901, 3
        %v2906 = vrot.slane %v2902, 3
        %v2909 = vadd.f32 %v2897, %v2905
        %v2910 = vadd.f32 %v2898, %v2906
        %s2911 = sld [smem:[#allocation8 + $0x111]]
        %v2912 = vstv %s2911
        %v2913 = vmul.f32 %v2912, %v2191
        %v2914 = vmul.f32 %v2912, %v2192
        %v2915 = vadd.f32 %v2909, %v2913
        %v2916 = vadd.f32 %v2910, %v2914
        %s2917 = sld [smem:[#allocation8 + $0x115]]
        %v2918 = vstv %s2917
        %v2919 = vmul.f32 %v2918, %v2191
        %v2920 = vmul.f32 %v2918, %v2192
        %v2923 = vrot.slane %v2919, 1
        %v2924 = vrot.slane %v2920, 1
        %v2927 = vadd.f32 %v2915, %v2923
        %v2928 = vadd.f32 %v2916, %v2924
        %s2929 = sld [smem:[#allocation8 + $0x119]]
        %v2930 = vstv %s2929
        %v2931 = vmul.f32 %v2930, %v2191
        %v2932 = vmul.f32 %v2930, %v2192
        %v2935 = vrot.slane %v2931, 2
        %v2936 = vrot.slane %v2932, 2
        %v2939 = vadd.f32 %v2927, %v2935
        %v2940 = vadd.f32 %v2928, %v2936
        %s2941 = sld [smem:[#allocation8 + $0x11d]]
        %v2942 = vstv %s2941
        %v2943 = vmul.f32 %v2942, %v2191
        %v2944 = vmul.f32 %v2942, %v2192
        %v2947 = vrot.slane %v2943, 3
        %v2948 = vrot.slane %v2944, 3
        %v2951 = vadd.f32 %v2939, %v2947
        %v2952 = vadd.f32 %v2940, %v2948
        %s2953 = sld [smem:[#allocation9 + $0x5]]
        %v2954 = vstv %s2953
        %v2955 = vadd.f32 %v2951, %v2954
        %v2956 = vadd.f32 %v2952, %v2954
        %v2957 = vmax.f32 %v2955, 0.0
        %v2958 = vmax.f32 %v2956, 0.0
        %v2961 = vrot.slane %v2957, 7
        %v2962 = vrot.slane %v2958, 7
        %v2965 = vadd.f32 %v2127, %v2961
        %v2966 = vadd.f32 %v2128, %v2962
        %s2967 = sld [smem:[#allocation8 + $0x92]]
        %v2968 = vstv %s2967
        %v2969 = vmul.f32 %v2968, %v2135
        %v2970 = vmul.f32 %v2968, %v2136
        %s2971 = sld [smem:[#allocation8 + $0x96]]
        %v2972 = vstv %s2971
        %v2973 = vmul.f32 %v2972, %v2135
        %v2974 = vmul.f32 %v2972, %v2136
        %v2977 = vrot.slane %v2973, 1
        %v2978 = vrot.slane %v2974, 1
        %v2981 = vadd.f32 %v2969, %v2977
        %v2982 = vadd.f32 %v2970, %v2978
        %s2983 = sld [smem:[#allocation8 + $0x9a]]
        %v2984 = vstv %s2983
        %v2985 = vmul.f32 %v2984, %v2135
        %v2986 = vmul.f32 %v2984, %v2136
        %v2989 = vrot.slane %v2985, 2
        %v2990 = vrot.slane %v2986, 2
        %v2993 = vadd.f32 %v2981, %v2989
        %v2994 = vadd.f32 %v2982, %v2990
        %s2995 = sld [smem:[#allocation8 + $0x9e]]
        %v2996 = vstv %s2995
        %v2997 = vmul.f32 %v2996, %v2135
        %v2998 = vmul.f32 %v2996, %v2136
        %v3001 = vrot.slane %v2997, 3
        %v3002 = vrot.slane %v2998, 3
        %v3005 = vadd.f32 %v2993, %v3001
        %v3006 = vadd.f32 %v2994, %v3002
        %s3007 = sld [smem:[#allocation8 + $0xa2]]
        %v3008 = vstv %s3007
        %v3009 = vmul.f32 %v3008, %v2143
        %v3010 = vmul.f32 %v3008, %v2144
        %v3011 = vadd.f32 %v3005, %v3009
        %v3012 = vadd.f32 %v3006, %v3010
        %s3013 = sld [smem:[#allocation8 + $0xa6]]
        %v3014 = vstv %s3013
        %v3015 = vmul.f32 %v3014, %v2143
        %v3016 = vmul.f32 %v3014, %v2144
        %v3019 = vrot.slane %v3015, 1
        %v3020 = vrot.slane %v3016, 1
        %v3023 = vadd.f32 %v3011, %v3019
        %v3024 = vadd.f32 %v3012, %v3020
        %s3025 = sld [smem:[#allocation8 + $0xaa]]
        %v3026 = vstv %s3025
        %v3027 = vmul.f32 %v3026, %v2143
        %v3028 = vmul.f32 %v3026, %v2144
        %v3031 = vrot.slane %v3027, 2
        %v3032 = vrot.slane %v3028, 2
        %v3035 = vadd.f32 %v3023, %v3031
        %v3036 = vadd.f32 %v3024, %v3032
        %s3037 = sld [smem:[#allocation8 + $0xae]]
        %v3038 = vstv %s3037
        %v3039 = vmul.f32 %v3038, %v2143
        %v3040 = vmul.f32 %v3038, %v2144
        %v3043 = vrot.slane %v3039, 3
        %v3044 = vrot.slane %v3040, 3
        %v3047 = vadd.f32 %v3035, %v3043
        %v3048 = vadd.f32 %v3036, %v3044
        %s3049 = sld [smem:[#allocation8 + $0xb2]]
        %v3050 = vstv %s3049
        %v3051 = vmul.f32 %v3050, %v2151
        %v3052 = vmul.f32 %v3050, %v2152
        %v3053 = vadd.f32 %v3047, %v3051
        %v3054 = vadd.f32 %v3048, %v3052
        %s3055 = sld [smem:[#allocation8 + $0xb6]]
        %v3056 = vstv %s3055
        %v3057 = vmul.f32 %v3056, %v2151
        %v3058 = vmul.f32 %v3056, %v2152
        %v3061 = vrot.slane %v3057, 1
        %v3062 = vrot.slane %v3058, 1
        %v3065 = vadd.f32 %v3053, %v3061
        %v3066 = vadd.f32 %v3054, %v3062
        %s3067 = sld [smem:[#allocation8 + $0xba]]
        %v3068 = vstv %s3067
        %v3069 = vmul.f32 %v3068, %v2151
        %v3070 = vmul.f32 %v3068, %v2152
        %v3073 = vrot.slane %v3069, 2
        %v3074 = vrot.slane %v3070, 2
        %v3077 = vadd.f32 %v3065, %v3073
        %v3078 = vadd.f32 %v3066, %v3074
        %s3079 = sld [smem:[#allocation8 + $0xbe]]
        %v3080 = vstv %s3079
        %v3081 = vmul.f32 %v3080, %v2151
        %v3082 = vmul.f32 %v3080, %v2152
        %v3085 = vrot.slane %v3081, 3
        %v3086 = vrot.slane %v3082, 3
        %v3089 = vadd.f32 %v3077, %v3085
        %v3090 = vadd.f32 %v3078, %v3086
        %s3091 = sld [smem:[#allocation8 + $0xc2]]
        %v3092 = vstv %s3091
        %v3093 = vmul.f32 %v3092, %v2159
        %v3094 = vmul.f32 %v3092, %v2160
        %v3095 = vadd.f32 %v3089, %v3093
        %v3096 = vadd.f32 %v3090, %v3094
        %s3097 = sld [smem:[#allocation8 + $0xc6]]
        %v3098 = vstv %s3097
        %v3099 = vmul.f32 %v3098, %v2159
        %v3100 = vmul.f32 %v3098, %v2160
        %v3103 = vrot.slane %v3099, 1
        %v3104 = vrot.slane %v3100, 1
        %v3107 = vadd.f32 %v3095, %v3103
        %v3108 = vadd.f32 %v3096, %v3104
        %s3109 = sld [smem:[#allocation8 + $0xca]]
        %v3110 = vstv %s3109
        %v3111 = vmul.f32 %v3110, %v2159
        %v3112 = vmul.f32 %v3110, %v2160
        %v3115 = vrot.slane %v3111, 2
        %v3116 = vrot.slane %v3112, 2
        %v3119 = vadd.f32 %v3107, %v3115
        %v3120 = vadd.f32 %v3108, %v3116
        %s3121 = sld [smem:[#allocation8 + $0xce]]
        %v3122 = vstv %s3121
        %v3123 = vmul.f32 %v3122, %v2159
        %v3124 = vmul.f32 %v3122, %v2160
        %v3127 = vrot.slane %v3123, 3
        %v3128 = vrot.slane %v3124, 3
        %v3131 = vadd.f32 %v3119, %v3127
        %v3132 = vadd.f32 %v3120, %v3128
        %s3133 = sld [smem:[#allocation8 + $0xd2]]
        %v3134 = vstv %s3133
        %v3135 = vmul.f32 %v3134, %v2127
        %v3136 = vmul.f32 %v3134, %v2128
        %v3137 = vadd.f32 %v3131, %v3135
        %v3138 = vadd.f32 %v3132, %v3136
        %s3139 = sld [smem:[#allocation8 + $0xd6]]
        %v3140 = vstv %s3139
        %v3141 = vmul.f32 %v3140, %v2127
        %v3142 = vmul.f32 %v3140, %v2128
        %v3145 = vrot.slane %v3141, 1
        %v3146 = vrot.slane %v3142, 1
        %v3149 = vadd.f32 %v3137, %v3145
        %v3150 = vadd.f32 %v3138, %v3146
        %s3151 = sld [smem:[#allocation8 + $0xda]]
        %v3152 = vstv %s3151
        %v3153 = vmul.f32 %v3152, %v2127
        %v3154 = vmul.f32 %v3152, %v2128
        %v3157 = vrot.slane %v3153, 2
        %v3158 = vrot.slane %v3154, 2
        %v3161 = vadd.f32 %v3149, %v3157
        %v3162 = vadd.f32 %v3150, %v3158
        %s3163 = sld [smem:[#allocation8 + $0xde]]
        %v3164 = vstv %s3163
        %v3165 = vmul.f32 %v3164, %v2127
        %v3166 = vmul.f32 %v3164, %v2128
        %v3169 = vrot.slane %v3165, 3
        %v3170 = vrot.slane %v3166, 3
        %v3173 = vadd.f32 %v3161, %v3169
        %v3174 = vadd.f32 %v3162, %v3170
        %s3175 = sld [smem:[#allocation8 + $0xe2]]
        %v3176 = vstv %s3175
        %v3177 = vmul.f32 %v3176, %v2167
        %v3178 = vmul.f32 %v3176, %v2168
        %v3179 = vadd.f32 %v3173, %v3177
        %v3180 = vadd.f32 %v3174, %v3178
        %s3181 = sld [smem:[#allocation8 + $0xe6]]
        %v3182 = vstv %s3181
        %v3183 = vmul.f32 %v3182, %v2167
        %v3184 = vmul.f32 %v3182, %v2168
        %v3187 = vrot.slane %v3183, 1
        %v3188 = vrot.slane %v3184, 1
        %v3191 = vadd.f32 %v3179, %v3187
        %v3192 = vadd.f32 %v3180, %v3188
        %s3193 = sld [smem:[#allocation8 + $0xea]]
        %v3194 = vstv %s3193
        %v3195 = vmul.f32 %v3194, %v2167
        %v3196 = vmul.f32 %v3194, %v2168
        %v3199 = vrot.slane %v3195, 2
        %v3200 = vrot.slane %v3196, 2
        %v3203 = vadd.f32 %v3191, %v3199
        %v3204 = vadd.f32 %v3192, %v3200
        %s3205 = sld [smem:[#allocation8 + $0xee]]
        %v3206 = vstv %s3205
        %v3207 = vmul.f32 %v3206, %v2167
        %v3208 = vmul.f32 %v3206, %v2168
        %v3211 = vrot.slane %v3207, 3
        %v3212 = vrot.slane %v3208, 3
        %v3215 = vadd.f32 %v3203, %v3211
        %v3216 = vadd.f32 %v3204, %v3212
        %s3217 = sld [smem:[#allocation8 + $0xf2]]
        %v3218 = vstv %s3217
        %v3219 = vmul.f32 %v3218, %v2175
        %v3220 = vmul.f32 %v3218, %v2176
        %v3221 = vadd.f32 %v3215, %v3219
        %v3222 = vadd.f32 %v3216, %v3220
        %s3223 = sld [smem:[#allocation8 + $0xf6]]
        %v3224 = vstv %s3223
        %v3225 = vmul.f32 %v3224, %v2175
        %v3226 = vmul.f32 %v3224, %v2176
        %v3229 = vrot.slane %v3225, 1
        %v3230 = vrot.slane %v3226, 1
        %v3233 = vadd.f32 %v3221, %v3229
        %v3234 = vadd.f32 %v3222, %v3230
        %s3235 = sld [smem:[#allocation8 + $0xfa]]
        %v3236 = vstv %s3235
        %v3237 = vmul.f32 %v3236, %v2175
        %v3238 = vmul.f32 %v3236, %v2176
        %v3241 = vrot.slane %v3237, 2
        %v3242 = vrot.slane %v3238, 2
        %v3245 = vadd.f32 %v3233, %v3241
        %v3246 = vadd.f32 %v3234, %v3242
        %s3247 = sld [smem:[#allocation8 + $0xfe]]
        %v3248 = vstv %s3247
        %v3249 = vmul.f32 %v3248, %v2175
        %v3250 = vmul.f32 %v3248, %v2176
        %v3253 = vrot.slane %v3249, 3
        %v3254 = vrot.slane %v3250, 3
        %v3257 = vadd.f32 %v3245, %v3253
        %v3258 = vadd.f32 %v3246, %v3254
        %s3259 = sld [smem:[#allocation8 + $0x102]]
        %v3260 = vstv %s3259
        %v3261 = vmul.f32 %v3260, %v2183
        %v3262 = vmul.f32 %v3260, %v2184
        %v3263 = vadd.f32 %v3257, %v3261
        %v3264 = vadd.f32 %v3258, %v3262
        %s3265 = sld [smem:[#allocation8 + $0x106]]
        %v3266 = vstv %s3265
        %v3267 = vmul.f32 %v3266, %v2183
        %v3268 = vmul.f32 %v3266, %v2184
        %v3271 = vrot.slane %v3267, 1
        %v3272 = vrot.slane %v3268, 1
        %v3275 = vadd.f32 %v3263, %v3271
        %v3276 = vadd.f32 %v3264, %v3272
        %s3277 = sld [smem:[#allocation8 + $0x10a]]
        %v3278 = vstv %s3277
        %v3279 = vmul.f32 %v3278, %v2183
        %v3280 = vmul.f32 %v3278, %v2184
        %v3283 = vrot.slane %v3279, 2
        %v3284 = vrot.slane %v3280, 2
        %v3287 = vadd.f32 %v3275, %v3283
        %v3288 = vadd.f32 %v3276, %v3284
        %s3289 = sld [smem:[#allocation8 + $0x10e]]
        %v3290 = vstv %s3289
        %v3291 = vmul.f32 %v3290, %v2183
        %v3292 = vmul.f32 %v3290, %v2184
        %v3295 = vrot.slane %v3291, 3
        %v3296 = vrot.slane %v3292, 3
        %v3299 = vadd.f32 %v3287, %v3295
        %v3300 = vadd.f32 %v3288, %v3296
        %s3301 = sld [smem:[#allocation8 + $0x112]]
        %v3302 = vstv %s3301
        %v3303 = vmul.f32 %v3302, %v2191
        %v3304 = vmul.f32 %v3302, %v2192
        %v3305 = vadd.f32 %v3299, %v3303
        %v3306 = vadd.f32 %v3300, %v3304
        %s3307 = sld [smem:[#allocation8 + $0x116]]
        %v3308 = vstv %s3307
        %v3309 = vmul.f32 %v3308, %v2191
        %v3310 = vmul.f32 %v3308, %v2192
        %v3313 = vrot.slane %v3309, 1
        %v3314 = vrot.slane %v3310, 1
        %v3317 = vadd.f32 %v3305, %v3313
        %v3318 = vadd.f32 %v3306, %v3314
        %s3319 = sld [smem:[#allocation8 + $0x11a]]
        %v3320 = vstv %s3319
        %v3321 = vmul.f32 %v3320, %v2191
        %v3322 = vmul.f32 %v3320, %v2192
        %v3325 = vrot.slane %v3321, 2
        %v3326 = vrot.slane %v3322, 2
        %v3329 = vadd.f32 %v3317, %v3325
        %v3330 = vadd.f32 %v3318, %v3326
        %s3331 = sld [smem:[#allocation8 + $0x11e]]
        %v3332 = vstv %s3331
        %v3333 = vmul.f32 %v3332, %v2191
        %v3334 = vmul.f32 %v3332, %v2192
        %v3337 = vrot.slane %v3333, 3
        %v3338 = vrot.slane %v3334, 3
        %v3341 = vadd.f32 %v3329, %v3337
        %v3342 = vadd.f32 %v3330, %v3338
        %s3343 = sld [smem:[#allocation9 + $0x6]]
        %v3344 = vstv %s3343
        %v3345 = vadd.f32 %v3341, %v3344
        %v3346 = vadd.f32 %v3342, %v3344
        %v3347 = vmax.f32 %v3345, 0.0
        %v3348 = vmax.f32 %v3346, 0.0
        %v3351 = vrot.slane %v3347, 6
        %v3352 = vrot.slane %v3348, 6
        %v3355 = vadd.f32 %v2127, %v3351
        %v3356 = vadd.f32 %v2128, %v3352
        %s3357 = sld [smem:[#allocation8 + $0x93]]
        %v3358 = vstv %s3357
        %v3359 = vmul.f32 %v3358, %v2135
        %v3360 = vmul.f32 %v3358, %v2136
        %s3361 = sld [smem:[#allocation8 + $0x97]]
        %v3362 = vstv %s3361
        %v3363 = vmul.f32 %v3362, %v2135
        %v3364 = vmul.f32 %v3362, %v2136
        %v3367 = vrot.slane %v3363, 1
        %v3368 = vrot.slane %v3364, 1
        %v3371 = vadd.f32 %v3359, %v3367
        %v3372 = vadd.f32 %v3360, %v3368
        %s3373 = sld [smem:[#allocation8 + $0x9b]]
        %v3374 = vstv %s3373
        %v3375 = vmul.f32 %v3374, %v2135
        %v3376 = vmul.f32 %v3374, %v2136
        %v3379 = vrot.slane %v3375, 2
        %v3380 = vrot.slane %v3376, 2
        %v3383 = vadd.f32 %v3371, %v3379
        %v3384 = vadd.f32 %v3372, %v3380
        %s3385 = sld [smem:[#allocation8 + $0x9f]]
        %v3386 = vstv %s3385
        %v3387 = vmul.f32 %v3386, %v2135
        %v3388 = vmul.f32 %v3386, %v2136
        %v3391 = vrot.slane %v3387, 3
        %v3392 = vrot.slane %v3388, 3
        %v3395 = vadd.f32 %v3383, %v3391
        %v3396 = vadd.f32 %v3384, %v3392
        %s3397 = sld [smem:[#allocation8 + $0xa3]]
        %v3398 = vstv %s3397
        %v3399 = vmul.f32 %v3398, %v2143
        %v3400 = vmul.f32 %v3398, %v2144
        %v3401 = vadd.f32 %v3395, %v3399
        %v3402 = vadd.f32 %v3396, %v3400
        %s3403 = sld [smem:[#allocation8 + $0xa7]]
        %v3404 = vstv %s3403
        %v3405 = vmul.f32 %v3404, %v2143
        %v3406 = vmul.f32 %v3404, %v2144
        %v3409 = vrot.slane %v3405, 1
        %v3410 = vrot.slane %v3406, 1
        %v3413 = vadd.f32 %v3401, %v3409
        %v3414 = vadd.f32 %v3402, %v3410
        %s3415 = sld [smem:[#allocation8 + $0xab]]
        %v3416 = vstv %s3415
        %v3417 = vmul.f32 %v3416, %v2143
        %v3418 = vmul.f32 %v3416, %v2144
        %v3421 = vrot.slane %v3417, 2
        %v3422 = vrot.slane %v3418, 2
        %v3425 = vadd.f32 %v3413, %v3421
        %v3426 = vadd.f32 %v3414, %v3422
        %s3427 = sld [smem:[#allocation8 + $0xaf]]
        %v3428 = vstv %s3427
        %v3429 = vmul.f32 %v3428, %v2143
        %v3430 = vmul.f32 %v3428, %v2144
        %v3433 = vrot.slane %v3429, 3
        %v3434 = vrot.slane %v3430, 3
        %v3437 = vadd.f32 %v3425, %v3433
        %v3438 = vadd.f32 %v3426, %v3434
        %s3439 = sld [smem:[#allocation8 + $0xb3]]
        %v3440 = vstv %s3439
        %v3441 = vmul.f32 %v3440, %v2151
        %v3442 = vmul.f32 %v3440, %v2152
        %v3443 = vadd.f32 %v3437, %v3441
        %v3444 = vadd.f32 %v3438, %v3442
        %s3445 = sld [smem:[#allocation8 + $0xb7]]
        %v3446 = vstv %s3445
        %v3447 = vmul.f32 %v3446, %v2151
        %v3448 = vmul.f32 %v3446, %v2152
        %v3451 = vrot.slane %v3447, 1
        %v3452 = vrot.slane %v3448, 1
        %v3455 = vadd.f32 %v3443, %v3451
        %v3456 = vadd.f32 %v3444, %v3452
        %s3457 = sld [smem:[#allocation8 + $0xbb]]
        %v3458 = vstv %s3457
        %v3459 = vmul.f32 %v3458, %v2151
        %v3460 = vmul.f32 %v3458, %v2152
        %v3463 = vrot.slane %v3459, 2
        %v3464 = vrot.slane %v3460, 2
        %v3467 = vadd.f32 %v3455, %v3463
        %v3468 = vadd.f32 %v3456, %v3464
        %s3469 = sld [smem:[#allocation8 + $0xbf]]
        %v3470 = vstv %s3469
        %v3471 = vmul.f32 %v3470, %v2151
        %v3472 = vmul.f32 %v3470, %v2152
        %v3475 = vrot.slane %v3471, 3
        %v3476 = vrot.slane %v3472, 3
        %v3479 = vadd.f32 %v3467, %v3475
        %v3480 = vadd.f32 %v3468, %v3476
        %s3481 = sld [smem:[#allocation8 + $0xc3]]
        %v3482 = vstv %s3481
        %v3483 = vmul.f32 %v3482, %v2159
        %v3484 = vmul.f32 %v3482, %v2160
        %v3485 = vadd.f32 %v3479, %v3483
        %v3486 = vadd.f32 %v3480, %v3484
        %s3487 = sld [smem:[#allocation8 + $0xc7]]
        %v3488 = vstv %s3487
        %v3489 = vmul.f32 %v3488, %v2159
        %v3490 = vmul.f32 %v3488, %v2160
        %v3493 = vrot.slane %v3489, 1
        %v3494 = vrot.slane %v3490, 1
        %v3497 = vadd.f32 %v3485, %v3493
        %v3498 = vadd.f32 %v3486, %v3494
        %s3499 = sld [smem:[#allocation8 + $0xcb]]
        %v3500 = vstv %s3499
        %v3501 = vmul.f32 %v3500, %v2159
        %v3502 = vmul.f32 %v3500, %v2160
        %v3505 = vrot.slane %v3501, 2
        %v3506 = vrot.slane %v3502, 2
        %v3509 = vadd.f32 %v3497, %v3505
        %v3510 = vadd.f32 %v3498, %v3506
        %s3511 = sld [smem:[#allocation8 + $0xcf]]
        %v3512 = vstv %s3511
        %v3513 = vmul.f32 %v3512, %v2159
        %v3514 = vmul.f32 %v3512, %v2160
        %v3517 = vrot.slane %v3513, 3
        %v3518 = vrot.slane %v3514, 3
        %v3521 = vadd.f32 %v3509, %v3517
        %v3522 = vadd.f32 %v3510, %v3518
        %s3523 = sld [smem:[#allocation8 + $0xd3]]
        %v3524 = vstv %s3523
        %v3525 = vmul.f32 %v3524, %v2127
        %v3526 = vmul.f32 %v3524, %v2128
        %v3527 = vadd.f32 %v3521, %v3525
        %v3528 = vadd.f32 %v3522, %v3526
        %s3529 = sld [smem:[#allocation8 + $0xd7]]
        %v3530 = vstv %s3529
        %v3531 = vmul.f32 %v3530, %v2127
        %v3532 = vmul.f32 %v3530, %v2128
        %v3535 = vrot.slane %v3531, 1
        %v3536 = vrot.slane %v3532, 1
        %v3539 = vadd.f32 %v3527, %v3535
        %v3540 = vadd.f32 %v3528, %v3536
        %s3541 = sld [smem:[#allocation8 + $0xdb]]
        %v3542 = vstv %s3541
        %v3543 = vmul.f32 %v3542, %v2127
        %v3544 = vmul.f32 %v3542, %v2128
        %v3547 = vrot.slane %v3543, 2
        %v3548 = vrot.slane %v3544, 2
        %v3551 = vadd.f32 %v3539, %v3547
        %v3552 = vadd.f32 %v3540, %v3548
        %s3553 = sld [smem:[#allocation8 + $0xdf]]
        %v3554 = vstv %s3553
        %v3555 = vmul.f32 %v3554, %v2127
        %v3556 = vmul.f32 %v3554, %v2128
        %v3559 = vrot.slane %v3555, 3
        %v3560 = vrot.slane %v3556, 3
        %v3563 = vadd.f32 %v3551, %v3559
        %v3564 = vadd.f32 %v3552, %v3560
        %s3565 = sld [smem:[#allocation8 + $0xe3]]
        %v3566 = vstv %s3565
        %v3567 = vmul.f32 %v3566, %v2167
        %v3568 = vmul.f32 %v3566, %v2168
        %v3569 = vadd.f32 %v3563, %v3567
        %v3570 = vadd.f32 %v3564, %v3568
        %s3571 = sld [smem:[#allocation8 + $0xe7]]
        %v3572 = vstv %s3571
        %v3573 = vmul.f32 %v3572, %v2167
        %v3574 = vmul.f32 %v3572, %v2168
        %v3577 = vrot.slane %v3573, 1
        %v3578 = vrot.slane %v3574, 1
        %v3581 = vadd.f32 %v3569, %v3577
        %v3582 = vadd.f32 %v3570, %v3578
        %s3583 = sld [smem:[#allocation8 + $0xeb]]
        %v3584 = vstv %s3583
        %v3585 = vmul.f32 %v3584, %v2167
        %v3586 = vmul.f32 %v3584, %v2168
        %v3589 = vrot.slane %v3585, 2
        %v3590 = vrot.slane %v3586, 2
        %v3593 = vadd.f32 %v3581, %v3589
        %v3594 = vadd.f32 %v3582, %v3590
        %s3595 = sld [smem:[#allocation8 + $0xef]]
        %v3596 = vstv %s3595
        %v3597 = vmul.f32 %v3596, %v2167
        %v3598 = vmul.f32 %v3596, %v2168
        %v3601 = vrot.slane %v3597, 3
        %v3602 = vrot.slane %v3598, 3
        %v3605 = vadd.f32 %v3593, %v3601
        %v3606 = vadd.f32 %v3594, %v3602
        %s3607 = sld [smem:[#allocation8 + $0xf3]]
        %v3608 = vstv %s3607
        %v3609 = vmul.f32 %v3608, %v2175
        %v3610 = vmul.f32 %v3608, %v2176
        %v3611 = vadd.f32 %v3605, %v3609
        %v3612 = vadd.f32 %v3606, %v3610
        %s3613 = sld [smem:[#allocation8 + $0xf7]]
        %v3614 = vstv %s3613
        %v3615 = vmul.f32 %v3614, %v2175
        %v3616 = vmul.f32 %v3614, %v2176
        %v3619 = vrot.slane %v3615, 1
        %v3620 = vrot.slane %v3616, 1
        %v3623 = vadd.f32 %v3611, %v3619
        %v3624 = vadd.f32 %v3612, %v3620
        %s3625 = sld [smem:[#allocation8 + $0xfb]]
        %v3626 = vstv %s3625
        %v3627 = vmul.f32 %v3626, %v2175
        %v3628 = vmul.f32 %v3626, %v2176
        %v3631 = vrot.slane %v3627, 2
        %v3632 = vrot.slane %v3628, 2
        %v3635 = vadd.f32 %v3623, %v3631
        %v3636 = vadd.f32 %v3624, %v3632
        %s3637 = sld [smem:[#allocation8 + $0xff]]
        %v3638 = vstv %s3637
        %v3639 = vmul.f32 %v3638, %v2175
        %v3640 = vmul.f32 %v3638, %v2176
        %v3643 = vrot.slane %v3639, 3
        %v3644 = vrot.slane %v3640, 3
        %v3647 = vadd.f32 %v3635, %v3643
        %v3648 = vadd.f32 %v3636, %v3644
        %s3649 = sld [smem:[#allocation8 + $0x103]]
        %v3650 = vstv %s3649
        %v3651 = vmul.f32 %v3650, %v2183
        %v3652 = vmul.f32 %v3650, %v2184
        %v3653 = vadd.f32 %v3647, %v3651
        %v3654 = vadd.f32 %v3648, %v3652
        %s3655 = sld [smem:[#allocation8 + $0x107]]
        %v3656 = vstv %s3655
        %v3657 = vmul.f32 %v3656, %v2183
        %v3658 = vmul.f32 %v3656, %v2184
        %v3661 = vrot.slane %v3657, 1
        %v3662 = vrot.slane %v3658, 1
        %v3665 = vadd.f32 %v3653, %v3661
        %v3666 = vadd.f32 %v3654, %v3662
        %s3667 = sld [smem:[#allocation8 + $0x10b]]
        %v3668 = vstv %s3667
        %v3669 = vmul.f32 %v3668, %v2183
        %v3670 = vmul.f32 %v3668, %v2184
        %v3673 = vrot.slane %v3669, 2
        %v3674 = vrot.slane %v3670, 2
        %v3677 = vadd.f32 %v3665, %v3673
        %v3678 = vadd.f32 %v3666, %v3674
        %s3679 = sld [smem:[#allocation8 + $0x10f]]
        %v3680 = vstv %s3679
        %v3681 = vmul.f32 %v3680, %v2183
        %v3682 = vmul.f32 %v3680, %v2184
        %v3685 = vrot.slane %v3681, 3
        %v3686 = vrot.slane %v3682, 3
        %v3689 = vadd.f32 %v3677, %v3685
        %v3690 = vadd.f32 %v3678, %v3686
        %s3691 = sld [smem:[#allocation8 + $0x113]]
        %v3692 = vstv %s3691
        %v3693 = vmul.f32 %v3692, %v2191
        %v3694 = vmul.f32 %v3692, %v2192
        %v3695 = vadd.f32 %v3689, %v3693
        %v3696 = vadd.f32 %v3690, %v3694
        %s3697 = sld [smem:[#allocation8 + $0x117]]
        %v3698 = vstv %s3697
        %v3699 = vmul.f32 %v3698, %v2191
        %v3700 = vmul.f32 %v3698, %v2192
        %v3703 = vrot.slane %v3699, 1
        %v3704 = vrot.slane %v3700, 1
        %v3707 = vadd.f32 %v3695, %v3703
        %v3708 = vadd.f32 %v3696, %v3704
        %s3709 = sld [smem:[#allocation8 + $0x11b]]
        %v3710 = vstv %s3709
        %v3711 = vmul.f32 %v3710, %v2191
        %v3712 = vmul.f32 %v3710, %v2192
        %v3715 = vrot.slane %v3711, 2
        %v3716 = vrot.slane %v3712, 2
        %v3719 = vadd.f32 %v3707, %v3715
        %v3720 = vadd.f32 %v3708, %v3716
        %s3721 = sld [smem:[#allocation8 + $0x11f]]
        %v3722 = vstv %s3721
        %v3723 = vmul.f32 %v3722, %v2191
        %v3724 = vmul.f32 %v3722, %v2192
        %v3727 = vrot.slane %v3723, 3
        %v3728 = vrot.slane %v3724, 3
        %v3731 = vadd.f32 %v3719, %v3727
        %v3732 = vadd.f32 %v3720, %v3728
        %s3733 = sld [smem:[#allocation9 + $0x7]]
        %v3734 = vstv %s3733
        %v3735 = vadd.f32 %v3731, %v3734
        %v3736 = vadd.f32 %v3732, %v3734
        %v3737 = vmax.f32 %v3735, 0.0
        %v3738 = vmax.f32 %v3736, 0.0
        %v3741 = vrot.slane %v3737, 5
        %v3742 = vrot.slane %v3738, 5
        %v3745 = vadd.f32 %v2127, %v3741
        %v3746 = vadd.f32 %v2128, %v3742
        %v3747 = vsel %vm2120, %v2575, %v2965
        %v3748 = vsel %vm2120, %v2576, %v2966
        %v3749 = vsel %vm2123, %v3747, %v3355
        %v3750 = vsel %vm2123, %v3748, %v3356
        %v3751 = vsel %vm2126, %v3749, %v3745
        %v3752 = vsel %vm2126, %v3750, %v3746
        %v3755 = vcombine.low %v3751, %v3752
        %3757 = vst [vmem:[%s255] sm:$0xff] %v3755
        %s3758 = sand.u32 %s121, 1
        %s3759 = scalar_lea.sflag [#allocation4], %s3758
        %s3760 = sand.u32 %s121, 1
        %s3761 = smul.addr %s3760, 8
        %s3762 = scalar_lea.vmem [#allocation11], %s3761
        // Predicated region
        $region53: #{tpu_custom_call.1} parent=35 // pred_check
          %p3763 = pneg %p131
        $region54: #{tpu_custom_call.1} parent=35 // pred_check_branch
          %3765 = sbr.rel (%p3763) target = $region56
        $region55: #{tpu_custom_call.1} parent=35 // pred_region
          %s3767 = ssub.s32 128, 128
          %3768 = vsyncadd %s3759, %s3767
          %s3769 = smul.addr %s24, 2
          %s3770 = smul.addr %s3769, 64
          %s3771 = scalar_lea.hbm %s4, %s3770
          %s3773 = sshll.u32 %s3762, 4
          %s3774 = int_to_ptr.vmem [resolvable:$true] %s3773
          %3776 = dma.vmem_to_hbm [thread:$0]  %s3774, 128, %s3771, %s3759
        $region56: #{tpu_custom_call.1} parent=35 // pred_fallthru
          _
      $region36: #{tpu_custom_call.1} parent=5 // pred_fallthru
        _
      %p3777 = scmp.le.s32.totalorder 2, %s19
      // Predicated region
      $region57: #{tpu_custom_call.1} parent=5 // pred_check
        %p3778 = pneg %p3777
      $region58: #{tpu_custom_call.1} parent=5 // pred_check_branch
        %3780 = sbr.rel (%p3778) target = $region60
      $region59: #{tpu_custom_call.1} parent=5 // pred_region
        %s3781 = ssub.s32 %s19, 2
        // Predicated region
        $region61: #{tpu_custom_call.1} parent=59 // pred_check
          %p3782 = pneg %p137
        $region62: #{tpu_custom_call.1} parent=59 // pred_check_branch
          %3784 = sbr.rel (%p3782) target = $region64
        $region63: #{tpu_custom_call.1} parent=59 // pred_region
          %s3785 = sand.u32 %s122, 1
          %s3786 = scalar_lea.sflag [#allocation4], %s3785
          %s3787 = sand.u32 %s122, 1
          %s3788 = smul.addr %s3787, 8
          %s3789 = scalar_lea.vmem [#allocation11], %s3788
          %3790 = dma.done %s3786, 128
        $region64: #{tpu_custom_call.1} parent=59 // pred_fallthru
          _
      $region60: #{tpu_custom_call.1} parent=5 // pred_fallthru
        _
    $region6: #{tpu_custom_call.1} parent=1 // loop_footer
      %s23 = sadd.s32 1, %s19
    $region7: #{tpu_custom_call.1} parent=1 // loop_footer_branch
      %18 = sbr.rel target = $region3
    $region8: #{tpu_custom_call.1} parent=1 // loop_exit
      _
    %3791 = vsyncpa [#allocation3], 1
    %s3792 = scalar_lea.sflag [#allocation3], 1
    %3793 = vsyncpa %s3792, 1
    %3794 = vsyncpa [#allocation7], 1
    %3795 = vsyncpa [#allocation4], 1
    %s3796 = scalar_lea.sflag [#allocation4], 1
    %3797 = vsyncpa %s3796, 1
    %3798 = vsyncpa [#allocation5], 1
    %s3799 = scalar_lea.sflag [#allocation5], 1
    %3800 = vsyncpa %s3799, 1
    %3801 = vsyncpa [#allocation10], 1

</llo_original>
